<compile_context>
chip_gen: v6e
topology: v6e:2x2x1
jax: 0.10.0
libtpu: 0.0.40
codegen_flags: <defaults>
</compile_context>

<pallas_src>
import jax
import jax.numpy as jnp
from jax.experimental import pallas as pl
from jax.experimental.pallas import tpu as pltpu


ROWS_PER_BATCH = 8                                   # rows per DMA batch (f32 sublane-full)
BATCHES_PER_STEP = 8                                 # double-buffered batches per grid step
ROWS_PER_STEP = ROWS_PER_BATCH * BATCHES_PER_STEP    # 64 gathered rows per grid step


def _gather_kernel(idx_ref, tab_hbm, o_ref, vbuf, sem):
    """Gather ROWS_PER_STEP data-dependent table rows into one output block.

    idx_ref : SMEM (n_pad,) int32      scalar-prefetched scaled row indices
    tab_hbm : HBM  (rows, V)           full table (memory_space=pl.ANY)
    o_ref   : VMEM (ROWS_PER_STEP, V)  output block
    vbuf    : VMEM (2, ROWS_PER_BATCH, V) double-buffered row staging
    sem     : DMA semaphores (2, ROWS_PER_BATCH)
    """
    base = pl.program_id(0) * ROWS_PER_STEP

    def start_batch(c, slot):
        off = base + c * ROWS_PER_BATCH
        for r in range(ROWS_PER_BATCH):
            row = idx_ref[off + r]
            pltpu.make_async_copy(
                tab_hbm.at[pl.ds(row, 1), :],
                vbuf.at[slot, pl.ds(r, 1), :],
                sem.at[slot, r],
            ).start()

    def wait_batch(slot):
        for r in range(ROWS_PER_BATCH):
            pltpu.make_async_copy(
                tab_hbm.at[pl.ds(0, 1), :],        # same shape; wait keys on sem/dst
                vbuf.at[slot, pl.ds(r, 1), :],
                sem.at[slot, r],
            ).wait()

    # Prime batch 0, then double-buffer: start batch c+1 while batch c is
    # waited on and stored.  All state is local to this grid step, so the
    # grid axis stays safely "parallel" (megacore-shardable on v7x).
    start_batch(0, 0)
    for c in range(BATCHES_PER_STEP):
        if c + 1 < BATCHES_PER_STEP:
            start_batch(c + 1, (c + 1) % 2)
        wait_batch(c % 2)
        o_ref[c * ROWS_PER_BATCH:(c + 1) * ROWS_PER_BATCH, :] = vbuf[c % 2]


def dummy_model_forward(idx, table, vocab_size):
    """Replicates DummyModel.forward: (table[idx * V**arange(t)], None)."""
    b, t = idx.shape
    num_rows, v = table.shape

    # Review correctness note: guard against int32 overflow of the positional
    # scaling (e.g. vocab=50k, t>=2 would exceed 2^31 and silently wrap).
    if (vocab_size ** (t - 1)) * (vocab_size - 1) >= 2 ** 31:
        raise ValueError("encoded prefix index overflows int32; reduce t/vocab_size")

    powers = vocab_size ** jnp.arange(t, dtype=jnp.int32)
    scaled = (idx.astype(jnp.int32) * powers[None, :]).reshape(-1)      # (b*t,)
    # Clamp so a bad caller index can never drive an out-of-range row DMA.
    scaled = jnp.clip(scaled, 0, num_rows - 1)

    n = b * t
    n_pad = ((n + ROWS_PER_STEP - 1) // ROWS_PER_STEP) * ROWS_PER_STEP
    scaled = jnp.pad(scaled, (0, n_pad - n))          # padded slots gather row 0

    itemsize = jnp.dtype(table.dtype).itemsize
    out_flat = pl.pallas_call(
        _gather_kernel,
        out_shape=jax.ShapeDtypeStruct((n_pad, v), table.dtype),
        grid_spec=pltpu.PrefetchScalarGridSpec(
            num_scalar_prefetch=1,                    # scaled indices -> SMEM
            grid=(n_pad // ROWS_PER_STEP,),
            in_specs=[pl.BlockSpec(memory_space=pl.ANY)],   # raw HBM table ref
            out_specs=pl.BlockSpec((ROWS_PER_STEP, v),
                                   lambda i, idx_ref: (i, 0)),
            scratch_shapes=[
                pltpu.VMEM((2, ROWS_PER_BATCH, v), table.dtype),
                pltpu.SemaphoreType.DMA((2, ROWS_PER_BATCH)),
            ],
        ),
        compiler_params=pltpu.CompilerParams(
            dimension_semantics=("parallel",)),       # steps independent -> v7x 2-TC
        cost_estimate=pl.CostEstimate(
            flops=0, transcendentals=0,
            bytes_accessed=2 * n_pad * v * itemsize),
    )(scaled, table)

    return out_flat[:n].reshape(b, t, v), None


if __name__ == "__main__":
    # Small, consistent shapes: vocab_size=128 keeps gathered rows lane-dense,
    # block_size=2 keeps the table at (128**2, 128) f32 = 8 MiB.
    block_size = 2
    vocab_size = 128
    B, T = 2, 2                      # T <= block_size so encoded rows stay in-range

    key = jax.random.PRNGKey(0)
    k_tab, k_idx = jax.random.split(key)

    # Deterministic stand-in for torch.randn((vocab_size**block_size, vocab_size)).
    table = jax.random.normal(
        k_tab, (vocab_size ** block_size, vocab_size), dtype=jnp.float32)
    idx = jax.random.randint(k_idx, (B, T), 0, vocab_size, dtype=jnp.int32)

    out, aux = dummy_model_forward(idx, table, vocab_size)
    out = jax.block_until_ready(out)

    # Pure-JAX reference for the same semantics.
    powers = vocab_size ** jnp.arange(T, dtype=jnp.int32)
    flat = (idx * powers[None, :]).reshape(-1)
    ref = table[flat].reshape(B, T, vocab_size)

    assert aux is None
    assert out.shape == (B, T, vocab_size)
    assert out.dtype == jnp.float32
    assert jnp.allclose(out, ref), "Pallas gather mismatch vs reference"
    print("KERNEL_OK")
</pallas_src>

<mosaic_0001>
module attributes {stable_mosaic.version = 11 : i64} {
  func.func @_gather_kernel(%arg0: i32, %arg1: memref<64xi32, #tpu.memory_space<smem>>, %arg2: memref<16384x128xf32, #tpu.memory_space<any>>, %arg3: memref<64x128xf32, #tpu.memory_space<vmem>>, %arg4: memref<2x8x128xf32, #tpu.memory_space<vmem>>, %arg5: memref<2x8x!tpu.dma_semaphore, #tpu.memory_space<semaphore_mem>>) attributes {dimension_semantics = [#tpu.dimension_semantics<parallel>], iteration_bounds = array<i64: 1>, scalar_prefetch = 1 : i64, scratch_operands = 2 : i64, tpu.core_type = #tpu.core_type<tc>, window_params = [{}, {transform_indices = @transform_1, window_bounds = array<i64: 64, 128>}]} {
    %c64_i32 = arith.constant 64 : i32
    %0 = arith.muli %arg0, %c64_i32 : i32
    %c0_i32 = arith.constant 0 : i32
    %1 = arith.addi %0, %c0_i32 : i32
    %c0_i32_0 = arith.constant 0 : i32
    %2 = arith.addi %1, %c0_i32_0 : i32
    %3 = arith.index_cast %2 : i32 to index
    %4 = memref.load %arg1[%3] : memref<64xi32, #tpu.memory_space<smem>>
    %c0_i32_1 = arith.constant 0 : i32
    %c0_i32_2 = arith.constant 0 : i32
    %c0_i32_3 = arith.constant 0 : i32
    %c0_i32_4 = arith.constant 0 : i32
    %5 = tpu.memref_slice %arg2[%4, %c0_i32_4] : memref<16384x128xf32, #tpu.memory_space<any>> -> memref<1x128xf32, #tpu.memory_space<any>>
    %c0_i32_5 = arith.constant 0 : i32
    %c0_i32_6 = arith.constant 0 : i32
    %6 = tpu.memref_slice %arg4[%c0_i32_1, %c0_i32_5, %c0_i32_6] : memref<2x8x128xf32, #tpu.memory_space<vmem>> -> memref<1x1x128xf32, #tpu.memory_space<vmem>>
    %7 = tpu.memref_squeeze %6 : memref<1x1x128xf32, #tpu.memory_space<vmem>> -> memref<1x128xf32, #tpu.memory_space<vmem>>
    %8 = tpu.memref_slice %arg5[%c0_i32_2, %c0_i32_3] : memref<2x8x!tpu.dma_semaphore, #tpu.memory_space<semaphore_mem>> -> memref<1x1x!tpu.dma_semaphore, #tpu.memory_space<semaphore_mem>>
    %9 = tpu.memref_squeeze %8 : memref<1x1x!tpu.dma_semaphore, #tpu.memory_space<semaphore_mem>> -> memref<!tpu.dma_semaphore, #tpu.memory_space<semaphore_mem>>
    tpu.enqueue_dma source(%5 : memref<1x128xf32, #tpu.memory_space<any>>) target(%7 : memref<1x128xf32, #tpu.memory_space<vmem>>) target_semaphore(%9 : memref<!tpu.dma_semaphore, #tpu.memory_space<semaphore_mem>>)
    %c1_i32 = arith.constant 1 : i32
    %10 = arith.addi %1, %c1_i32 : i32
    %11 = arith.index_cast %10 : i32 to index
    %12 = memref.load %arg1[%11] : memref<64xi32, #tpu.memory_space<smem>>
    %c0_i32_7 = arith.constant 0 : i32
    %c0_i32_8 = arith.constant 0 : i32
    %c1_i32_9 = arith.constant 1 : i32
    %c0_i32_10 = arith.constant 0 : i32
    %13 = tpu.memref_slice %arg2[%12, %c0_i32_10] : memref<16384x128xf32, #tpu.memory_space<any>> -> memref<1x128xf32, #tpu.memory_space<any>>
    %c1_i32_11 = arith.constant 1 : i32
    %c0_i32_12 = arith.constant 0 : i32
    %14 = tpu.memref_slice %arg4[%c0_i32_7, %c1_i32_11, %c0_i32_12] : memref<2x8x128xf32, #tpu.memory_space<vmem>> -> memref<1x1x128xf32, #tpu.memory_space<vmem>>
    %15 = tpu.memref_squeeze %14 : memref<1x1x128xf32, #tpu.memory_space<vmem>> -> memref<1x128xf32, #tpu.memory_space<vmem>>
    %16 = tpu.memref_slice %arg5[%c0_i32_8, %c1_i32_9] : memref<2x8x!tpu.dma_semaphore, #tpu.memory_space<semaphore_mem>> -> memref<1x1x!tpu.dma_semaphore, #tpu.memory_space<semaphore_mem>>
    %17 = tpu.memref_squeeze %16 : memref<1x1x!tpu.dma_semaphore, #tpu.memory_space<semaphore_mem>> -> memref<!tpu.dma_semaphore, #tpu.memory_space<semaphore_mem>>
    tpu.enqueue_dma source(%13 : memref<1x128xf32, #tpu.memory_space<any>>) target(%15 : memref<1x128xf32, #tpu.memory_space<vmem>>) target_semaphore(%17 : memref<!tpu.dma_semaphore, #tpu.memory_space<semaphore_mem>>)
    %c2_i32 = arith.constant 2 : i32
    %18 = arith.addi %1, %c2_i32 : i32
    %19 = arith.index_cast %18 : i32 to index
    %20 = memref.load %arg1[%19] : memref<64xi32, #tpu.memory_space<smem>>
    %c0_i32_13 = arith.constant 0 : i32
    %c0_i32_14 = arith.constant 0 : i32
    %c2_i32_15 = arith.constant 2 : i32
    %c0_i32_16 = arith.constant 0 : i32
    %21 = tpu.memref_slice %arg2[%20, %c0_i32_16] : memref<16384x128xf32, #tpu.memory_space<any>> -> memref<1x128xf32, #tpu.memory_space<any>>
    %c2_i32_17 = arith.constant 2 : i32
    %c0_i32_18 = arith.constant 0 : i32
    %22 = tpu.memref_slice %arg4[%c0_i32_13, %c2_i32_17, %c0_i32_18] : memref<2x8x128xf32, #tpu.memory_space<vmem>> -> memref<1x1x128xf32, #tpu.memory_space<vmem>>
    %23 = tpu.memref_squeeze %22 : memref<1x1x128xf32, #tpu.memory_space<vmem>> -> memref<1x128xf32, #tpu.memory_space<vmem>>
    %24 = tpu.memref_slice %arg5[%c0_i32_14, %c2_i32_15] : memref<2x8x!tpu.dma_semaphore, #tpu.memory_space<semaphore_mem>> -> memref<1x1x!tpu.dma_semaphore, #tpu.memory_space<semaphore_mem>>
    %25 = tpu.memref_squeeze %24 : memref<1x1x!tpu.dma_semaphore, #tpu.memory_space<semaphore_mem>> -> memref<!tpu.dma_semaphore, #tpu.memory_space<semaphore_mem>>
    tpu.enqueue_dma source(%21 : memref<1x128xf32, #tpu.memory_space<any>>) target(%23 : memref<1x128xf32, #tpu.memory_space<vmem>>) target_semaphore(%25 : memref<!tpu.dma_semaphore, #tpu.memory_space<semaphore_mem>>)
    %c3_i32 = arith.constant 3 : i32
    %26 = arith.addi %1, %c3_i32 : i32
    %27 = arith.index_cast %26 : i32 to index
    %28 = memref.load %arg1[%27] : memref<64xi32, #tpu.memory_space<smem>>
    %c0_i32_19 = arith.constant 0 : i32
    %c0_i32_20 = arith.constant 0 : i32
    %c3_i32_21 = arith.constant 3 : i32
    %c0_i32_22 = arith.constant 0 : i32
    %29 = tpu.memref_slice %arg2[%28, %c0_i32_22] : memref<16384x128xf32, #tpu.memory_space<any>> -> memref<1x128xf32, #tpu.memory_space<any>>
    %c3_i32_23 = arith.constant 3 : i32
    %c0_i32_24 = arith.constant 0 : i32
    %30 = tpu.memref_slice %arg4[%c0_i32_19, %c3_i32_23, %c0_i32_24] : memref<2x8x128xf32, #tpu.memory_space<vmem>> -> memref<1x1x128xf32, #tpu.memory_space<vmem>>
    %31 = tpu.memref_squeeze %30 : memref<1x1x128xf32, #tpu.memory_space<vmem>> -> memref<1x128xf32, #tpu.memory_space<vmem>>
    %32 = tpu.memref_slice %arg5[%c0_i32_20, %c3_i32_21] : memref<2x8x!tpu.dma_semaphore, #tpu.memory_space<semaphore_mem>> -> memref<1x1x!tpu.dma_semaphore, #tpu.memory_space<semaphore_mem>>
    %33 = tpu.memref_squeeze %32 : memref<1x1x!tpu.dma_semaphore, #tpu.memory_space<semaphore_mem>> -> memref<!tpu.dma_semaphore, #tpu.memory_space<semaphore_mem>>
    tpu.enqueue_dma source(%29 : memref<1x128xf32, #tpu.memory_space<any>>) target(%31 : memref<1x128xf32, #tpu.memory_space<vmem>>) target_semaphore(%33 : memref<!tpu.dma_semaphore, #tpu.memory_space<semaphore_mem>>)
    %c4_i32 = arith.constant 4 : i32
    %34 = arith.addi %1, %c4_i32 : i32
    %35 = arith.index_cast %34 : i32 to index
    %36 = memref.load %arg1[%35] : memref<64xi32, #tpu.memory_space<smem>>
    %c0_i32_25 = arith.constant 0 : i32
    %c0_i32_26 = arith.constant 0 : i32
    %c4_i32_27 = arith.constant 4 : i32
    %c0_i32_28 = arith.constant 0 : i32
    %37 = tpu.memref_slice %arg2[%36, %c0_i32_28] : memref<16384x128xf32, #tpu.memory_space<any>> -> memref<1x128xf32, #tpu.memory_space<any>>
    %c4_i32_29 = arith.constant 4 : i32
    %c0_i32_30 = arith.constant 0 : i32
    %38 = tpu.memref_slice %arg4[%c0_i32_25, %c4_i32_29, %c0_i32_30] : memref<2x8x128xf32, #tpu.memory_space<vmem>> -> memref<1x1x128xf32, #tpu.memory_space<vmem>>
    %39 = tpu.memref_squeeze %38 : memref<1x1x128xf32, #tpu.memory_space<vmem>> -> memref<1x128xf32, #tpu.memory_space<vmem>>
    %40 = tpu.memref_slice %arg5[%c0_i32_26, %c4_i32_27] : memref<2x8x!tpu.dma_semaphore, #tpu.memory_space<semaphore_mem>> -> memref<1x1x!tpu.dma_semaphore, #tpu.memory_space<semaphore_mem>>
    %41 = tpu.memref_squeeze %40 : memref<1x1x!tpu.dma_semaphore, #tpu.memory_space<semaphore_mem>> -> memref<!tpu.dma_semaphore, #tpu.memory_space<semaphore_mem>>
    tpu.enqueue_dma source(%37 : memref<1x128xf32, #tpu.memory_space<any>>) target(%39 : memref<1x128xf32, #tpu.memory_space<vmem>>) target_semaphore(%41 : memref<!tpu.dma_semaphore, #tpu.memory_space<semaphore_mem>>)
    %c5_i32 = arith.constant 5 : i32
    %42 = arith.addi %1, %c5_i32 : i32
    %43 = arith.index_cast %42 : i32 to index
    %44 = memref.load %arg1[%43] : memref<64xi32, #tpu.memory_space<smem>>
    %c0_i32_31 = arith.constant 0 : i32
    %c0_i32_32 = arith.constant 0 : i32
    %c5_i32_33 = arith.constant 5 : i32
    %c0_i32_34 = arith.constant 0 : i32
    %45 = tpu.memref_slice %arg2[%44, %c0_i32_34] : memref<16384x128xf32, #tpu.memory_space<any>> -> memref<1x128xf32, #tpu.memory_space<any>>
    %c5_i32_35 = arith.constant 5 : i32
    %c0_i32_36 = arith.constant 0 : i32
    %46 = tpu.memref_slice %arg4[%c0_i32_31, %c5_i32_35, %c0_i32_36] : memref<2x8x128xf32, #tpu.memory_space<vmem>> -> memref<1x1x128xf32, #tpu.memory_space<vmem>>
    %47 = tpu.memref_squeeze %46 : memref<1x1x128xf32, #tpu.memory_space<vmem>> -> memref<1x128xf32, #tpu.memory_space<vmem>>
    %48 = tpu.memref_slice %arg5[%c0_i32_32, %c5_i32_33] : memref<2x8x!tpu.dma_semaphore, #tpu.memory_space<semaphore_mem>> -> memref<1x1x!tpu.dma_semaphore, #tpu.memory_space<semaphore_mem>>
    %49 = tpu.memref_squeeze %48 : memref<1x1x!tpu.dma_semaphore, #tpu.memory_space<semaphore_mem>> -> memref<!tpu.dma_semaphore, #tpu.memory_space<semaphore_mem>>
    tpu.enqueue_dma source(%45 : memref<1x128xf32, #tpu.memory_space<any>>) target(%47 : memref<1x128xf32, #tpu.memory_space<vmem>>) target_semaphore(%49 : memref<!tpu.dma_semaphore, #tpu.memory_space<semaphore_mem>>)
    %c6_i32 = arith.constant 6 : i32
    %50 = arith.addi %1, %c6_i32 : i32
    %51 = arith.index_cast %50 : i32 to index
    %52 = memref.load %arg1[%51] : memref<64xi32, #tpu.memory_space<smem>>
    %c0_i32_37 = arith.constant 0 : i32
    %c0_i32_38 = arith.constant 0 : i32
    %c6_i32_39 = arith.constant 6 : i32
    %c0_i32_40 = arith.constant 0 : i32
    %53 = tpu.memref_slice %arg2[%52, %c0_i32_40] : memref<16384x128xf32, #tpu.memory_space<any>> -> memref<1x128xf32, #tpu.memory_space<any>>
    %c6_i32_41 = arith.constant 6 : i32
    %c0_i32_42 = arith.constant 0 : i32
    %54 = tpu.memref_slice %arg4[%c0_i32_37, %c6_i32_41, %c0_i32_42] : memref<2x8x128xf32, #tpu.memory_space<vmem>> -> memref<1x1x128xf32, #tpu.memory_space<vmem>>
    %55 = tpu.memref_squeeze %54 : memref<1x1x128xf32, #tpu.memory_space<vmem>> -> memref<1x128xf32, #tpu.memory_space<vmem>>
    %56 = tpu.memref_slice %arg5[%c0_i32_38, %c6_i32_39] : memref<2x8x!tpu.dma_semaphore, #tpu.memory_space<semaphore_mem>> -> memref<1x1x!tpu.dma_semaphore, #tpu.memory_space<semaphore_mem>>
    %57 = tpu.memref_squeeze %56 : memref<1x1x!tpu.dma_semaphore, #tpu.memory_space<semaphore_mem>> -> memref<!tpu.dma_semaphore, #tpu.memory_space<semaphore_mem>>
    tpu.enqueue_dma source(%53 : memref<1x128xf32, #tpu.memory_space<any>>) target(%55 : memref<1x128xf32, #tpu.memory_space<vmem>>) target_semaphore(%57 : memref<!tpu.dma_semaphore, #tpu.memory_space<semaphore_mem>>)
    %c7_i32 = arith.constant 7 : i32
    %58 = arith.addi %1, %c7_i32 : i32
    %59 = arith.index_cast %58 : i32 to index
    %60 = memref.load %arg1[%59] : memref<64xi32, #tpu.memory_space<smem>>
    %c0_i32_43 = arith.constant 0 : i32
    %c0_i32_44 = arith.constant 0 : i32
    %c7_i32_45 = arith.constant 7 : i32
    %c0_i32_46 = arith.constant 0 : i32
    %61 = tpu.memref_slice %arg2[%60, %c0_i32_46] : memref<16384x128xf32, #tpu.memory_space<any>> -> memref<1x128xf32, #tpu.memory_space<any>>
    %c7_i32_47 = arith.constant 7 : i32
    %c0_i32_48 = arith.constant 0 : i32
    %62 = tpu.memref_slice %arg4[%c0_i32_43, %c7_i32_47, %c0_i32_48] : memref<2x8x128xf32, #tpu.memory_space<vmem>> -> memref<1x1x128xf32, #tpu.memory_space<vmem>>
    %63 = tpu.memref_squeeze %62 : memref<1x1x128xf32, #tpu.memory_space<vmem>> -> memref<1x128xf32, #tpu.memory_space<vmem>>
    %64 = tpu.memref_slice %arg5[%c0_i32_44, %c7_i32_45] : memref<2x8x!tpu.dma_semaphore, #tpu.memory_space<semaphore_mem>> -> memref<1x1x!tpu.dma_semaphore, #tpu.memory_space<semaphore_mem>>
    %65 = tpu.memref_squeeze %64 : memref<1x1x!tpu.dma_semaphore, #tpu.memory_space<semaphore_mem>> -> memref<!tpu.dma_semaphore, #tpu.memory_space<semaphore_mem>>
    tpu.enqueue_dma source(%61 : memref<1x128xf32, #tpu.memory_space<any>>) target(%63 : memref<1x128xf32, #tpu.memory_space<vmem>>) target_semaphore(%65 : memref<!tpu.dma_semaphore, #tpu.memory_space<semaphore_mem>>)
    %c8_i32 = arith.constant 8 : i32
    %66 = arith.addi %0, %c8_i32 : i32
    %c0_i32_49 = arith.constant 0 : i32
    %67 = arith.addi %66, %c0_i32_49 : i32
    %68 = arith.index_cast %67 : i32 to index
    %69 = memref.load %arg1[%68] : memref<64xi32, #tpu.memory_space<smem>>
    %c1_i32_50 = arith.constant 1 : i32
    %c1_i32_51 = arith.constant 1 : i32
    %c0_i32_52 = arith.constant 0 : i32
    %c0_i32_53 = arith.constant 0 : i32
    %70 = tpu.memref_slice %arg2[%69, %c0_i32_53] : memref<16384x128xf32, #tpu.memory_space<any>> -> memref<1x128xf32, #tpu.memory_space<any>>
    %c0_i32_54 = arith.constant 0 : i32
    %c0_i32_55 = arith.constant 0 : i32
    %71 = tpu.memref_slice %arg4[%c1_i32_50, %c0_i32_54, %c0_i32_55] : memref<2x8x128xf32, #tpu.memory_space<vmem>> -> memref<1x1x128xf32, #tpu.memory_space<vmem>>
    %72 = tpu.memref_squeeze %71 : memref<1x1x128xf32, #tpu.memory_space<vmem>> -> memref<1x128xf32, #tpu.memory_space<vmem>>
    %73 = tpu.memref_slice %arg5[%c1_i32_51, %c0_i32_52] : memref<2x8x!tpu.dma_semaphore, #tpu.memory_space<semaphore_mem>> -> memref<1x1x!tpu.dma_semaphore, #tpu.memory_space<semaphore_mem>>
    %74 = tpu.memref_squeeze %73 : memref<1x1x!tpu.dma_semaphore, #tpu.memory_space<semaphore_mem>> -> memref<!tpu.dma_semaphore, #tpu.memory_space<semaphore_mem>>
    tpu.enqueue_dma source(%70 : memref<1x128xf32, #tpu.memory_space<any>>) target(%72 : memref<1x128xf32, #tpu.memory_space<vmem>>) target_semaphore(%74 : memref<!tpu.dma_semaphore, #tpu.memory_space<semaphore_mem>>)
    %c1_i32_56 = arith.constant 1 : i32
    %75 = arith.addi %66, %c1_i32_56 : i32
    %76 = arith.index_cast %75 : i32 to index
    %77 = memref.load %arg1[%76] : memref<64xi32, #tpu.memory_space<smem>>
    %c1_i32_57 = arith.constant 1 : i32
    %c1_i32_58 = arith.constant 1 : i32
    %c1_i32_59 = arith.constant 1 : i32
    %c0_i32_60 = arith.constant 0 : i32
    %78 = tpu.memref_slice %arg2[%77, %c0_i32_60] : memref<16384x128xf32, #tpu.memory_space<any>> -> memref<1x128xf32, #tpu.memory_space<any>>
    %c1_i32_61 = arith.constant 1 : i32
    %c0_i32_62 = arith.constant 0 : i32
    %79 = tpu.memref_slice %arg4[%c1_i32_57, %c1_i32_61, %c0_i32_62] : memref<2x8x128xf32, #tpu.memory_space<vmem>> -> memref<1x1x128xf32, #tpu.memory_space<vmem>>
    %80 = tpu.memref_squeeze %79 : memref<1x1x128xf32, #tpu.memory_space<vmem>> -> memref<1x128xf32, #tpu.memory_space<vmem>>
    %81 = tpu.memref_slice %arg5[%c1_i32_58, %c1_i32_59] : memref<2x8x!tpu.dma_semaphore, #tpu.memory_space<semaphore_mem>> -> memref<1x1x!tpu.dma_semaphore, #tpu.memory_space<semaphore_mem>>
    %82 = tpu.memref_squeeze %81 : memref<1x1x!tpu.dma_semaphore, #tpu.memory_space<semaphore_mem>> -> memref<!tpu.dma_semaphore, #tpu.memory_space<semaphore_mem>>
    tpu.enqueue_dma source(%78 : memref<1x128xf32, #tpu.memory_space<any>>) target(%80 : memref<1x128xf32, #tpu.memory_space<vmem>>) target_semaphore(%82 : memref<!tpu.dma_semaphore, #tpu.memory_space<semaphore_mem>>)
    %c2_i32_63 = arith.constant 2 : i32
    %83 = arith.addi %66, %c2_i32_63 : i32
    %84 = arith.index_cast %83 : i32 to index
    %85 = memref.load %arg1[%84] : memref<64xi32, #tpu.memory_space<smem>>
    %c1_i32_64 = arith.constant 1 : i32
    %c1_i32_65 = arith.constant 1 : i32
    %c2_i32_66 = arith.constant 2 : i32
    %c0_i32_67 = arith.constant 0 : i32
    %86 = tpu.memref_slice %arg2[%85, %c0_i32_67] : memref<16384x128xf32, #tpu.memory_space<any>> -> memref<1x128xf32, #tpu.memory_space<any>>
    %c2_i32_68 = arith.constant 2 : i32
    %c0_i32_69 = arith.constant 0 : i32
    %87 = tpu.memref_slice %arg4[%c1_i32_64, %c2_i32_68, %c0_i32_69] : memref<2x8x128xf32, #tpu.memory_space<vmem>> -> memref<1x1x128xf32, #tpu.memory_space<vmem>>
    %88 = tpu.memref_squeeze %87 : memref<1x1x128xf32, #tpu.memory_space<vmem>> -> memref<1x128xf32, #tpu.memory_space<vmem>>
    %89 = tpu.memref_slice %arg5[%c1_i32_65, %c2_i32_66] : memref<2x8x!tpu.dma_semaphore, #tpu.memory_space<semaphore_mem>> -> memref<1x1x!tpu.dma_semaphore, #tpu.memory_space<semaphore_mem>>
    %90 = tpu.memref_squeeze %89 : memref<1x1x!tpu.dma_semaphore, #tpu.memory_space<semaphore_mem>> -> memref<!tpu.dma_semaphore, #tpu.memory_space<semaphore_mem>>
    tpu.enqueue_dma source(%86 : memref<1x128xf32, #tpu.memory_space<any>>) target(%88 : memref<1x128xf32, #tpu.memory_space<vmem>>) target_semaphore(%90 : memref<!tpu.dma_semaphore, #tpu.memory_space<semaphore_mem>>)
    %c3_i32_70 = arith.constant 3 : i32
    %91 = arith.addi %66, %c3_i32_70 : i32
    %92 = arith.index_cast %91 : i32 to index
    %93 = memref.load %arg1[%92] : memref<64xi32, #tpu.memory_space<smem>>
    %c1_i32_71 = arith.constant 1 : i32
    %c1_i32_72 = arith.constant 1 : i32
    %c3_i32_73 = arith.constant 3 : i32
    %c0_i32_74 = arith.constant 0 : i32
    %94 = tpu.memref_slice %arg2[%93, %c0_i32_74] : memref<16384x128xf32, #tpu.memory_space<any>> -> memref<1x128xf32, #tpu.memory_space<any>>
    %c3_i32_75 = arith.constant 3 : i32
    %c0_i32_76 = arith.constant 0 : i32
    %95 = tpu.memref_slice %arg4[%c1_i32_71, %c3_i32_75, %c0_i32_76] : memref<2x8x128xf32, #tpu.memory_space<vmem>> -> memref<1x1x128xf32, #tpu.memory_space<vmem>>
    %96 = tpu.memref_squeeze %95 : memref<1x1x128xf32, #tpu.memory_space<vmem>> -> memref<1x128xf32, #tpu.memory_space<vmem>>
    %97 = tpu.memref_slice %arg5[%c1_i32_72, %c3_i32_73] : memref<2x8x!tpu.dma_semaphore, #tpu.memory_space<semaphore_mem>> -> memref<1x1x!tpu.dma_semaphore, #tpu.memory_space<semaphore_mem>>
    %98 = tpu.memref_squeeze %97 : memref<1x1x!tpu.dma_semaphore, #tpu.memory_space<semaphore_mem>> -> memref<!tpu.dma_semaphore, #tpu.memory_space<semaphore_mem>>
    tpu.enqueue_dma source(%94 : memref<1x128xf32, #tpu.memory_space<any>>) target(%96 : memref<1x128xf32, #tpu.memory_space<vmem>>) target_semaphore(%98 : memref<!tpu.dma_semaphore, #tpu.memory_space<semaphore_mem>>)
    %c4_i32_77 = arith.constant 4 : i32
    %99 = arith.addi %66, %c4_i32_77 : i32
    %100 = arith.index_cast %99 : i32 to index
    %101 = memref.load %arg1[%100] : memref<64xi32, #tpu.memory_space<smem>>
    %c1_i32_78 = arith.constant 1 : i32
    %c1_i32_79 = arith.constant 1 : i32
    %c4_i32_80 = arith.constant 4 : i32
    %c0_i32_81 = arith.constant 0 : i32
    %102 = tpu.memref_slice %arg2[%101, %c0_i32_81] : memref<16384x128xf32, #tpu.memory_space<any>> -> memref<1x128xf32, #tpu.memory_space<any>>
    %c4_i32_82 = arith.constant 4 : i32
    %c0_i32_83 = arith.constant 0 : i32
    %103 = tpu.memref_slice %arg4[%c1_i32_78, %c4_i32_82, %c0_i32_83] : memref<2x8x128xf32, #tpu.memory_space<vmem>> -> memref<1x1x128xf32, #tpu.memory_space<vmem>>
    %104 = tpu.memref_squeeze %103 : memref<1x1x128xf32, #tpu.memory_space<vmem>> -> memref<1x128xf32, #tpu.memory_space<vmem>>
    %105 = tpu.memref_slice %arg5[%c1_i32_79, %c4_i32_80] : memref<2x8x!tpu.dma_semaphore, #tpu.memory_space<semaphore_mem>> -> memref<1x1x!tpu.dma_semaphore, #tpu.memory_space<semaphore_mem>>
    %106 = tpu.memref_squeeze %105 : memref<1x1x!tpu.dma_semaphore, #tpu.memory_space<semaphore_mem>> -> memref<!tpu.dma_semaphore, #tpu.memory_space<semaphore_mem>>
    tpu.enqueue_dma source(%102 : memref<1x128xf32, #tpu.memory_space<any>>) target(%104 : memref<1x128xf32, #tpu.memory_space<vmem>>) target_semaphore(%106 : memref<!tpu.dma_semaphore, #tpu.memory_space<semaphore_mem>>)
    %c5_i32_84 = arith.constant 5 : i32
    %107 = arith.addi %66, %c5_i32_84 : i32
    %108 = arith.index_cast %107 : i32 to index
    %109 = memref.load %arg1[%108] : memref<64xi32, #tpu.memory_space<smem>>
    %c1_i32_85 = arith.constant 1 : i32
    %c1_i32_86 = arith.constant 1 : i32
    %c5_i32_87 = arith.constant 5 : i32
    %c0_i32_88 = arith.constant 0 : i32
    %110 = tpu.memref_slice %arg2[%109, %c0_i32_88] : memref<16384x128xf32, #tpu.memory_space<any>> -> memref<1x128xf32, #tpu.memory_space<any>>
    %c5_i32_89 = arith.constant 5 : i32
    %c0_i32_90 = arith.constant 0 : i32
    %111 = tpu.memref_slice %arg4[%c1_i32_85, %c5_i32_89, %c0_i32_90] : memref<2x8x128xf32, #tpu.memory_space<vmem>> -> memref<1x1x128xf32, #tpu.memory_space<vmem>>
    %112 = tpu.memref_squeeze %111 : memref<1x1x128xf32, #tpu.memory_space<vmem>> -> memref<1x128xf32, #tpu.memory_space<vmem>>
    %113 = tpu.memref_slice %arg5[%c1_i32_86, %c5_i32_87] : memref<2x8x!tpu.dma_semaphore, #tpu.memory_space<semaphore_mem>> -> memref<1x1x!tpu.dma_semaphore, #tpu.memory_space<semaphore_mem>>
    %114 = tpu.memref_squeeze %113 : memref<1x1x!tpu.dma_semaphore, #tpu.memory_space<semaphore_mem>> -> memref<!tpu.dma_semaphore, #tpu.memory_space<semaphore_mem>>
    tpu.enqueue_dma source(%110 : memref<1x128xf32, #tpu.memory_space<any>>) target(%112 : memref<1x128xf32, #tpu.memory_space<vmem>>) target_semaphore(%114 : memref<!tpu.dma_semaphore, #tpu.memory_space<semaphore_mem>>)
    %c6_i32_91 = arith.constant 6 : i32
    %115 = arith.addi %66, %c6_i32_91 : i32
    %116 = arith.index_cast %115 : i32 to index
    %117 = memref.load %arg1[%116] : memref<64xi32, #tpu.memory_space<smem>>
    %c1_i32_92 = arith.constant 1 : i32
    %c1_i32_93 = arith.constant 1 : i32
    %c6_i32_94 = arith.constant 6 : i32
    %c0_i32_95 = arith.constant 0 : i32
    %118 = tpu.memref_slice %arg2[%117, %c0_i32_95] : memref<16384x128xf32, #tpu.memory_space<any>> -> memref<1x128xf32, #tpu.memory_space<any>>
    %c6_i32_96 = arith.constant 6 : i32
    %c0_i32_97 = arith.constant 0 : i32
    %119 = tpu.memref_slice %arg4[%c1_i32_92, %c6_i32_96, %c0_i32_97] : memref<2x8x128xf32, #tpu.memory_space<vmem>> -> memref<1x1x128xf32, #tpu.memory_space<vmem>>
    %120 = tpu.memref_squeeze %119 : memref<1x1x128xf32, #tpu.memory_space<vmem>> -> memref<1x128xf32, #tpu.memory_space<vmem>>
    %121 = tpu.memref_slice %arg5[%c1_i32_93, %c6_i32_94] : memref<2x8x!tpu.dma_semaphore, #tpu.memory_space<semaphore_mem>> -> memref<1x1x!tpu.dma_semaphore, #tpu.memory_space<semaphore_mem>>
    %122 = tpu.memref_squeeze %121 : memref<1x1x!tpu.dma_semaphore, #tpu.memory_space<semaphore_mem>> -> memref<!tpu.dma_semaphore, #tpu.memory_space<semaphore_mem>>
    tpu.enqueue_dma source(%118 : memref<1x128xf32, #tpu.memory_space<any>>) target(%120 : memref<1x128xf32, #tpu.memory_space<vmem>>) target_semaphore(%122 : memref<!tpu.dma_semaphore, #tpu.memory_space<semaphore_mem>>)
    %c7_i32_98 = arith.constant 7 : i32
    %123 = arith.addi %66, %c7_i32_98 : i32
    %124 = arith.index_cast %123 : i32 to index
    %125 = memref.load %arg1[%124] : memref<64xi32, #tpu.memory_space<smem>>
    %c1_i32_99 = arith.constant 1 : i32
    %c1_i32_100 = arith.constant 1 : i32
    %c7_i32_101 = arith.constant 7 : i32
    %c0_i32_102 = arith.constant 0 : i32
    %126 = tpu.memref_slice %arg2[%125, %c0_i32_102] : memref<16384x128xf32, #tpu.memory_space<any>> -> memref<1x128xf32, #tpu.memory_space<any>>
    %c7_i32_103 = arith.constant 7 : i32
    %c0_i32_104 = arith.constant 0 : i32
    %127 = tpu.memref_slice %arg4[%c1_i32_99, %c7_i32_103, %c0_i32_104] : memref<2x8x128xf32, #tpu.memory_space<vmem>> -> memref<1x1x128xf32, #tpu.memory_space<vmem>>
    %128 = tpu.memref_squeeze %127 : memref<1x1x128xf32, #tpu.memory_space<vmem>> -> memref<1x128xf32, #tpu.memory_space<vmem>>
    %129 = tpu.memref_slice %arg5[%c1_i32_100, %c7_i32_101] : memref<2x8x!tpu.dma_semaphore, #tpu.memory_space<semaphore_mem>> -> memref<1x1x!tpu.dma_semaphore, #tpu.memory_space<semaphore_mem>>
    %130 = tpu.memref_squeeze %129 : memref<1x1x!tpu.dma_semaphore, #tpu.memory_space<semaphore_mem>> -> memref<!tpu.dma_semaphore, #tpu.memory_space<semaphore_mem>>
    tpu.enqueue_dma source(%126 : memref<1x128xf32, #tpu.memory_space<any>>) target(%128 : memref<1x128xf32, #tpu.memory_space<vmem>>) target_semaphore(%130 : memref<!tpu.dma_semaphore, #tpu.memory_space<semaphore_mem>>)
    %c0_i32_105 = arith.constant 0 : i32
    %c0_i32_106 = arith.constant 0 : i32
    %c0_i32_107 = arith.constant 0 : i32
    %c0_i32_108 = arith.constant 0 : i32
    %c0_i32_109 = arith.constant 0 : i32
    %131 = tpu.memref_slice %arg2[%c0_i32_108, %c0_i32_109] : memref<16384x128xf32, #tpu.memory_space<any>> -> memref<1x128xf32, #tpu.memory_space<any>>
    %c0_i32_110 = arith.constant 0 : i32
    %c0_i32_111 = arith.constant 0 : i32
    %132 = tpu.memref_slice %arg4[%c0_i32_105, %c0_i32_110, %c0_i32_111] : memref<2x8x128xf32, #tpu.memory_space<vmem>> -> memref<1x1x128xf32, #tpu.memory_space<vmem>>
    %133 = tpu.memref_squeeze %132 : memref<1x1x128xf32, #tpu.memory_space<vmem>> -> memref<1x128xf32, #tpu.memory_space<vmem>>
    %134 = tpu.memref_slice %arg5[%c0_i32_106, %c0_i32_107] : memref<2x8x!tpu.dma_semaphore, #tpu.memory_space<semaphore_mem>> -> memref<1x1x!tpu.dma_semaphore, #tpu.memory_space<semaphore_mem>>
    %135 = tpu.memref_squeeze %134 : memref<1x1x!tpu.dma_semaphore, #tpu.memory_space<semaphore_mem>> -> memref<!tpu.dma_semaphore, #tpu.memory_space<semaphore_mem>>
    tpu.wait_dma2 semaphore(%135 : memref<!tpu.dma_semaphore, #tpu.memory_space<semaphore_mem>>) src(%131 : memref<1x128xf32, #tpu.memory_space<any>>) dst(%133 : memref<1x128xf32, #tpu.memory_space<vmem>>)
    %c0_i32_112 = arith.constant 0 : i32
    %c0_i32_113 = arith.constant 0 : i32
    %c1_i32_114 = arith.constant 1 : i32
    %c0_i32_115 = arith.constant 0 : i32
    %c0_i32_116 = arith.constant 0 : i32
    %136 = tpu.memref_slice %arg2[%c0_i32_115, %c0_i32_116] : memref<16384x128xf32, #tpu.memory_space<any>> -> memref<1x128xf32, #tpu.memory_space<any>>
    %c1_i32_117 = arith.constant 1 : i32
    %c0_i32_118 = arith.constant 0 : i32
    %137 = tpu.memref_slice %arg4[%c0_i32_112, %c1_i32_117, %c0_i32_118] : memref<2x8x128xf32, #tpu.memory_space<vmem>> -> memref<1x1x128xf32, #tpu.memory_space<vmem>>
    %138 = tpu.memref_squeeze %137 : memref<1x1x128xf32, #tpu.memory_space<vmem>> -> memref<1x128xf32, #tpu.memory_space<vmem>>
    %139 = tpu.memref_slice %arg5[%c0_i32_113, %c1_i32_114] : memref<2x8x!tpu.dma_semaphore, #tpu.memory_space<semaphore_mem>> -> memref<1x1x!tpu.dma_semaphore, #tpu.memory_space<semaphore_mem>>
    %140 = tpu.memref_squeeze %139 : memref<1x1x!tpu.dma_semaphore, #tpu.memory_space<semaphore_mem>> -> memref<!tpu.dma_semaphore, #tpu.memory_space<semaphore_mem>>
    tpu.wait_dma2 semaphore(%140 : memref<!tpu.dma_semaphore, #tpu.memory_space<semaphore_mem>>) src(%136 : memref<1x128xf32, #tpu.memory_space<any>>) dst(%138 : memref<1x128xf32, #tpu.memory_space<vmem>>)
    %c0_i32_119 = arith.constant 0 : i32
    %c0_i32_120 = arith.constant 0 : i32
    %c2_i32_121 = arith.constant 2 : i32
    %c0_i32_122 = arith.constant 0 : i32
    %c0_i32_123 = arith.constant 0 : i32
    %141 = tpu.memref_slice %arg2[%c0_i32_122, %c0_i32_123] : memref<16384x128xf32, #tpu.memory_space<any>> -> memref<1x128xf32, #tpu.memory_space<any>>
    %c2_i32_124 = arith.constant 2 : i32
    %c0_i32_125 = arith.constant 0 : i32
    %142 = tpu.memref_slice %arg4[%c0_i32_119, %c2_i32_124, %c0_i32_125] : memref<2x8x128xf32, #tpu.memory_space<vmem>> -> memref<1x1x128xf32, #tpu.memory_space<vmem>>
    %143 = tpu.memref_squeeze %142 : memref<1x1x128xf32, #tpu.memory_space<vmem>> -> memref<1x128xf32, #tpu.memory_space<vmem>>
    %144 = tpu.memref_slice %arg5[%c0_i32_120, %c2_i32_121] : memref<2x8x!tpu.dma_semaphore, #tpu.memory_space<semaphore_mem>> -> memref<1x1x!tpu.dma_semaphore, #tpu.memory_space<semaphore_mem>>
    %145 = tpu.memref_squeeze %144 : memref<1x1x!tpu.dma_semaphore, #tpu.memory_space<semaphore_mem>> -> memref<!tpu.dma_semaphore, #tpu.memory_space<semaphore_mem>>
    tpu.wait_dma2 semaphore(%145 : memref<!tpu.dma_semaphore, #tpu.memory_space<semaphore_mem>>) src(%141 : memref<1x128xf32, #tpu.memory_space<any>>) dst(%143 : memref<1x128xf32, #tpu.memory_space<vmem>>)
    %c0_i32_126 = arith.constant 0 : i32
    %c0_i32_127 = arith.constant 0 : i32
    %c3_i32_128 = arith.constant 3 : i32
    %c0_i32_129 = arith.constant 0 : i32
    %c0_i32_130 = arith.constant 0 : i32
    %146 = tpu.memref_slice %arg2[%c0_i32_129, %c0_i32_130] : memref<16384x128xf32, #tpu.memory_space<any>> -> memref<1x128xf32, #tpu.memory_space<any>>
    %c3_i32_131 = arith.constant 3 : i32
    %c0_i32_132 = arith.constant 0 : i32
    %147 = tpu.memref_slice %arg4[%c0_i32_126, %c3_i32_131, %c0_i32_132] : memref<2x8x128xf32, #tpu.memory_space<vmem>> -> memref<1x1x128xf32, #tpu.memory_space<vmem>>
    %148 = tpu.memref_squeeze %147 : memref<1x1x128xf32, #tpu.memory_space<vmem>> -> memref<1x128xf32, #tpu.memory_space<vmem>>
    %149 = tpu.memref_slice %arg5[%c0_i32_127, %c3_i32_128] : memref<2x8x!tpu.dma_semaphore, #tpu.memory_space<semaphore_mem>> -> memref<1x1x!tpu.dma_semaphore, #tpu.memory_space<semaphore_mem>>
    %150 = tpu.memref_squeeze %149 : memref<1x1x!tpu.dma_semaphore, #tpu.memory_space<semaphore_mem>> -> memref<!tpu.dma_semaphore, #tpu.memory_space<semaphore_mem>>
    tpu.wait_dma2 semaphore(%150 : memref<!tpu.dma_semaphore, #tpu.memory_space<semaphore_mem>>) src(%146 : memref<1x128xf32, #tpu.memory_space<any>>) dst(%148 : memref<1x128xf32, #tpu.memory_space<vmem>>)
    %c0_i32_133 = arith.constant 0 : i32
    %c0_i32_134 = arith.constant 0 : i32
    %c4_i32_135 = arith.constant 4 : i32
    %c0_i32_136 = arith.constant 0 : i32
    %c0_i32_137 = arith.constant 0 : i32
    %151 = tpu.memref_slice %arg2[%c0_i32_136, %c0_i32_137] : memref<16384x128xf32, #tpu.memory_space<any>> -> memref<1x128xf32, #tpu.memory_space<any>>
    %c4_i32_138 = arith.constant 4 : i32
    %c0_i32_139 = arith.constant 0 : i32
    %152 = tpu.memref_slice %arg4[%c0_i32_133, %c4_i32_138, %c0_i32_139] : memref<2x8x128xf32, #tpu.memory_space<vmem>> -> memref<1x1x128xf32, #tpu.memory_space<vmem>>
    %153 = tpu.memref_squeeze %152 : memref<1x1x128xf32, #tpu.memory_space<vmem>> -> memref<1x128xf32, #tpu.memory_space<vmem>>
    %154 = tpu.memref_slice %arg5[%c0_i32_134, %c4_i32_135] : memref<2x8x!tpu.dma_semaphore, #tpu.memory_space<semaphore_mem>> -> memref<1x1x!tpu.dma_semaphore, #tpu.memory_space<semaphore_mem>>
    %155 = tpu.memref_squeeze %154 : memref<1x1x!tpu.dma_semaphore, #tpu.memory_space<semaphore_mem>> -> memref<!tpu.dma_semaphore, #tpu.memory_space<semaphore_mem>>
    tpu.wait_dma2 semaphore(%155 : memref<!tpu.dma_semaphore, #tpu.memory_space<semaphore_mem>>) src(%151 : memref<1x128xf32, #tpu.memory_space<any>>) dst(%153 : memref<1x128xf32, #tpu.memory_space<vmem>>)
    %c0_i32_140 = arith.constant 0 : i32
    %c0_i32_141 = arith.constant 0 : i32
    %c5_i32_142 = arith.constant 5 : i32
    %c0_i32_143 = arith.constant 0 : i32
    %c0_i32_144 = arith.constant 0 : i32
    %156 = tpu.memref_slice %arg2[%c0_i32_143, %c0_i32_144] : memref<16384x128xf32, #tpu.memory_space<any>> -> memref<1x128xf32, #tpu.memory_space<any>>
    %c5_i32_145 = arith.constant 5 : i32
    %c0_i32_146 = arith.constant 0 : i32
    %157 = tpu.memref_slice %arg4[%c0_i32_140, %c5_i32_145, %c0_i32_146] : memref<2x8x128xf32, #tpu.memory_space<vmem>> -> memref<1x1x128xf32, #tpu.memory_space<vmem>>
    %158 = tpu.memref_squeeze %157 : memref<1x1x128xf32, #tpu.memory_space<vmem>> -> memref<1x128xf32, #tpu.memory_space<vmem>>
    %159 = tpu.memref_slice %arg5[%c0_i32_141, %c5_i32_142] : memref<2x8x!tpu.dma_semaphore, #tpu.memory_space<semaphore_mem>> -> memref<1x1x!tpu.dma_semaphore, #tpu.memory_space<semaphore_mem>>
    %160 = tpu.memref_squeeze %159 : memref<1x1x!tpu.dma_semaphore, #tpu.memory_space<semaphore_mem>> -> memref<!tpu.dma_semaphore, #tpu.memory_space<semaphore_mem>>
    tpu.wait_dma2 semaphore(%160 : memref<!tpu.dma_semaphore, #tpu.memory_space<semaphore_mem>>) src(%156 : memref<1x128xf32, #tpu.memory_space<any>>) dst(%158 : memref<1x128xf32, #tpu.memory_space<vmem>>)
    %c0_i32_147 = arith.constant 0 : i32
    %c0_i32_148 = arith.constant 0 : i32
    %c6_i32_149 = arith.constant 6 : i32
    %c0_i32_150 = arith.constant 0 : i32
    %c0_i32_151 = arith.constant 0 : i32
    %161 = tpu.memref_slice %arg2[%c0_i32_150, %c0_i32_151] : memref<16384x128xf32, #tpu.memory_space<any>> -> memref<1x128xf32, #tpu.memory_space<any>>
    %c6_i32_152 = arith.constant 6 : i32
    %c0_i32_153 = arith.constant 0 : i32
    %162 = tpu.memref_slice %arg4[%c0_i32_147, %c6_i32_152, %c0_i32_153] : memref<2x8x128xf32, #tpu.memory_space<vmem>> -> memref<1x1x128xf32, #tpu.memory_space<vmem>>
    %163 = tpu.memref_squeeze %162 : memref<1x1x128xf32, #tpu.memory_space<vmem>> -> memref<1x128xf32, #tpu.memory_space<vmem>>
    %164 = tpu.memref_slice %arg5[%c0_i32_148, %c6_i32_149] : memref<2x8x!tpu.dma_semaphore, #tpu.memory_space<semaphore_mem>> -> memref<1x1x!tpu.dma_semaphore, #tpu.memory_space<semaphore_mem>>
    %165 = tpu.memref_squeeze %164 : memref<1x1x!tpu.dma_semaphore, #tpu.memory_space<semaphore_mem>> -> memref<!tpu.dma_semaphore, #tpu.memory_space<semaphore_mem>>
    tpu.wait_dma2 semaphore(%165 : memref<!tpu.dma_semaphore, #tpu.memory_space<semaphore_mem>>) src(%161 : memref<1x128xf32, #tpu.memory_space<any>>) dst(%163 : memref<1x128xf32, #tpu.memory_space<vmem>>)
    %c0_i32_154 = arith.constant 0 : i32
    %c0_i32_155 = arith.constant 0 : i32
    %c7_i32_156 = arith.constant 7 : i32
    %c0_i32_157 = arith.constant 0 : i32
    %c0_i32_158 = arith.constant 0 : i32
    %166 = tpu.memref_slice %arg2[%c0_i32_157, %c0_i32_158] : memref<16384x128xf32, #tpu.memory_space<any>> -> memref<1x128xf32, #tpu.memory_space<any>>
    %c7_i32_159 = arith.constant 7 : i32
    %c0_i32_160 = arith.constant 0 : i32
    %167 = tpu.memref_slice %arg4[%c0_i32_154, %c7_i32_159, %c0_i32_160] : memref<2x8x128xf32, #tpu.memory_space<vmem>> -> memref<1x1x128xf32, #tpu.memory_space<vmem>>
    %168 = tpu.memref_squeeze %167 : memref<1x1x128xf32, #tpu.memory_space<vmem>> -> memref<1x128xf32, #tpu.memory_space<vmem>>
    %169 = tpu.memref_slice %arg5[%c0_i32_155, %c7_i32_156] : memref<2x8x!tpu.dma_semaphore, #tpu.memory_space<semaphore_mem>> -> memref<1x1x!tpu.dma_semaphore, #tpu.memory_space<semaphore_mem>>
    %170 = tpu.memref_squeeze %169 : memref<1x1x!tpu.dma_semaphore, #tpu.memory_space<semaphore_mem>> -> memref<!tpu.dma_semaphore, #tpu.memory_space<semaphore_mem>>
    tpu.wait_dma2 semaphore(%170 : memref<!tpu.dma_semaphore, #tpu.memory_space<semaphore_mem>>) src(%166 : memref<1x128xf32, #tpu.memory_space<any>>) dst(%168 : memref<1x128xf32, #tpu.memory_space<vmem>>)
    %c0 = arith.constant 0 : index
    %c0_161 = arith.constant 0 : index
    %c0_162 = arith.constant 0 : index
    %171 = vector.load %arg4[%c0, %c0_161, %c0_162] : memref<2x8x128xf32, #tpu.memory_space<vmem>>, vector<1x8x128xf32>
    %172 = vector.shape_cast %171 : vector<1x8x128xf32> to vector<8x128xf32>
    %c0_163 = arith.constant 0 : index
    %c0_164 = arith.constant 0 : index
    %173 = vector.load %arg3[%c0_163, %c0_164] : memref<64x128xf32, #tpu.memory_space<vmem>>, vector<8x128xf32>
    tpu.vector_store %arg3[%c0_163, %c0_164], %172 {strides = array<i32>} : memref<64x128xf32, #tpu.memory_space<vmem>>, vector<8x128xf32>,
    %c16_i32 = arith.constant 16 : i32
    %174 = arith.addi %0, %c16_i32 : i32
    %c0_i32_165 = arith.constant 0 : i32
    %175 = arith.addi %174, %c0_i32_165 : i32
    %176 = arith.index_cast %175 : i32 to index
    %177 = memref.load %arg1[%176] : memref<64xi32, #tpu.memory_space<smem>>
    %c0_i32_166 = arith.constant 0 : i32
    %c0_i32_167 = arith.constant 0 : i32
    %c0_i32_168 = arith.constant 0 : i32
    %c0_i32_169 = arith.constant 0 : i32
    %178 = tpu.memref_slice %arg2[%177, %c0_i32_169] : memref<16384x128xf32, #tpu.memory_space<any>> -> memref<1x128xf32, #tpu.memory_space<any>>
    %c0_i32_170 = arith.constant 0 : i32
    %c0_i32_171 = arith.constant 0 : i32
    %179 = tpu.memref_slice %arg4[%c0_i32_166, %c0_i32_170, %c0_i32_171] : memref<2x8x128xf32, #tpu.memory_space<vmem>> -> memref<1x1x128xf32, #tpu.memory_space<vmem>>
    %180 = tpu.memref_squeeze %179 : memref<1x1x128xf32, #tpu.memory_space<vmem>> -> memref<1x128xf32, #tpu.memory_space<vmem>>
    %181 = tpu.memref_slice %arg5[%c0_i32_167, %c0_i32_168] : memref<2x8x!tpu.dma_semaphore, #tpu.memory_space<semaphore_mem>> -> memref<1x1x!tpu.dma_semaphore, #tpu.memory_space<semaphore_mem>>
    %182 = tpu.memref_squeeze %181 : memref<1x1x!tpu.dma_semaphore, #tpu.memory_space<semaphore_mem>> -> memref<!tpu.dma_semaphore, #tpu.memory_space<semaphore_mem>>
    tpu.enqueue_dma source(%178 : memref<1x128xf32, #tpu.memory_space<any>>) target(%180 : memref<1x128xf32, #tpu.memory_space<vmem>>) target_semaphore(%182 : memref<!tpu.dma_semaphore, #tpu.memory_space<semaphore_mem>>)
    %c1_i32_172 = arith.constant 1 : i32
    %183 = arith.addi %174, %c1_i32_172 : i32
    %184 = arith.index_cast %183 : i32 to index
    %185 = memref.load %arg1[%184] : memref<64xi32, #tpu.memory_space<smem>>
    %c0_i32_173 = arith.constant 0 : i32
    %c0_i32_174 = arith.constant 0 : i32
    %c1_i32_175 = arith.constant 1 : i32
    %c0_i32_176 = arith.constant 0 : i32
    %186 = tpu.memref_slice %arg2[%185, %c0_i32_176] : memref<16384x128xf32, #tpu.memory_space<any>> -> memref<1x128xf32, #tpu.memory_space<any>>
    %c1_i32_177 = arith.constant 1 : i32
    %c0_i32_178 = arith.constant 0 : i32
    %187 = tpu.memref_slice %arg4[%c0_i32_173, %c1_i32_177, %c0_i32_178] : memref<2x8x128xf32, #tpu.memory_space<vmem>> -> memref<1x1x128xf32, #tpu.memory_space<vmem>>
    %188 = tpu.memref_squeeze %187 : memref<1x1x128xf32, #tpu.memory_space<vmem>> -> memref<1x128xf32, #tpu.memory_space<vmem>>
    %189 = tpu.memref_slice %arg5[%c0_i32_174, %c1_i32_175] : memref<2x8x!tpu.dma_semaphore, #tpu.memory_space<semaphore_mem>> -> memref<1x1x!tpu.dma_semaphore, #tpu.memory_space<semaphore_mem>>
    %190 = tpu.memref_squeeze %189 : memref<1x1x!tpu.dma_semaphore, #tpu.memory_space<semaphore_mem>> -> memref<!tpu.dma_semaphore, #tpu.memory_space<semaphore_mem>>
    tpu.enqueue_dma source(%186 : memref<1x128xf32, #tpu.memory_space<any>>) target(%188 : memref<1x128xf32, #tpu.memory_space<vmem>>) target_semaphore(%190 : memref<!tpu.dma_semaphore, #tpu.memory_space<semaphore_mem>>)
    %c2_i32_179 = arith.constant 2 : i32
    %191 = arith.addi %174, %c2_i32_179 : i32
    %192 = arith.index_cast %191 : i32 to index
    %193 = memref.load %arg1[%192] : memref<64xi32, #tpu.memory_space<smem>>
    %c0_i32_180 = arith.constant 0 : i32
    %c0_i32_181 = arith.constant 0 : i32
    %c2_i32_182 = arith.constant 2 : i32
    %c0_i32_183 = arith.constant 0 : i32
    %194 = tpu.memref_slice %arg2[%193, %c0_i32_183] : memref<16384x128xf32, #tpu.memory_space<any>> -> memref<1x128xf32, #tpu.memory_space<any>>
    %c2_i32_184 = arith.constant 2 : i32
    %c0_i32_185 = arith.constant 0 : i32
    %195 = tpu.memref_slice %arg4[%c0_i32_180, %c2_i32_184, %c0_i32_185] : memref<2x8x128xf32, #tpu.memory_space<vmem>> -> memref<1x1x128xf32, #tpu.memory_space<vmem>>
    %196 = tpu.memref_squeeze %195 : memref<1x1x128xf32, #tpu.memory_space<vmem>> -> memref<1x128xf32, #tpu.memory_space<vmem>>
    %197 = tpu.memref_slice %arg5[%c0_i32_181, %c2_i32_182] : memref<2x8x!tpu.dma_semaphore, #tpu.memory_space<semaphore_mem>> -> memref<1x1x!tpu.dma_semaphore, #tpu.memory_space<semaphore_mem>>
    %198 = tpu.memref_squeeze %197 : memref<1x1x!tpu.dma_semaphore, #tpu.memory_space<semaphore_mem>> -> memref<!tpu.dma_semaphore, #tpu.memory_space<semaphore_mem>>
    tpu.enqueue_dma source(%194 : memref<1x128xf32, #tpu.memory_space<any>>) target(%196 : memref<1x128xf32, #tpu.memory_space<vmem>>) target_semaphore(%198 : memref<!tpu.dma_semaphore, #tpu.memory_space<semaphore_mem>>)
    %c3_i32_186 = arith.constant 3 : i32
    %199 = arith.addi %174, %c3_i32_186 : i32
    %200 = arith.index_cast %199 : i32 to index
    %201 = memref.load %arg1[%200] : memref<64xi32, #tpu.memory_space<smem>>
    %c0_i32_187 = arith.constant 0 : i32
    %c0_i32_188 = arith.constant 0 : i32
    %c3_i32_189 = arith.constant 3 : i32
    %c0_i32_190 = arith.constant 0 : i32
    %202 = tpu.memref_slice %arg2[%201, %c0_i32_190] : memref<16384x128xf32, #tpu.memory_space<any>> -> memref<1x128xf32, #tpu.memory_space<any>>
    %c3_i32_191 = arith.constant 3 : i32
    %c0_i32_192 = arith.constant 0 : i32
    %203 = tpu.memref_slice %arg4[%c0_i32_187, %c3_i32_191, %c0_i32_192] : memref<2x8x128xf32, #tpu.memory_space<vmem>> -> memref<1x1x128xf32, #tpu.memory_space<vmem>>
    %204 = tpu.memref_squeeze %203 : memref<1x1x128xf32, #tpu.memory_space<vmem>> -> memref<1x128xf32, #tpu.memory_space<vmem>>
    %205 = tpu.memref_slice %arg5[%c0_i32_188, %c3_i32_189] : memref<2x8x!tpu.dma_semaphore, #tpu.memory_space<semaphore_mem>> -> memref<1x1x!tpu.dma_semaphore, #tpu.memory_space<semaphore_mem>>
    %206 = tpu.memref_squeeze %205 : memref<1x1x!tpu.dma_semaphore, #tpu.memory_space<semaphore_mem>> -> memref<!tpu.dma_semaphore, #tpu.memory_space<semaphore_mem>>
    tpu.enqueue_dma source(%202 : memref<1x128xf32, #tpu.memory_space<any>>) target(%204 : memref<1x128xf32, #tpu.memory_space<vmem>>) target_semaphore(%206 : memref<!tpu.dma_semaphore, #tpu.memory_space<semaphore_mem>>)
    %c4_i32_193 = arith.constant 4 : i32
    %207 = arith.addi %174, %c4_i32_193 : i32
    %208 = arith.index_cast %207 : i32 to index
    %209 = memref.load %arg1[%208] : memref<64xi32, #tpu.memory_space<smem>>
    %c0_i32_194 = arith.constant 0 : i32
    %c0_i32_195 = arith.constant 0 : i32
    %c4_i32_196 = arith.constant 4 : i32
    %c0_i32_197 = arith.constant 0 : i32
    %210 = tpu.memref_slice %arg2[%209, %c0_i32_197] : memref<16384x128xf32, #tpu.memory_space<any>> -> memref<1x128xf32, #tpu.memory_space<any>>
    %c4_i32_198 = arith.constant 4 : i32
    %c0_i32_199 = arith.constant 0 : i32
    %211 = tpu.memref_slice %arg4[%c0_i32_194, %c4_i32_198, %c0_i32_199] : memref<2x8x128xf32, #tpu.memory_space<vmem>> -> memref<1x1x128xf32, #tpu.memory_space<vmem>>
    %212 = tpu.memref_squeeze %211 : memref<1x1x128xf32, #tpu.memory_space<vmem>> -> memref<1x128xf32, #tpu.memory_space<vmem>>
    %213 = tpu.memref_slice %arg5[%c0_i32_195, %c4_i32_196] : memref<2x8x!tpu.dma_semaphore, #tpu.memory_space<semaphore_mem>> -> memref<1x1x!tpu.dma_semaphore, #tpu.memory_space<semaphore_mem>>
    %214 = tpu.memref_squeeze %213 : memref<1x1x!tpu.dma_semaphore, #tpu.memory_space<semaphore_mem>> -> memref<!tpu.dma_semaphore, #tpu.memory_space<semaphore_mem>>
    tpu.enqueue_dma source(%210 : memref<1x128xf32, #tpu.memory_space<any>>) target(%212 : memref<1x128xf32, #tpu.memory_space<vmem>>) target_semaphore(%214 : memref<!tpu.dma_semaphore, #tpu.memory_space<semaphore_mem>>)
    %c5_i32_200 = arith.constant 5 : i32
    %215 = arith.addi %174, %c5_i32_200 : i32
    %216 = arith.index_cast %215 : i32 to index
    %217 = memref.load %arg1[%216] : memref<64xi32, #tpu.memory_space<smem>>
    %c0_i32_201 = arith.constant 0 : i32
    %c0_i32_202 = arith.constant 0 : i32
    %c5_i32_203 = arith.constant 5 : i32
    %c0_i32_204 = arith.constant 0 : i32
    %218 = tpu.memref_slice %arg2[%217, %c0_i32_204] : memref<16384x128xf32, #tpu.memory_space<any>> -> memref<1x128xf32, #tpu.memory_space<any>>
    %c5_i32_205 = arith.constant 5 : i32
    %c0_i32_206 = arith.constant 0 : i32
    %219 = tpu.memref_slice %arg4[%c0_i32_201, %c5_i32_205, %c0_i32_206] : memref<2x8x128xf32, #tpu.memory_space<vmem>> -> memref<1x1x128xf32, #tpu.memory_space<vmem>>
    %220 = tpu.memref_squeeze %219 : memref<1x1x128xf32, #tpu.memory_space<vmem>> -> memref<1x128xf32, #tpu.memory_space<vmem>>
    %221 = tpu.memref_slice %arg5[%c0_i32_202, %c5_i32_203] : memref<2x8x!tpu.dma_semaphore, #tpu.memory_space<semaphore_mem>> -> memref<1x1x!tpu.dma_semaphore, #tpu.memory_space<semaphore_mem>>
    %222 = tpu.memref_squeeze %221 : memref<1x1x!tpu.dma_semaphore, #tpu.memory_space<semaphore_mem>> -> memref<!tpu.dma_semaphore, #tpu.memory_space<semaphore_mem>>
    tpu.enqueue_dma source(%218 : memref<1x128xf32, #tpu.memory_space<any>>) target(%220 : memref<1x128xf32, #tpu.memory_space<vmem>>) target_semaphore(%222 : memref<!tpu.dma_semaphore, #tpu.memory_space<semaphore_mem>>)
    %c6_i32_207 = arith.constant 6 : i32
    %223 = arith.addi %174, %c6_i32_207 : i32
    %224 = arith.index_cast %223 : i32 to index
    %225 = memref.load %arg1[%224] : memref<64xi32, #tpu.memory_space<smem>>
    %c0_i32_208 = arith.constant 0 : i32
    %c0_i32_209 = arith.constant 0 : i32
    %c6_i32_210 = arith.constant 6 : i32
    %c0_i32_211 = arith.constant 0 : i32
    %226 = tpu.memref_slice %arg2[%225, %c0_i32_211] : memref<16384x128xf32, #tpu.memory_space<any>> -> memref<1x128xf32, #tpu.memory_space<any>>
    %c6_i32_212 = arith.constant 6 : i32
    %c0_i32_213 = arith.constant 0 : i32
    %227 = tpu.memref_slice %arg4[%c0_i32_208, %c6_i32_212, %c0_i32_213] : memref<2x8x128xf32, #tpu.memory_space<vmem>> -> memref<1x1x128xf32, #tpu.memory_space<vmem>>
    %228 = tpu.memref_squeeze %227 : memref<1x1x128xf32, #tpu.memory_space<vmem>> -> memref<1x128xf32, #tpu.memory_space<vmem>>
    %229 = tpu.memref_slice %arg5[%c0_i32_209, %c6_i32_210] : memref<2x8x!tpu.dma_semaphore, #tpu.memory_space<semaphore_mem>> -> memref<1x1x!tpu.dma_semaphore, #tpu.memory_space<semaphore_mem>>
    %230 = tpu.memref_squeeze %229 : memref<1x1x!tpu.dma_semaphore, #tpu.memory_space<semaphore_mem>> -> memref<!tpu.dma_semaphore, #tpu.memory_space<semaphore_mem>>
    tpu.enqueue_dma source(%226 : memref<1x128xf32, #tpu.memory_space<any>>) target(%228 : memref<1x128xf32, #tpu.memory_space<vmem>>) target_semaphore(%230 : memref<!tpu.dma_semaphore, #tpu.memory_space<semaphore_mem>>)
    %c7_i32_214 = arith.constant 7 : i32
    %231 = arith.addi %174, %c7_i32_214 : i32
    %232 = arith.index_cast %231 : i32 to index
    %233 = memref.load %arg1[%232] : memref<64xi32, #tpu.memory_space<smem>>
    %c0_i32_215 = arith.constant 0 : i32
    %c0_i32_216 = arith.constant 0 : i32
    %c7_i32_217 = arith.constant 7 : i32
    %c0_i32_218 = arith.constant 0 : i32
    %234 = tpu.memref_slice %arg2[%233, %c0_i32_218] : memref<16384x128xf32, #tpu.memory_space<any>> -> memref<1x128xf32, #tpu.memory_space<any>>
    %c7_i32_219 = arith.constant 7 : i32
    %c0_i32_220 = arith.constant 0 : i32
    %235 = tpu.memref_slice %arg4[%c0_i32_215, %c7_i32_219, %c0_i32_220] : memref<2x8x128xf32, #tpu.memory_space<vmem>> -> memref<1x1x128xf32, #tpu.memory_space<vmem>>
    %236 = tpu.memref_squeeze %235 : memref<1x1x128xf32, #tpu.memory_space<vmem>> -> memref<1x128xf32, #tpu.memory_space<vmem>>
    %237 = tpu.memref_slice %arg5[%c0_i32_216, %c7_i32_217] : memref<2x8x!tpu.dma_semaphore, #tpu.memory_space<semaphore_mem>> -> memref<1x1x!tpu.dma_semaphore, #tpu.memory_space<semaphore_mem>>
    %238 = tpu.memref_squeeze %237 : memref<1x1x!tpu.dma_semaphore, #tpu.memory_space<semaphore_mem>> -> memref<!tpu.dma_semaphore, #tpu.memory_space<semaphore_mem>>
    tpu.enqueue_dma source(%234 : memref<1x128xf32, #tpu.memory_space<any>>) target(%236 : memref<1x128xf32, #tpu.memory_space<vmem>>) target_semaphore(%238 : memref<!tpu.dma_semaphore, #tpu.memory_space<semaphore_mem>>)
    %c1_i32_221 = arith.constant 1 : i32
    %c1_i32_222 = arith.constant 1 : i32
    %c0_i32_223 = arith.constant 0 : i32
    %c0_i32_224 = arith.constant 0 : i32
    %c0_i32_225 = arith.constant 0 : i32
    %239 = tpu.memref_slice %arg2[%c0_i32_224, %c0_i32_225] : memref<16384x128xf32, #tpu.memory_space<any>> -> memref<1x128xf32, #tpu.memory_space<any>>
    %c0_i32_226 = arith.constant 0 : i32
    %c0_i32_227 = arith.constant 0 : i32
    %240 = tpu.memref_slice %arg4[%c1_i32_221, %c0_i32_226, %c0_i32_227] : memref<2x8x128xf32, #tpu.memory_space<vmem>> -> memref<1x1x128xf32, #tpu.memory_space<vmem>>
    %241 = tpu.memref_squeeze %240 : memref<1x1x128xf32, #tpu.memory_space<vmem>> -> memref<1x128xf32, #tpu.memory_space<vmem>>
    %242 = tpu.memref_slice %arg5[%c1_i32_222, %c0_i32_223] : memref<2x8x!tpu.dma_semaphore, #tpu.memory_space<semaphore_mem>> -> memref<1x1x!tpu.dma_semaphore, #tpu.memory_space<semaphore_mem>>
    %243 = tpu.memref_squeeze %242 : memref<1x1x!tpu.dma_semaphore, #tpu.memory_space<semaphore_mem>> -> memref<!tpu.dma_semaphore, #tpu.memory_space<semaphore_mem>>
    tpu.wait_dma2 semaphore(%243 : memref<!tpu.dma_semaphore, #tpu.memory_space<semaphore_mem>>) src(%239 : memref<1x128xf32, #tpu.memory_space<any>>) dst(%241 : memref<1x128xf32, #tpu.memory_space<vmem>>)
    %c1_i32_228 = arith.constant 1 : i32
    %c1_i32_229 = arith.constant 1 : i32
    %c1_i32_230 = arith.constant 1 : i32
    %c0_i32_231 = arith.constant 0 : i32
    %c0_i32_232 = arith.constant 0 : i32
    %244 = tpu.memref_slice %arg2[%c0_i32_231, %c0_i32_232] : memref<16384x128xf32, #tpu.memory_space<any>> -> memref<1x128xf32, #tpu.memory_space<any>>
    %c1_i32_233 = arith.constant 1 : i32
    %c0_i32_234 = arith.constant 0 : i32
    %245 = tpu.memref_slice %arg4[%c1_i32_228, %c1_i32_233, %c0_i32_234] : memref<2x8x128xf32, #tpu.memory_space<vmem>> -> memref<1x1x128xf32, #tpu.memory_space<vmem>>
    %246 = tpu.memref_squeeze %245 : memref<1x1x128xf32, #tpu.memory_space<vmem>> -> memref<1x128xf32, #tpu.memory_space<vmem>>
    %247 = tpu.memref_slice %arg5[%c1_i32_229, %c1_i32_230] : memref<2x8x!tpu.dma_semaphore, #tpu.memory_space<semaphore_mem>> -> memref<1x1x!tpu.dma_semaphore, #tpu.memory_space<semaphore_mem>>
    %248 = tpu.memref_squeeze %247 : memref<1x1x!tpu.dma_semaphore, #tpu.memory_space<semaphore_mem>> -> memref<!tpu.dma_semaphore, #tpu.memory_space<semaphore_mem>>
    tpu.wait_dma2 semaphore(%248 : memref<!tpu.dma_semaphore, #tpu.memory_space<semaphore_mem>>) src(%244 : memref<1x128xf32, #tpu.memory_space<any>>) dst(%246 : memref<1x128xf32, #tpu.memory_space<vmem>>)
    %c1_i32_235 = arith.constant 1 : i32
    %c1_i32_236 = arith.constant 1 : i32
    %c2_i32_237 = arith.constant 2 : i32
    %c0_i32_238 = arith.constant 0 : i32
    %c0_i32_239 = arith.constant 0 : i32
    %249 = tpu.memref_slice %arg2[%c0_i32_238, %c0_i32_239] : memref<16384x128xf32, #tpu.memory_space<any>> -> memref<1x128xf32, #tpu.memory_space<any>>
    %c2_i32_240 = arith.constant 2 : i32
    %c0_i32_241 = arith.constant 0 : i32
    %250 = tpu.memref_slice %arg4[%c1_i32_235, %c2_i32_240, %c0_i32_241] : memref<2x8x128xf32, #tpu.memory_space<vmem>> -> memref<1x1x128xf32, #tpu.memory_space<vmem>>
    %251 = tpu.memref_squeeze %250 : memref<1x1x128xf32, #tpu.memory_space<vmem>> -> memref<1x128xf32, #tpu.memory_space<vmem>>
    %252 = tpu.memref_slice %arg5[%c1_i32_236, %c2_i32_237] : memref<2x8x!tpu.dma_semaphore, #tpu.memory_space<semaphore_mem>> -> memref<1x1x!tpu.dma_semaphore, #tpu.memory_space<semaphore_mem>>
    %253 = tpu.memref_squeeze %252 : memref<1x1x!tpu.dma_semaphore, #tpu.memory_space<semaphore_mem>> -> memref<!tpu.dma_semaphore, #tpu.memory_space<semaphore_mem>>
    tpu.wait_dma2 semaphore(%253 : memref<!tpu.dma_semaphore, #tpu.memory_space<semaphore_mem>>) src(%249 : memref<1x128xf32, #tpu.memory_space<any>>) dst(%251 : memref<1x128xf32, #tpu.memory_space<vmem>>)
    %c1_i32_242 = arith.constant 1 : i32
    %c1_i32_243 = arith.constant 1 : i32
    %c3_i32_244 = arith.constant 3 : i32
    %c0_i32_245 = arith.constant 0 : i32
    %c0_i32_246 = arith.constant 0 : i32
    %254 = tpu.memref_slice %arg2[%c0_i32_245, %c0_i32_246] : memref<16384x128xf32, #tpu.memory_space<any>> -> memref<1x128xf32, #tpu.memory_space<any>>
    %c3_i32_247 = arith.constant 3 : i32
    %c0_i32_248 = arith.constant 0 : i32
    %255 = tpu.memref_slice %arg4[%c1_i32_242, %c3_i32_247, %c0_i32_248] : memref<2x8x128xf32, #tpu.memory_space<vmem>> -> memref<1x1x128xf32, #tpu.memory_space<vmem>>
    %256 = tpu.memref_squeeze %255 : memref<1x1x128xf32, #tpu.memory_space<vmem>> -> memref<1x128xf32, #tpu.memory_space<vmem>>
    %257 = tpu.memref_slice %arg5[%c1_i32_243, %c3_i32_244] : memref<2x8x!tpu.dma_semaphore, #tpu.memory_space<semaphore_mem>> -> memref<1x1x!tpu.dma_semaphore, #tpu.memory_space<semaphore_mem>>
    %258 = tpu.memref_squeeze %257 : memref<1x1x!tpu.dma_semaphore, #tpu.memory_space<semaphore_mem>> -> memref<!tpu.dma_semaphore, #tpu.memory_space<semaphore_mem>>
    tpu.wait_dma2 semaphore(%258 : memref<!tpu.dma_semaphore, #tpu.memory_space<semaphore_mem>>) src(%254 : memref<1x128xf32, #tpu.memory_space<any>>) dst(%256 : memref<1x128xf32, #tpu.memory_space<vmem>>)
    %c1_i32_249 = arith.constant 1 : i32
    %c1_i32_250 = arith.constant 1 : i32
    %c4_i32_251 = arith.constant 4 : i32
    %c0_i32_252 = arith.constant 0 : i32
    %c0_i32_253 = arith.constant 0 : i32
    %259 = tpu.memref_slice %arg2[%c0_i32_252, %c0_i32_253] : memref<16384x128xf32, #tpu.memory_space<any>> -> memref<1x128xf32, #tpu.memory_space<any>>
    %c4_i32_254 = arith.constant 4 : i32
    %c0_i32_255 = arith.constant 0 : i32
    %260 = tpu.memref_slice %arg4[%c1_i32_249, %c4_i32_254, %c0_i32_255] : memref<2x8x128xf32, #tpu.memory_space<vmem>> -> memref<1x1x128xf32, #tpu.memory_space<vmem>>
    %261 = tpu.memref_squeeze %260 : memref<1x1x128xf32, #tpu.memory_space<vmem>> -> memref<1x128xf32, #tpu.memory_space<vmem>>
    %262 = tpu.memref_slice %arg5[%c1_i32_250, %c4_i32_251] : memref<2x8x!tpu.dma_semaphore, #tpu.memory_space<semaphore_mem>> -> memref<1x1x!tpu.dma_semaphore, #tpu.memory_space<semaphore_mem>>
    %263 = tpu.memref_squeeze %262 : memref<1x1x!tpu.dma_semaphore, #tpu.memory_space<semaphore_mem>> -> memref<!tpu.dma_semaphore, #tpu.memory_space<semaphore_mem>>
    tpu.wait_dma2 semaphore(%263 : memref<!tpu.dma_semaphore, #tpu.memory_space<semaphore_mem>>) src(%259 : memref<1x128xf32, #tpu.memory_space<any>>) dst(%261 : memref<1x128xf32, #tpu.memory_space<vmem>>)
    %c1_i32_256 = arith.constant 1 : i32
    %c1_i32_257 = arith.constant 1 : i32
    %c5_i32_258 = arith.constant 5 : i32
    %c0_i32_259 = arith.constant 0 : i32
    %c0_i32_260 = arith.constant 0 : i32
    %264 = tpu.memref_slice %arg2[%c0_i32_259, %c0_i32_260] : memref<16384x128xf32, #tpu.memory_space<any>> -> memref<1x128xf32, #tpu.memory_space<any>>
    %c5_i32_261 = arith.constant 5 : i32
    %c0_i32_262 = arith.constant 0 : i32
    %265 = tpu.memref_slice %arg4[%c1_i32_256, %c5_i32_261, %c0_i32_262] : memref<2x8x128xf32, #tpu.memory_space<vmem>> -> memref<1x1x128xf32, #tpu.memory_space<vmem>>
    %266 = tpu.memref_squeeze %265 : memref<1x1x128xf32, #tpu.memory_space<vmem>> -> memref<1x128xf32, #tpu.memory_space<vmem>>
    %267 = tpu.memref_slice %arg5[%c1_i32_257, %c5_i32_258] : memref<2x8x!tpu.dma_semaphore, #tpu.memory_space<semaphore_mem>> -> memref<1x1x!tpu.dma_semaphore, #tpu.memory_space<semaphore_mem>>
    %268 = tpu.memref_squeeze %267 : memref<1x1x!tpu.dma_semaphore, #tpu.memory_space<semaphore_mem>> -> memref<!tpu.dma_semaphore, #tpu.memory_space<semaphore_mem>>
    tpu.wait_dma2 semaphore(%268 : memref<!tpu.dma_semaphore, #tpu.memory_space<semaphore_mem>>) src(%264 : memref<1x128xf32, #tpu.memory_space<any>>) dst(%266 : memref<1x128xf32, #tpu.memory_space<vmem>>)
    %c1_i32_263 = arith.constant 1 : i32
    %c1_i32_264 = arith.constant 1 : i32
    %c6_i32_265 = arith.constant 6 : i32
    %c0_i32_266 = arith.constant 0 : i32
    %c0_i32_267 = arith.constant 0 : i32
    %269 = tpu.memref_slice %arg2[%c0_i32_266, %c0_i32_267] : memref<16384x128xf32, #tpu.memory_space<any>> -> memref<1x128xf32, #tpu.memory_space<any>>
    %c6_i32_268 = arith.constant 6 : i32
    %c0_i32_269 = arith.constant 0 : i32
    %270 = tpu.memref_slice %arg4[%c1_i32_263, %c6_i32_268, %c0_i32_269] : memref<2x8x128xf32, #tpu.memory_space<vmem>> -> memref<1x1x128xf32, #tpu.memory_space<vmem>>
    %271 = tpu.memref_squeeze %270 : memref<1x1x128xf32, #tpu.memory_space<vmem>> -> memref<1x128xf32, #tpu.memory_space<vmem>>
    %272 = tpu.memref_slice %arg5[%c1_i32_264, %c6_i32_265] : memref<2x8x!tpu.dma_semaphore, #tpu.memory_space<semaphore_mem>> -> memref<1x1x!tpu.dma_semaphore, #tpu.memory_space<semaphore_mem>>
    %273 = tpu.memref_squeeze %272 : memref<1x1x!tpu.dma_semaphore, #tpu.memory_space<semaphore_mem>> -> memref<!tpu.dma_semaphore, #tpu.memory_space<semaphore_mem>>
    tpu.wait_dma2 semaphore(%273 : memref<!tpu.dma_semaphore, #tpu.memory_space<semaphore_mem>>) src(%269 : memref<1x128xf32, #tpu.memory_space<any>>) dst(%271 : memref<1x128xf32, #tpu.memory_space<vmem>>)
    %c1_i32_270 = arith.constant 1 : i32
    %c1_i32_271 = arith.constant 1 : i32
    %c7_i32_272 = arith.constant 7 : i32
    %c0_i32_273 = arith.constant 0 : i32
    %c0_i32_274 = arith.constant 0 : i32
    %274 = tpu.memref_slice %arg2[%c0_i32_273, %c0_i32_274] : memref<16384x128xf32, #tpu.memory_space<any>> -> memref<1x128xf32, #tpu.memory_space<any>>
    %c7_i32_275 = arith.constant 7 : i32
    %c0_i32_276 = arith.constant 0 : i32
    %275 = tpu.memref_slice %arg4[%c1_i32_270, %c7_i32_275, %c0_i32_276] : memref<2x8x128xf32, #tpu.memory_space<vmem>> -> memref<1x1x128xf32, #tpu.memory_space<vmem>>
    %276 = tpu.memref_squeeze %275 : memref<1x1x128xf32, #tpu.memory_space<vmem>> -> memref<1x128xf32, #tpu.memory_space<vmem>>
    %277 = tpu.memref_slice %arg5[%c1_i32_271, %c7_i32_272] : memref<2x8x!tpu.dma_semaphore, #tpu.memory_space<semaphore_mem>> -> memref<1x1x!tpu.dma_semaphore, #tpu.memory_space<semaphore_mem>>
    %278 = tpu.memref_squeeze %277 : memref<1x1x!tpu.dma_semaphore, #tpu.memory_space<semaphore_mem>> -> memref<!tpu.dma_semaphore, #tpu.memory_space<semaphore_mem>>
    tpu.wait_dma2 semaphore(%278 : memref<!tpu.dma_semaphore, #tpu.memory_space<semaphore_mem>>) src(%274 : memref<1x128xf32, #tpu.memory_space<any>>) dst(%276 : memref<1x128xf32, #tpu.memory_space<vmem>>)
    %c1 = arith.constant 1 : index
    %c0_277 = arith.constant 0 : index
    %c0_278 = arith.constant 0 : index
    %279 = vector.load %arg4[%c1, %c0_277, %c0_278] : memref<2x8x128xf32, #tpu.memory_space<vmem>>, vector<1x8x128xf32>
    %280 = vector.shape_cast %279 : vector<1x8x128xf32> to vector<8x128xf32>
    %c8 = arith.constant 8 : index
    %c0_279 = arith.constant 0 : index
    %281 = vector.load %arg3[%c8, %c0_279] : memref<64x128xf32, #tpu.memory_space<vmem>>, vector<8x128xf32>
    tpu.vector_store %arg3[%c8, %c0_279], %280 {strides = array<i32>} : memref<64x128xf32, #tpu.memory_space<vmem>>, vector<8x128xf32>,
    %c24_i32 = arith.constant 24 : i32
    %282 = arith.addi %0, %c24_i32 : i32
    %c0_i32_280 = arith.constant 0 : i32
    %283 = arith.addi %282, %c0_i32_280 : i32
    %284 = arith.index_cast %283 : i32 to index
    %285 = memref.load %arg1[%284] : memref<64xi32, #tpu.memory_space<smem>>
    %c1_i32_281 = arith.constant 1 : i32
    %c1_i32_282 = arith.constant 1 : i32
    %c0_i32_283 = arith.constant 0 : i32
    %c0_i32_284 = arith.constant 0 : i32
    %286 = tpu.memref_slice %arg2[%285, %c0_i32_284] : memref<16384x128xf32, #tpu.memory_space<any>> -> memref<1x128xf32, #tpu.memory_space<any>>
    %c0_i32_285 = arith.constant 0 : i32
    %c0_i32_286 = arith.constant 0 : i32
    %287 = tpu.memref_slice %arg4[%c1_i32_281, %c0_i32_285, %c0_i32_286] : memref<2x8x128xf32, #tpu.memory_space<vmem>> -> memref<1x1x128xf32, #tpu.memory_space<vmem>>
    %288 = tpu.memref_squeeze %287 : memref<1x1x128xf32, #tpu.memory_space<vmem>> -> memref<1x128xf32, #tpu.memory_space<vmem>>
    %289 = tpu.memref_slice %arg5[%c1_i32_282, %c0_i32_283] : memref<2x8x!tpu.dma_semaphore, #tpu.memory_space<semaphore_mem>> -> memref<1x1x!tpu.dma_semaphore, #tpu.memory_space<semaphore_mem>>
    %290 = tpu.memref_squeeze %289 : memref<1x1x!tpu.dma_semaphore, #tpu.memory_space<semaphore_mem>> -> memref<!tpu.dma_semaphore, #tpu.memory_space<semaphore_mem>>
    tpu.enqueue_dma source(%286 : memref<1x128xf32, #tpu.memory_space<any>>) target(%288 : memref<1x128xf32, #tpu.memory_space<vmem>>) target_semaphore(%290 : memref<!tpu.dma_semaphore, #tpu.memory_space<semaphore_mem>>)
    %c1_i32_287 = arith.constant 1 : i32
    %291 = arith.addi %282, %c1_i32_287 : i32
    %292 = arith.index_cast %291 : i32 to index
    %293 = memref.load %arg1[%292] : memref<64xi32, #tpu.memory_space<smem>>
    %c1_i32_288 = arith.constant 1 : i32
    %c1_i32_289 = arith.constant 1 : i32
    %c1_i32_290 = arith.constant 1 : i32
    %c0_i32_291 = arith.constant 0 : i32
    %294 = tpu.memref_slice %arg2[%293, %c0_i32_291] : memref<16384x128xf32, #tpu.memory_space<any>> -> memref<1x128xf32, #tpu.memory_space<any>>
    %c1_i32_292 = arith.constant 1 : i32
    %c0_i32_293 = arith.constant 0 : i32
    %295 = tpu.memref_slice %arg4[%c1_i32_288, %c1_i32_292, %c0_i32_293] : memref<2x8x128xf32, #tpu.memory_space<vmem>> -> memref<1x1x128xf32, #tpu.memory_space<vmem>>
    %296 = tpu.memref_squeeze %295 : memref<1x1x128xf32, #tpu.memory_space<vmem>> -> memref<1x128xf32, #tpu.memory_space<vmem>>
    %297 = tpu.memref_slice %arg5[%c1_i32_289, %c1_i32_290] : memref<2x8x!tpu.dma_semaphore, #tpu.memory_space<semaphore_mem>> -> memref<1x1x!tpu.dma_semaphore, #tpu.memory_space<semaphore_mem>>
    %298 = tpu.memref_squeeze %297 : memref<1x1x!tpu.dma_semaphore, #tpu.memory_space<semaphore_mem>> -> memref<!tpu.dma_semaphore, #tpu.memory_space<semaphore_mem>>
    tpu.enqueue_dma source(%294 : memref<1x128xf32, #tpu.memory_space<any>>) target(%296 : memref<1x128xf32, #tpu.memory_space<vmem>>) target_semaphore(%298 : memref<!tpu.dma_semaphore, #tpu.memory_space<semaphore_mem>>)
    %c2_i32_294 = arith.constant 2 : i32
    %299 = arith.addi %282, %c2_i32_294 : i32
    %300 = arith.index_cast %299 : i32 to index
    %301 = memref.load %arg1[%300] : memref<64xi32, #tpu.memory_space<smem>>
    %c1_i32_295 = arith.constant 1 : i32
    %c1_i32_296 = arith.constant 1 : i32
    %c2_i32_297 = arith.constant 2 : i32
    %c0_i32_298 = arith.constant 0 : i32
    %302 = tpu.memref_slice %arg2[%301, %c0_i32_298] : memref<16384x128xf32, #tpu.memory_space<any>> -> memref<1x128xf32, #tpu.memory_space<any>>
    %c2_i32_299 = arith.constant 2 : i32
    %c0_i32_300 = arith.constant 0 : i32
    %303 = tpu.memref_slice %arg4[%c1_i32_295, %c2_i32_299, %c0_i32_300] : memref<2x8x128xf32, #tpu.memory_space<vmem>> -> memref<1x1x128xf32, #tpu.memory_space<vmem>>
    %304 = tpu.memref_squeeze %303 : memref<1x1x128xf32, #tpu.memory_space<vmem>> -> memref<1x128xf32, #tpu.memory_space<vmem>>
    %305 = tpu.memref_slice %arg5[%c1_i32_296, %c2_i32_297] : memref<2x8x!tpu.dma_semaphore, #tpu.memory_space<semaphore_mem>> -> memref<1x1x!tpu.dma_semaphore, #tpu.memory_space<semaphore_mem>>
    %306 = tpu.memref_squeeze %305 : memref<1x1x!tpu.dma_semaphore, #tpu.memory_space<semaphore_mem>> -> memref<!tpu.dma_semaphore, #tpu.memory_space<semaphore_mem>>
    tpu.enqueue_dma source(%302 : memref<1x128xf32, #tpu.memory_space<any>>) target(%304 : memref<1x128xf32, #tpu.memory_space<vmem>>) target_semaphore(%306 : memref<!tpu.dma_semaphore, #tpu.memory_space<semaphore_mem>>)
    %c3_i32_301 = arith.constant 3 : i32
    %307 = arith.addi %282, %c3_i32_301 : i32
    %308 = arith.index_cast %307 : i32 to index
    %309 = memref.load %arg1[%308] : memref<64xi32, #tpu.memory_space<smem>>
    %c1_i32_302 = arith.constant 1 : i32
    %c1_i32_303 = arith.constant 1 : i32
    %c3_i32_304 = arith.constant 3 : i32
    %c0_i32_305 = arith.constant 0 : i32
    %310 = tpu.memref_slice %arg2[%309, %c0_i32_305] : memref<16384x128xf32, #tpu.memory_space<any>> -> memref<1x128xf32, #tpu.memory_space<any>>
    %c3_i32_306 = arith.constant 3 : i32
    %c0_i32_307 = arith.constant 0 : i32
    %311 = tpu.memref_slice %arg4[%c1_i32_302, %c3_i32_306, %c0_i32_307] : memref<2x8x128xf32, #tpu.memory_space<vmem>> -> memref<1x1x128xf32, #tpu.memory_space<vmem>>
    %312 = tpu.memref_squeeze %311 : memref<1x1x128xf32, #tpu.memory_space<vmem>> -> memref<1x128xf32, #tpu.memory_space<vmem>>
    %313 = tpu.memref_slice %arg5[%c1_i32_303, %c3_i32_304] : memref<2x8x!tpu.dma_semaphore, #tpu.memory_space<semaphore_mem>> -> memref<1x1x!tpu.dma_semaphore, #tpu.memory_space<semaphore_mem>>
    %314 = tpu.memref_squeeze %313 : memref<1x1x!tpu.dma_semaphore, #tpu.memory_space<semaphore_mem>> -> memref<!tpu.dma_semaphore, #tpu.memory_space<semaphore_mem>>
    tpu.enqueue_dma source(%310 : memref<1x128xf32, #tpu.memory_space<any>>) target(%312 : memref<1x128xf32, #tpu.memory_space<vmem>>) target_semaphore(%314 : memref<!tpu.dma_semaphore, #tpu.memory_space<semaphore_mem>>)
    %c4_i32_308 = arith.constant 4 : i32
    %315 = arith.addi %282, %c4_i32_308 : i32
    %316 = arith.index_cast %315 : i32 to index
    %317 = memref.load %arg1[%316] : memref<64xi32, #tpu.memory_space<smem>>
    %c1_i32_309 = arith.constant 1 : i32
    %c1_i32_310 = arith.constant 1 : i32
    %c4_i32_311 = arith.constant 4 : i32
    %c0_i32_312 = arith.constant 0 : i32
    %318 = tpu.memref_slice %arg2[%317, %c0_i32_312] : memref<16384x128xf32, #tpu.memory_space<any>> -> memref<1x128xf32, #tpu.memory_space<any>>
    %c4_i32_313 = arith.constant 4 : i32
    %c0_i32_314 = arith.constant 0 : i32
    %319 = tpu.memref_slice %arg4[%c1_i32_309, %c4_i32_313, %c0_i32_314] : memref<2x8x128xf32, #tpu.memory_space<vmem>> -> memref<1x1x128xf32, #tpu.memory_space<vmem>>
    %320 = tpu.memref_squeeze %319 : memref<1x1x128xf32, #tpu.memory_space<vmem>> -> memref<1x128xf32, #tpu.memory_space<vmem>>
    %321 = tpu.memref_slice %arg5[%c1_i32_310, %c4_i32_311] : memref<2x8x!tpu.dma_semaphore, #tpu.memory_space<semaphore_mem>> -> memref<1x1x!tpu.dma_semaphore, #tpu.memory_space<semaphore_mem>>
    %322 = tpu.memref_squeeze %321 : memref<1x1x!tpu.dma_semaphore, #tpu.memory_space<semaphore_mem>> -> memref<!tpu.dma_semaphore, #tpu.memory_space<semaphore_mem>>
    tpu.enqueue_dma source(%318 : memref<1x128xf32, #tpu.memory_space<any>>) target(%320 : memref<1x128xf32, #tpu.memory_space<vmem>>) target_semaphore(%322 : memref<!tpu.dma_semaphore, #tpu.memory_space<semaphore_mem>>)
    %c5_i32_315 = arith.constant 5 : i32
    %323 = arith.addi %282, %c5_i32_315 : i32
    %324 = arith.index_cast %323 : i32 to index
    %325 = memref.load %arg1[%324] : memref<64xi32, #tpu.memory_space<smem>>
    %c1_i32_316 = arith.constant 1 : i32
    %c1_i32_317 = arith.constant 1 : i32
    %c5_i32_318 = arith.constant 5 : i32
    %c0_i32_319 = arith.constant 0 : i32
    %326 = tpu.memref_slice %arg2[%325, %c0_i32_319] : memref<16384x128xf32, #tpu.memory_space<any>> -> memref<1x128xf32, #tpu.memory_space<any>>
    %c5_i32_320 = arith.constant 5 : i32
    %c0_i32_321 = arith.constant 0 : i32
    %327 = tpu.memref_slice %arg4[%c1_i32_316, %c5_i32_320, %c0_i32_321] : memref<2x8x128xf32, #tpu.memory_space<vmem>> -> memref<1x1x128xf32, #tpu.memory_space<vmem>>
    %328 = tpu.memref_squeeze %327 : memref<1x1x128xf32, #tpu.memory_space<vmem>> -> memref<1x128xf32, #tpu.memory_space<vmem>>
    %329 = tpu.memref_slice %arg5[%c1_i32_317, %c5_i32_318] : memref<2x8x!tpu.dma_semaphore, #tpu.memory_space<semaphore_mem>> -> memref<1x1x!tpu.dma_semaphore, #tpu.memory_space<semaphore_mem>>
    %330 = tpu.memref_squeeze %329 : memref<1x1x!tpu.dma_semaphore, #tpu.memory_space<semaphore_mem>> -> memref<!tpu.dma_semaphore, #tpu.memory_space<semaphore_mem>>
    tpu.enqueue_dma source(%326 : memref<1x128xf32, #tpu.memory_space<any>>) target(%328 : memref<1x128xf32, #tpu.memory_space<vmem>>) target_semaphore(%330 : memref<!tpu.dma_semaphore, #tpu.memory_space<semaphore_mem>>)
    %c6_i32_322 = arith.constant 6 : i32
    %331 = arith.addi %282, %c6_i32_322 : i32
    %332 = arith.index_cast %331 : i32 to index
    %333 = memref.load %arg1[%332] : memref<64xi32, #tpu.memory_space<smem>>
    %c1_i32_323 = arith.constant 1 : i32
    %c1_i32_324 = arith.constant 1 : i32
    %c6_i32_325 = arith.constant 6 : i32
    %c0_i32_326 = arith.constant 0 : i32
    %334 = tpu.memref_slice %arg2[%333, %c0_i32_326] : memref<16384x128xf32, #tpu.memory_space<any>> -> memref<1x128xf32, #tpu.memory_space<any>>
    %c6_i32_327 = arith.constant 6 : i32
    %c0_i32_328 = arith.constant 0 : i32
    %335 = tpu.memref_slice %arg4[%c1_i32_323, %c6_i32_327, %c0_i32_328] : memref<2x8x128xf32, #tpu.memory_space<vmem>> -> memref<1x1x128xf32, #tpu.memory_space<vmem>>
    %336 = tpu.memref_squeeze %335 : memref<1x1x128xf32, #tpu.memory_space<vmem>> -> memref<1x128xf32, #tpu.memory_space<vmem>>
    %337 = tpu.memref_slice %arg5[%c1_i32_324, %c6_i32_325] : memref<2x8x!tpu.dma_semaphore, #tpu.memory_space<semaphore_mem>> -> memref<1x1x!tpu.dma_semaphore, #tpu.memory_space<semaphore_mem>>
    %338 = tpu.memref_squeeze %337 : memref<1x1x!tpu.dma_semaphore, #tpu.memory_space<semaphore_mem>> -> memref<!tpu.dma_semaphore, #tpu.memory_space<semaphore_mem>>
    tpu.enqueue_dma source(%334 : memref<1x128xf32, #tpu.memory_space<any>>) target(%336 : memref<1x128xf32, #tpu.memory_space<vmem>>) target_semaphore(%338 : memref<!tpu.dma_semaphore, #tpu.memory_space<semaphore_mem>>)
    %c7_i32_329 = arith.constant 7 : i32
    %339 = arith.addi %282, %c7_i32_329 : i32
    %340 = arith.index_cast %339 : i32 to index
    %341 = memref.load %arg1[%340] : memref<64xi32, #tpu.memory_space<smem>>
    %c1_i32_330 = arith.constant 1 : i32
    %c1_i32_331 = arith.constant 1 : i32
    %c7_i32_332 = arith.constant 7 : i32
    %c0_i32_333 = arith.constant 0 : i32
    %342 = tpu.memref_slice %arg2[%341, %c0_i32_333] : memref<16384x128xf32, #tpu.memory_space<any>> -> memref<1x128xf32, #tpu.memory_space<any>>
    %c7_i32_334 = arith.constant 7 : i32
    %c0_i32_335 = arith.constant 0 : i32
    %343 = tpu.memref_slice %arg4[%c1_i32_330, %c7_i32_334, %c0_i32_335] : memref<2x8x128xf32, #tpu.memory_space<vmem>> -> memref<1x1x128xf32, #tpu.memory_space<vmem>>
    %344 = tpu.memref_squeeze %343 : memref<1x1x128xf32, #tpu.memory_space<vmem>> -> memref<1x128xf32, #tpu.memory_space<vmem>>
    %345 = tpu.memref_slice %arg5[%c1_i32_331, %c7_i32_332] : memref<2x8x!tpu.dma_semaphore, #tpu.memory_space<semaphore_mem>> -> memref<1x1x!tpu.dma_semaphore, #tpu.memory_space<semaphore_mem>>
    %346 = tpu.memref_squeeze %345 : memref<1x1x!tpu.dma_semaphore, #tpu.memory_space<semaphore_mem>> -> memref<!tpu.dma_semaphore, #tpu.memory_space<semaphore_mem>>
    tpu.enqueue_dma source(%342 : memref<1x128xf32, #tpu.memory_space<any>>) target(%344 : memref<1x128xf32, #tpu.memory_space<vmem>>) target_semaphore(%346 : memref<!tpu.dma_semaphore, #tpu.memory_space<semaphore_mem>>)
    %c0_i32_336 = arith.constant 0 : i32
    %c0_i32_337 = arith.constant 0 : i32
    %c0_i32_338 = arith.constant 0 : i32
    %c0_i32_339 = arith.constant 0 : i32
    %c0_i32_340 = arith.constant 0 : i32
    %347 = tpu.memref_slice %arg2[%c0_i32_339, %c0_i32_340] : memref<16384x128xf32, #tpu.memory_space<any>> -> memref<1x128xf32, #tpu.memory_space<any>>
    %c0_i32_341 = arith.constant 0 : i32
    %c0_i32_342 = arith.constant 0 : i32
    %348 = tpu.memref_slice %arg4[%c0_i32_336, %c0_i32_341, %c0_i32_342] : memref<2x8x128xf32, #tpu.memory_space<vmem>> -> memref<1x1x128xf32, #tpu.memory_space<vmem>>
    %349 = tpu.memref_squeeze %348 : memref<1x1x128xf32, #tpu.memory_space<vmem>> -> memref<1x128xf32, #tpu.memory_space<vmem>>
    %350 = tpu.memref_slice %arg5[%c0_i32_337, %c0_i32_338] : memref<2x8x!tpu.dma_semaphore, #tpu.memory_space<semaphore_mem>> -> memref<1x1x!tpu.dma_semaphore, #tpu.memory_space<semaphore_mem>>
    %351 = tpu.memref_squeeze %350 : memref<1x1x!tpu.dma_semaphore, #tpu.memory_space<semaphore_mem>> -> memref<!tpu.dma_semaphore, #tpu.memory_space<semaphore_mem>>
    tpu.wait_dma2 semaphore(%351 : memref<!tpu.dma_semaphore, #tpu.memory_space<semaphore_mem>>) src(%347 : memref<1x128xf32, #tpu.memory_space<any>>) dst(%349 : memref<1x128xf32, #tpu.memory_space<vmem>>)
    %c0_i32_343 = arith.constant 0 : i32
    %c0_i32_344 = arith.constant 0 : i32
    %c1_i32_345 = arith.constant 1 : i32
    %c0_i32_346 = arith.constant 0 : i32
    %c0_i32_347 = arith.constant 0 : i32
    %352 = tpu.memref_slice %arg2[%c0_i32_346, %c0_i32_347] : memref<16384x128xf32, #tpu.memory_space<any>> -> memref<1x128xf32, #tpu.memory_space<any>>
    %c1_i32_348 = arith.constant 1 : i32
    %c0_i32_349 = arith.constant 0 : i32
    %353 = tpu.memref_slice %arg4[%c0_i32_343, %c1_i32_348, %c0_i32_349] : memref<2x8x128xf32, #tpu.memory_space<vmem>> -> memref<1x1x128xf32, #tpu.memory_space<vmem>>
    %354 = tpu.memref_squeeze %353 : memref<1x1x128xf32, #tpu.memory_space<vmem>> -> memref<1x128xf32, #tpu.memory_space<vmem>>
    %355 = tpu.memref_slice %arg5[%c0_i32_344, %c1_i32_345] : memref<2x8x!tpu.dma_semaphore, #tpu.memory_space<semaphore_mem>> -> memref<1x1x!tpu.dma_semaphore, #tpu.memory_space<semaphore_mem>>
    %356 = tpu.memref_squeeze %355 : memref<1x1x!tpu.dma_semaphore, #tpu.memory_space<semaphore_mem>> -> memref<!tpu.dma_semaphore, #tpu.memory_space<semaphore_mem>>
    tpu.wait_dma2 semaphore(%356 : memref<!tpu.dma_semaphore, #tpu.memory_space<semaphore_mem>>) src(%352 : memref<1x128xf32, #tpu.memory_space<any>>) dst(%354 : memref<1x128xf32, #tpu.memory_space<vmem>>)
    %c0_i32_350 = arith.constant 0 : i32
    %c0_i32_351 = arith.constant 0 : i32
    %c2_i32_352 = arith.constant 2 : i32
    %c0_i32_353 = arith.constant 0 : i32
    %c0_i32_354 = arith.constant 0 : i32
    %357 = tpu.memref_slice %arg2[%c0_i32_353, %c0_i32_354] : memref<16384x128xf32, #tpu.memory_space<any>> -> memref<1x128xf32, #tpu.memory_space<any>>
    %c2_i32_355 = arith.constant 2 : i32
    %c0_i32_356 = arith.constant 0 : i32
    %358 = tpu.memref_slice %arg4[%c0_i32_350, %c2_i32_355, %c0_i32_356] : memref<2x8x128xf32, #tpu.memory_space<vmem>> -> memref<1x1x128xf32, #tpu.memory_space<vmem>>
    %359 = tpu.memref_squeeze %358 : memref<1x1x128xf32, #tpu.memory_space<vmem>> -> memref<1x128xf32, #tpu.memory_space<vmem>>
    %360 = tpu.memref_slice %arg5[%c0_i32_351, %c2_i32_352] : memref<2x8x!tpu.dma_semaphore, #tpu.memory_space<semaphore_mem>> -> memref<1x1x!tpu.dma_semaphore, #tpu.memory_space<semaphore_mem>>
    %361 = tpu.memref_squeeze %360 : memref<1x1x!tpu.dma_semaphore, #tpu.memory_space<semaphore_mem>> -> memref<!tpu.dma_semaphore, #tpu.memory_space<semaphore_mem>>
    tpu.wait_dma2 semaphore(%361 : memref<!tpu.dma_semaphore, #tpu.memory_space<semaphore_mem>>) src(%357 : memref<1x128xf32, #tpu.memory_space<any>>) dst(%359 : memref<1x128xf32, #tpu.memory_space<vmem>>)
    %c0_i32_357 = arith.constant 0 : i32
    %c0_i32_358 = arith.constant 0 : i32
    %c3_i32_359 = arith.constant 3 : i32
    %c0_i32_360 = arith.constant 0 : i32
    %c0_i32_361 = arith.constant 0 : i32
    %362 = tpu.memref_slice %arg2[%c0_i32_360, %c0_i32_361] : memref<16384x128xf32, #tpu.memory_space<any>> -> memref<1x128xf32, #tpu.memory_space<any>>
    %c3_i32_362 = arith.constant 3 : i32
    %c0_i32_363 = arith.constant 0 : i32
    %363 = tpu.memref_slice %arg4[%c0_i32_357, %c3_i32_362, %c0_i32_363] : memref<2x8x128xf32, #tpu.memory_space<vmem>> -> memref<1x1x128xf32, #tpu.memory_space<vmem>>
    %364 = tpu.memref_squeeze %363 : memref<1x1x128xf32, #tpu.memory_space<vmem>> -> memref<1x128xf32, #tpu.memory_space<vmem>>
    %365 = tpu.memref_slice %arg5[%c0_i32_358, %c3_i32_359] : memref<2x8x!tpu.dma_semaphore, #tpu.memory_space<semaphore_mem>> -> memref<1x1x!tpu.dma_semaphore, #tpu.memory_space<semaphore_mem>>
    %366 = tpu.memref_squeeze %365 : memref<1x1x!tpu.dma_semaphore, #tpu.memory_space<semaphore_mem>> -> memref<!tpu.dma_semaphore, #tpu.memory_space<semaphore_mem>>
    tpu.wait_dma2 semaphore(%366 : memref<!tpu.dma_semaphore, #tpu.memory_space<semaphore_mem>>) src(%362 : memref<1x128xf32, #tpu.memory_space<any>>) dst(%364 : memref<1x128xf32, #tpu.memory_space<vmem>>)
    %c0_i32_364 = arith.constant 0 : i32
    %c0_i32_365 = arith.constant 0 : i32
    %c4_i32_366 = arith.constant 4 : i32
    %c0_i32_367 = arith.constant 0 : i32
    %c0_i32_368 = arith.constant 0 : i32
    %367 = tpu.memref_slice %arg2[%c0_i32_367, %c0_i32_368] : memref<16384x128xf32, #tpu.memory_space<any>> -> memref<1x128xf32, #tpu.memory_space<any>>
    %c4_i32_369 = arith.constant 4 : i32
    %c0_i32_370 = arith.constant 0 : i32
    %368 = tpu.memref_slice %arg4[%c0_i32_364, %c4_i32_369, %c0_i32_370] : memref<2x8x128xf32, #tpu.memory_space<vmem>> -> memref<1x1x128xf32, #tpu.memory_space<vmem>>
    %369 = tpu.memref_squeeze %368 : memref<1x1x128xf32, #tpu.memory_space<vmem>> -> memref<1x128xf32, #tpu.memory_space<vmem>>
    %370 = tpu.memref_slice %arg5[%c0_i32_365, %c4_i32_366] : memref<2x8x!tpu.dma_semaphore, #tpu.memory_space<semaphore_mem>> -> memref<1x1x!tpu.dma_semaphore, #tpu.memory_space<semaphore_mem>>
    %371 = tpu.memref_squeeze %370 : memref<1x1x!tpu.dma_semaphore, #tpu.memory_space<semaphore_mem>> -> memref<!tpu.dma_semaphore, #tpu.memory_space<semaphore_mem>>
    tpu.wait_dma2 semaphore(%371 : memref<!tpu.dma_semaphore, #tpu.memory_space<semaphore_mem>>) src(%367 : memref<1x128xf32, #tpu.memory_space<any>>) dst(%369 : memref<1x128xf32, #tpu.memory_space<vmem>>)
    %c0_i32_371 = arith.constant 0 : i32
    %c0_i32_372 = arith.constant 0 : i32
    %c5_i32_373 = arith.constant 5 : i32
    %c0_i32_374 = arith.constant 0 : i32
    %c0_i32_375 = arith.constant 0 : i32
    %372 = tpu.memref_slice %arg2[%c0_i32_374, %c0_i32_375] : memref<16384x128xf32, #tpu.memory_space<any>> -> memref<1x128xf32, #tpu.memory_space<any>>
    %c5_i32_376 = arith.constant 5 : i32
    %c0_i32_377 = arith.constant 0 : i32
    %373 = tpu.memref_slice %arg4[%c0_i32_371, %c5_i32_376, %c0_i32_377] : memref<2x8x128xf32, #tpu.memory_space<vmem>> -> memref<1x1x128xf32, #tpu.memory_space<vmem>>
    %374 = tpu.memref_squeeze %373 : memref<1x1x128xf32, #tpu.memory_space<vmem>> -> memref<1x128xf32, #tpu.memory_space<vmem>>
    %375 = tpu.memref_slice %arg5[%c0_i32_372, %c5_i32_373] : memref<2x8x!tpu.dma_semaphore, #tpu.memory_space<semaphore_mem>> -> memref<1x1x!tpu.dma_semaphore, #tpu.memory_space<semaphore_mem>>
    %376 = tpu.memref_squeeze %375 : memref<1x1x!tpu.dma_semaphore, #tpu.memory_space<semaphore_mem>> -> memref<!tpu.dma_semaphore, #tpu.memory_space<semaphore_mem>>
    tpu.wait_dma2 semaphore(%376 : memref<!tpu.dma_semaphore, #tpu.memory_space<semaphore_mem>>) src(%372 : memref<1x128xf32, #tpu.memory_space<any>>) dst(%374 : memref<1x128xf32, #tpu.memory_space<vmem>>)
    %c0_i32_378 = arith.constant 0 : i32
    %c0_i32_379 = arith.constant 0 : i32
    %c6_i32_380 = arith.constant 6 : i32
    %c0_i32_381 = arith.constant 0 : i32
    %c0_i32_382 = arith.constant 0 : i32
    %377 = tpu.memref_slice %arg2[%c0_i32_381, %c0_i32_382] : memref<16384x128xf32, #tpu.memory_space<any>> -> memref<1x128xf32, #tpu.memory_space<any>>
    %c6_i32_383 = arith.constant 6 : i32
    %c0_i32_384 = arith.constant 0 : i32
    %378 = tpu.memref_slice %arg4[%c0_i32_378, %c6_i32_383, %c0_i32_384] : memref<2x8x128xf32, #tpu.memory_space<vmem>> -> memref<1x1x128xf32, #tpu.memory_space<vmem>>
    %379 = tpu.memref_squeeze %378 : memref<1x1x128xf32, #tpu.memory_space<vmem>> -> memref<1x128xf32, #tpu.memory_space<vmem>>
    %380 = tpu.memref_slice %arg5[%c0_i32_379, %c6_i32_380] : memref<2x8x!tpu.dma_semaphore, #tpu.memory_space<semaphore_mem>> -> memref<1x1x!tpu.dma_semaphore, #tpu.memory_space<semaphore_mem>>
    %381 = tpu.memref_squeeze %380 : memref<1x1x!tpu.dma_semaphore, #tpu.memory_space<semaphore_mem>> -> memref<!tpu.dma_semaphore, #tpu.memory_space<semaphore_mem>>
    tpu.wait_dma2 semaphore(%381 : memref<!tpu.dma_semaphore, #tpu.memory_space<semaphore_mem>>) src(%377 : memref<1x128xf32, #tpu.memory_space<any>>) dst(%379 : memref<1x128xf32, #tpu.memory_space<vmem>>)
    %c0_i32_385 = arith.constant 0 : i32
    %c0_i32_386 = arith.constant 0 : i32
    %c7_i32_387 = arith.constant 7 : i32
    %c0_i32_388 = arith.constant 0 : i32
    %c0_i32_389 = arith.constant 0 : i32
    %382 = tpu.memref_slice %arg2[%c0_i32_388, %c0_i32_389] : memref<16384x128xf32, #tpu.memory_space<any>> -> memref<1x128xf32, #tpu.memory_space<any>>
    %c7_i32_390 = arith.constant 7 : i32
    %c0_i32_391 = arith.constant 0 : i32
    %383 = tpu.memref_slice %arg4[%c0_i32_385, %c7_i32_390, %c0_i32_391] : memref<2x8x128xf32, #tpu.memory_space<vmem>> -> memref<1x1x128xf32, #tpu.memory_space<vmem>>
    %384 = tpu.memref_squeeze %383 : memref<1x1x128xf32, #tpu.memory_space<vmem>> -> memref<1x128xf32, #tpu.memory_space<vmem>>
    %385 = tpu.memref_slice %arg5[%c0_i32_386, %c7_i32_387] : memref<2x8x!tpu.dma_semaphore, #tpu.memory_space<semaphore_mem>> -> memref<1x1x!tpu.dma_semaphore, #tpu.memory_space<semaphore_mem>>
    %386 = tpu.memref_squeeze %385 : memref<1x1x!tpu.dma_semaphore, #tpu.memory_space<semaphore_mem>> -> memref<!tpu.dma_semaphore, #tpu.memory_space<semaphore_mem>>
    tpu.wait_dma2 semaphore(%386 : memref<!tpu.dma_semaphore, #tpu.memory_space<semaphore_mem>>) src(%382 : memref<1x128xf32, #tpu.memory_space<any>>) dst(%384 : memref<1x128xf32, #tpu.memory_space<vmem>>)
    %c0_392 = arith.constant 0 : index
    %c0_393 = arith.constant 0 : index
    %c0_394 = arith.constant 0 : index
    %387 = vector.load %arg4[%c0_392, %c0_393, %c0_394] : memref<2x8x128xf32, #tpu.memory_space<vmem>>, vector<1x8x128xf32>
    %388 = vector.shape_cast %387 : vector<1x8x128xf32> to vector<8x128xf32>
    %c16 = arith.constant 16 : index
    %c0_395 = arith.constant 0 : index
    %389 = vector.load %arg3[%c16, %c0_395] : memref<64x128xf32, #tpu.memory_space<vmem>>, vector<8x128xf32>
    tpu.vector_store %arg3[%c16, %c0_395], %388 {strides = array<i32>} : memref<64x128xf32, #tpu.memory_space<vmem>>, vector<8x128xf32>,
    %c32_i32 = arith.constant 32 : i32
    %390 = arith.addi %0, %c32_i32 : i32
    %c0_i32_396 = arith.constant 0 : i32
    %391 = arith.addi %390, %c0_i32_396 : i32
    %392 = arith.index_cast %391 : i32 to index
    %393 = memref.load %arg1[%392] : memref<64xi32, #tpu.memory_space<smem>>
    %c0_i32_397 = arith.constant 0 : i32
    %c0_i32_398 = arith.constant 0 : i32
    %c0_i32_399 = arith.constant 0 : i32
    %c0_i32_400 = arith.constant 0 : i32
    %394 = tpu.memref_slice %arg2[%393, %c0_i32_400] : memref<16384x128xf32, #tpu.memory_space<any>> -> memref<1x128xf32, #tpu.memory_space<any>>
    %c0_i32_401 = arith.constant 0 : i32
    %c0_i32_402 = arith.constant 0 : i32
    %395 = tpu.memref_slice %arg4[%c0_i32_397, %c0_i32_401, %c0_i32_402] : memref<2x8x128xf32, #tpu.memory_space<vmem>> -> memref<1x1x128xf32, #tpu.memory_space<vmem>>
    %396 = tpu.memref_squeeze %395 : memref<1x1x128xf32, #tpu.memory_space<vmem>> -> memref<1x128xf32, #tpu.memory_space<vmem>>
    %397 = tpu.memref_slice %arg5[%c0_i32_398, %c0_i32_399] : memref<2x8x!tpu.dma_semaphore, #tpu.memory_space<semaphore_mem>> -> memref<1x1x!tpu.dma_semaphore, #tpu.memory_space<semaphore_mem>>
    %398 = tpu.memref_squeeze %397 : memref<1x1x!tpu.dma_semaphore, #tpu.memory_space<semaphore_mem>> -> memref<!tpu.dma_semaphore, #tpu.memory_space<semaphore_mem>>
    tpu.enqueue_dma source(%394 : memref<1x128xf32, #tpu.memory_space<any>>) target(%396 : memref<1x128xf32, #tpu.memory_space<vmem>>) target_semaphore(%398 : memref<!tpu.dma_semaphore, #tpu.memory_space<semaphore_mem>>)
    %c1_i32_403 = arith.constant 1 : i32
    %399 = arith.addi %390, %c1_i32_403 : i32
    %400 = arith.index_cast %399 : i32 to index
    %401 = memref.load %arg1[%400] : memref<64xi32, #tpu.memory_space<smem>>
    %c0_i32_404 = arith.constant 0 : i32
    %c0_i32_405 = arith.constant 0 : i32
    %c1_i32_406 = arith.constant 1 : i32
    %c0_i32_407 = arith.constant 0 : i32
    %402 = tpu.memref_slice %arg2[%401, %c0_i32_407] : memref<16384x128xf32, #tpu.memory_space<any>> -> memref<1x128xf32, #tpu.memory_space<any>>
    %c1_i32_408 = arith.constant 1 : i32
    %c0_i32_409 = arith.constant 0 : i32
    %403 = tpu.memref_slice %arg4[%c0_i32_404, %c1_i32_408, %c0_i32_409] : memref<2x8x128xf32, #tpu.memory_space<vmem>> -> memref<1x1x128xf32, #tpu.memory_space<vmem>>
    %404 = tpu.memref_squeeze %403 : memref<1x1x128xf32, #tpu.memory_space<vmem>> -> memref<1x128xf32, #tpu.memory_space<vmem>>
    %405 = tpu.memref_slice %arg5[%c0_i32_405, %c1_i32_406] : memref<2x8x!tpu.dma_semaphore, #tpu.memory_space<semaphore_mem>> -> memref<1x1x!tpu.dma_semaphore, #tpu.memory_space<semaphore_mem>>
    %406 = tpu.memref_squeeze %405 : memref<1x1x!tpu.dma_semaphore, #tpu.memory_space<semaphore_mem>> -> memref<!tpu.dma_semaphore, #tpu.memory_space<semaphore_mem>>
    tpu.enqueue_dma source(%402 : memref<1x128xf32, #tpu.memory_space<any>>) target(%404 : memref<1x128xf32, #tpu.memory_space<vmem>>) target_semaphore(%406 : memref<!tpu.dma_semaphore, #tpu.memory_space<semaphore_mem>>)
    %c2_i32_410 = arith.constant 2 : i32
    %407 = arith.addi %390, %c2_i32_410 : i32
    %408 = arith.index_cast %407 : i32 to index
    %409 = memref.load %arg1[%408] : memref<64xi32, #tpu.memory_space<smem>>
    %c0_i32_411 = arith.constant 0 : i32
    %c0_i32_412 = arith.constant 0 : i32
    %c2_i32_413 = arith.constant 2 : i32
    %c0_i32_414 = arith.constant 0 : i32
    %410 = tpu.memref_slice %arg2[%409, %c0_i32_414] : memref<16384x128xf32, #tpu.memory_space<any>> -> memref<1x128xf32, #tpu.memory_space<any>>
    %c2_i32_415 = arith.constant 2 : i32
    %c0_i32_416 = arith.constant 0 : i32
    %411 = tpu.memref_slice %arg4[%c0_i32_411, %c2_i32_415, %c0_i32_416] : memref<2x8x128xf32, #tpu.memory_space<vmem>> -> memref<1x1x128xf32, #tpu.memory_space<vmem>>
    %412 = tpu.memref_squeeze %411 : memref<1x1x128xf32, #tpu.memory_space<vmem>> -> memref<1x128xf32, #tpu.memory_space<vmem>>
    %413 = tpu.memref_slice %arg5[%c0_i32_412, %c2_i32_413] : memref<2x8x!tpu.dma_semaphore, #tpu.memory_space<semaphore_mem>> -> memref<1x1x!tpu.dma_semaphore, #tpu.memory_space<semaphore_mem>>
    %414 = tpu.memref_squeeze %413 : memref<1x1x!tpu.dma_semaphore, #tpu.memory_space<semaphore_mem>> -> memref<!tpu.dma_semaphore, #tpu.memory_space<semaphore_mem>>
    tpu.enqueue_dma source(%410 : memref<1x128xf32, #tpu.memory_space<any>>) target(%412 : memref<1x128xf32, #tpu.memory_space<vmem>>) target_semaphore(%414 : memref<!tpu.dma_semaphore, #tpu.memory_space<semaphore_mem>>)
    %c3_i32_417 = arith.constant 3 : i32
    %415 = arith.addi %390, %c3_i32_417 : i32
    %416 = arith.index_cast %415 : i32 to index
    %417 = memref.load %arg1[%416] : memref<64xi32, #tpu.memory_space<smem>>
    %c0_i32_418 = arith.constant 0 : i32
    %c0_i32_419 = arith.constant 0 : i32
    %c3_i32_420 = arith.constant 3 : i32
    %c0_i32_421 = arith.constant 0 : i32
    %418 = tpu.memref_slice %arg2[%417, %c0_i32_421] : memref<16384x128xf32, #tpu.memory_space<any>> -> memref<1x128xf32, #tpu.memory_space<any>>
    %c3_i32_422 = arith.constant 3 : i32
    %c0_i32_423 = arith.constant 0 : i32
    %419 = tpu.memref_slice %arg4[%c0_i32_418, %c3_i32_422, %c0_i32_423] : memref<2x8x128xf32, #tpu.memory_space<vmem>> -> memref<1x1x128xf32, #tpu.memory_space<vmem>>
    %420 = tpu.memref_squeeze %419 : memref<1x1x128xf32, #tpu.memory_space<vmem>> -> memref<1x128xf32, #tpu.memory_space<vmem>>
    %421 = tpu.memref_slice %arg5[%c0_i32_419, %c3_i32_420] : memref<2x8x!tpu.dma_semaphore, #tpu.memory_space<semaphore_mem>> -> memref<1x1x!tpu.dma_semaphore, #tpu.memory_space<semaphore_mem>>
    %422 = tpu.memref_squeeze %421 : memref<1x1x!tpu.dma_semaphore, #tpu.memory_space<semaphore_mem>> -> memref<!tpu.dma_semaphore, #tpu.memory_space<semaphore_mem>>
    tpu.enqueue_dma source(%418 : memref<1x128xf32, #tpu.memory_space<any>>) target(%420 : memref<1x128xf32, #tpu.memory_space<vmem>>) target_semaphore(%422 : memref<!tpu.dma_semaphore, #tpu.memory_space<semaphore_mem>>)
    %c4_i32_424 = arith.constant 4 : i32
    %423 = arith.addi %390, %c4_i32_424 : i32
    %424 = arith.index_cast %423 : i32 to index
    %425 = memref.load %arg1[%424] : memref<64xi32, #tpu.memory_space<smem>>
    %c0_i32_425 = arith.constant 0 : i32
    %c0_i32_426 = arith.constant 0 : i32
    %c4_i32_427 = arith.constant 4 : i32
    %c0_i32_428 = arith.constant 0 : i32
    %426 = tpu.memref_slice %arg2[%425, %c0_i32_428] : memref<16384x128xf32, #tpu.memory_space<any>> -> memref<1x128xf32, #tpu.memory_space<any>>
    %c4_i32_429 = arith.constant 4 : i32
    %c0_i32_430 = arith.constant 0 : i32
    %427 = tpu.memref_slice %arg4[%c0_i32_425, %c4_i32_429, %c0_i32_430] : memref<2x8x128xf32, #tpu.memory_space<vmem>> -> memref<1x1x128xf32, #tpu.memory_space<vmem>>
    %428 = tpu.memref_squeeze %427 : memref<1x1x128xf32, #tpu.memory_space<vmem>> -> memref<1x128xf32, #tpu.memory_space<vmem>>
    %429 = tpu.memref_slice %arg5[%c0_i32_426, %c4_i32_427] : memref<2x8x!tpu.dma_semaphore, #tpu.memory_space<semaphore_mem>> -> memref<1x1x!tpu.dma_semaphore, #tpu.memory_space<semaphore_mem>>
    %430 = tpu.memref_squeeze %429 : memref<1x1x!tpu.dma_semaphore, #tpu.memory_space<semaphore_mem>> -> memref<!tpu.dma_semaphore, #tpu.memory_space<semaphore_mem>>
    tpu.enqueue_dma source(%426 : memref<1x128xf32, #tpu.memory_space<any>>) target(%428 : memref<1x128xf32, #tpu.memory_space<vmem>>) target_semaphore(%430 : memref<!tpu.dma_semaphore, #tpu.memory_space<semaphore_mem>>)
    %c5_i32_431 = arith.constant 5 : i32
    %431 = arith.addi %390, %c5_i32_431 : i32
    %432 = arith.index_cast %431 : i32 to index
    %433 = memref.load %arg1[%432] : memref<64xi32, #tpu.memory_space<smem>>
    %c0_i32_432 = arith.constant 0 : i32
    %c0_i32_433 = arith.constant 0 : i32
    %c5_i32_434 = arith.constant 5 : i32
    %c0_i32_435 = arith.constant 0 : i32
    %434 = tpu.memref_slice %arg2[%433, %c0_i32_435] : memref<16384x128xf32, #tpu.memory_space<any>> -> memref<1x128xf32, #tpu.memory_space<any>>
    %c5_i32_436 = arith.constant 5 : i32
    %c0_i32_437 = arith.constant 0 : i32
    %435 = tpu.memref_slice %arg4[%c0_i32_432, %c5_i32_436, %c0_i32_437] : memref<2x8x128xf32, #tpu.memory_space<vmem>> -> memref<1x1x128xf32, #tpu.memory_space<vmem>>
    %436 = tpu.memref_squeeze %435 : memref<1x1x128xf32, #tpu.memory_space<vmem>> -> memref<1x128xf32, #tpu.memory_space<vmem>>
    %437 = tpu.memref_slice %arg5[%c0_i32_433, %c5_i32_434] : memref<2x8x!tpu.dma_semaphore, #tpu.memory_space<semaphore_mem>> -> memref<1x1x!tpu.dma_semaphore, #tpu.memory_space<semaphore_mem>>
    %438 = tpu.memref_squeeze %437 : memref<1x1x!tpu.dma_semaphore, #tpu.memory_space<semaphore_mem>> -> memref<!tpu.dma_semaphore, #tpu.memory_space<semaphore_mem>>
    tpu.enqueue_dma source(%434 : memref<1x128xf32, #tpu.memory_space<any>>) target(%436 : memref<1x128xf32, #tpu.memory_space<vmem>>) target_semaphore(%438 : memref<!tpu.dma_semaphore, #tpu.memory_space<semaphore_mem>>)
    %c6_i32_438 = arith.constant 6 : i32
    %439 = arith.addi %390, %c6_i32_438 : i32
    %440 = arith.index_cast %439 : i32 to index
    %441 = memref.load %arg1[%440] : memref<64xi32, #tpu.memory_space<smem>>
    %c0_i32_439 = arith.constant 0 : i32
    %c0_i32_440 = arith.constant 0 : i32
    %c6_i32_441 = arith.constant 6 : i32
    %c0_i32_442 = arith.constant 0 : i32
    %442 = tpu.memref_slice %arg2[%441, %c0_i32_442] : memref<16384x128xf32, #tpu.memory_space<any>> -> memref<1x128xf32, #tpu.memory_space<any>>
    %c6_i32_443 = arith.constant 6 : i32
    %c0_i32_444 = arith.constant 0 : i32
    %443 = tpu.memref_slice %arg4[%c0_i32_439, %c6_i32_443, %c0_i32_444] : memref<2x8x128xf32, #tpu.memory_space<vmem>> -> memref<1x1x128xf32, #tpu.memory_space<vmem>>
    %444 = tpu.memref_squeeze %443 : memref<1x1x128xf32, #tpu.memory_space<vmem>> -> memref<1x128xf32, #tpu.memory_space<vmem>>
    %445 = tpu.memref_slice %arg5[%c0_i32_440, %c6_i32_441] : memref<2x8x!tpu.dma_semaphore, #tpu.memory_space<semaphore_mem>> -> memref<1x1x!tpu.dma_semaphore, #tpu.memory_space<semaphore_mem>>
    %446 = tpu.memref_squeeze %445 : memref<1x1x!tpu.dma_semaphore, #tpu.memory_space<semaphore_mem>> -> memref<!tpu.dma_semaphore, #tpu.memory_space<semaphore_mem>>
    tpu.enqueue_dma source(%442 : memref<1x128xf32, #tpu.memory_space<any>>) target(%444 : memref<1x128xf32, #tpu.memory_space<vmem>>) target_semaphore(%446 : memref<!tpu.dma_semaphore, #tpu.memory_space<semaphore_mem>>)
    %c7_i32_445 = arith.constant 7 : i32
    %447 = arith.addi %390, %c7_i32_445 : i32
    %448 = arith.index_cast %447 : i32 to index
    %449 = memref.load %arg1[%448] : memref<64xi32, #tpu.memory_space<smem>>
    %c0_i32_446 = arith.constant 0 : i32
    %c0_i32_447 = arith.constant 0 : i32
    %c7_i32_448 = arith.constant 7 : i32
    %c0_i32_449 = arith.constant 0 : i32
    %450 = tpu.memref_slice %arg2[%449, %c0_i32_449] : memref<16384x128xf32, #tpu.memory_space<any>> -> memref<1x128xf32, #tpu.memory_space<any>>
    %c7_i32_450 = arith.constant 7 : i32
    %c0_i32_451 = arith.constant 0 : i32
    %451 = tpu.memref_slice %arg4[%c0_i32_446, %c7_i32_450, %c0_i32_451] : memref<2x8x128xf32, #tpu.memory_space<vmem>> -> memref<1x1x128xf32, #tpu.memory_space<vmem>>
    %452 = tpu.memref_squeeze %451 : memref<1x1x128xf32, #tpu.memory_space<vmem>> -> memref<1x128xf32, #tpu.memory_space<vmem>>
    %453 = tpu.memref_slice %arg5[%c0_i32_447, %c7_i32_448] : memref<2x8x!tpu.dma_semaphore, #tpu.memory_space<semaphore_mem>> -> memref<1x1x!tpu.dma_semaphore, #tpu.memory_space<semaphore_mem>>
    %454 = tpu.memref_squeeze %453 : memref<1x1x!tpu.dma_semaphore, #tpu.memory_space<semaphore_mem>> -> memref<!tpu.dma_semaphore, #tpu.memory_space<semaphore_mem>>
    tpu.enqueue_dma source(%450 : memref<1x128xf32, #tpu.memory_space<any>>) target(%452 : memref<1x128xf32, #tpu.memory_space<vmem>>) target_semaphore(%454 : memref<!tpu.dma_semaphore, #tpu.memory_space<semaphore_mem>>)
    %c1_i32_452 = arith.constant 1 : i32
    %c1_i32_453 = arith.constant 1 : i32
    %c0_i32_454 = arith.constant 0 : i32
    %c0_i32_455 = arith.constant 0 : i32
    %c0_i32_456 = arith.constant 0 : i32
    %455 = tpu.memref_slice %arg2[%c0_i32_455, %c0_i32_456] : memref<16384x128xf32, #tpu.memory_space<any>> -> memref<1x128xf32, #tpu.memory_space<any>>
    %c0_i32_457 = arith.constant 0 : i32
    %c0_i32_458 = arith.constant 0 : i32
    %456 = tpu.memref_slice %arg4[%c1_i32_452, %c0_i32_457, %c0_i32_458] : memref<2x8x128xf32, #tpu.memory_space<vmem>> -> memref<1x1x128xf32, #tpu.memory_space<vmem>>
    %457 = tpu.memref_squeeze %456 : memref<1x1x128xf32, #tpu.memory_space<vmem>> -> memref<1x128xf32, #tpu.memory_space<vmem>>
    %458 = tpu.memref_slice %arg5[%c1_i32_453, %c0_i32_454] : memref<2x8x!tpu.dma_semaphore, #tpu.memory_space<semaphore_mem>> -> memref<1x1x!tpu.dma_semaphore, #tpu.memory_space<semaphore_mem>>
    %459 = tpu.memref_squeeze %458 : memref<1x1x!tpu.dma_semaphore, #tpu.memory_space<semaphore_mem>> -> memref<!tpu.dma_semaphore, #tpu.memory_space<semaphore_mem>>
    tpu.wait_dma2 semaphore(%459 : memref<!tpu.dma_semaphore, #tpu.memory_space<semaphore_mem>>) src(%455 : memref<1x128xf32, #tpu.memory_space<any>>) dst(%457 : memref<1x128xf32, #tpu.memory_space<vmem>>)
    %c1_i32_459 = arith.constant 1 : i32
    %c1_i32_460 = arith.constant 1 : i32
    %c1_i32_461 = arith.constant 1 : i32
    %c0_i32_462 = arith.constant 0 : i32
    %c0_i32_463 = arith.constant 0 : i32
    %460 = tpu.memref_slice %arg2[%c0_i32_462, %c0_i32_463] : memref<16384x128xf32, #tpu.memory_space<any>> -> memref<1x128xf32, #tpu.memory_space<any>>
    %c1_i32_464 = arith.constant 1 : i32
    %c0_i32_465 = arith.constant 0 : i32
    %461 = tpu.memref_slice %arg4[%c1_i32_459, %c1_i32_464, %c0_i32_465] : memref<2x8x128xf32, #tpu.memory_space<vmem>> -> memref<1x1x128xf32, #tpu.memory_space<vmem>>
    %462 = tpu.memref_squeeze %461 : memref<1x1x128xf32, #tpu.memory_space<vmem>> -> memref<1x128xf32, #tpu.memory_space<vmem>>
    %463 = tpu.memref_slice %arg5[%c1_i32_460, %c1_i32_461] : memref<2x8x!tpu.dma_semaphore, #tpu.memory_space<semaphore_mem>> -> memref<1x1x!tpu.dma_semaphore, #tpu.memory_space<semaphore_mem>>
    %464 = tpu.memref_squeeze %463 : memref<1x1x!tpu.dma_semaphore, #tpu.memory_space<semaphore_mem>> -> memref<!tpu.dma_semaphore, #tpu.memory_space<semaphore_mem>>
    tpu.wait_dma2 semaphore(%464 : memref<!tpu.dma_semaphore, #tpu.memory_space<semaphore_mem>>) src(%460 : memref<1x128xf32, #tpu.memory_space<any>>) dst(%462 : memref<1x128xf32, #tpu.memory_space<vmem>>)
    %c1_i32_466 = arith.constant 1 : i32
    %c1_i32_467 = arith.constant 1 : i32
    %c2_i32_468 = arith.constant 2 : i32
    %c0_i32_469 = arith.constant 0 : i32
    %c0_i32_470 = arith.constant 0 : i32
    %465 = tpu.memref_slice %arg2[%c0_i32_469, %c0_i32_470] : memref<16384x128xf32, #tpu.memory_space<any>> -> memref<1x128xf32, #tpu.memory_space<any>>
    %c2_i32_471 = arith.constant 2 : i32
    %c0_i32_472 = arith.constant 0 : i32
    %466 = tpu.memref_slice %arg4[%c1_i32_466, %c2_i32_471, %c0_i32_472] : memref<2x8x128xf32, #tpu.memory_space<vmem>> -> memref<1x1x128xf32, #tpu.memory_space<vmem>>
    %467 = tpu.memref_squeeze %466 : memref<1x1x128xf32, #tpu.memory_space<vmem>> -> memref<1x128xf32, #tpu.memory_space<vmem>>
    %468 = tpu.memref_slice %arg5[%c1_i32_467, %c2_i32_468] : memref<2x8x!tpu.dma_semaphore, #tpu.memory_space<semaphore_mem>> -> memref<1x1x!tpu.dma_semaphore, #tpu.memory_space<semaphore_mem>>
    %469 = tpu.memref_squeeze %468 : memref<1x1x!tpu.dma_semaphore, #tpu.memory_space<semaphore_mem>> -> memref<!tpu.dma_semaphore, #tpu.memory_space<semaphore_mem>>
    tpu.wait_dma2 semaphore(%469 : memref<!tpu.dma_semaphore, #tpu.memory_space<semaphore_mem>>) src(%465 : memref<1x128xf32, #tpu.memory_space<any>>) dst(%467 : memref<1x128xf32, #tpu.memory_space<vmem>>)
    %c1_i32_473 = arith.constant 1 : i32
    %c1_i32_474 = arith.constant 1 : i32
    %c3_i32_475 = arith.constant 3 : i32
    %c0_i32_476 = arith.constant 0 : i32
    %c0_i32_477 = arith.constant 0 : i32
    %470 = tpu.memref_slice %arg2[%c0_i32_476, %c0_i32_477] : memref<16384x128xf32, #tpu.memory_space<any>> -> memref<1x128xf32, #tpu.memory_space<any>>
    %c3_i32_478 = arith.constant 3 : i32
    %c0_i32_479 = arith.constant 0 : i32
    %471 = tpu.memref_slice %arg4[%c1_i32_473, %c3_i32_478, %c0_i32_479] : memref<2x8x128xf32, #tpu.memory_space<vmem>> -> memref<1x1x128xf32, #tpu.memory_space<vmem>>
    %472 = tpu.memref_squeeze %471 : memref<1x1x128xf32, #tpu.memory_space<vmem>> -> memref<1x128xf32, #tpu.memory_space<vmem>>
    %473 = tpu.memref_slice %arg5[%c1_i32_474, %c3_i32_475] : memref<2x8x!tpu.dma_semaphore, #tpu.memory_space<semaphore_mem>> -> memref<1x1x!tpu.dma_semaphore, #tpu.memory_space<semaphore_mem>>
    %474 = tpu.memref_squeeze %473 : memref<1x1x!tpu.dma_semaphore, #tpu.memory_space<semaphore_mem>> -> memref<!tpu.dma_semaphore, #tpu.memory_space<semaphore_mem>>
    tpu.wait_dma2 semaphore(%474 : memref<!tpu.dma_semaphore, #tpu.memory_space<semaphore_mem>>) src(%470 : memref<1x128xf32, #tpu.memory_space<any>>) dst(%472 : memref<1x128xf32, #tpu.memory_space<vmem>>)
    %c1_i32_480 = arith.constant 1 : i32
    %c1_i32_481 = arith.constant 1 : i32
    %c4_i32_482 = arith.constant 4 : i32
    %c0_i32_483 = arith.constant 0 : i32
    %c0_i32_484 = arith.constant 0 : i32
    %475 = tpu.memref_slice %arg2[%c0_i32_483, %c0_i32_484] : memref<16384x128xf32, #tpu.memory_space<any>> -> memref<1x128xf32, #tpu.memory_space<any>>
    %c4_i32_485 = arith.constant 4 : i32
    %c0_i32_486 = arith.constant 0 : i32
    %476 = tpu.memref_slice %arg4[%c1_i32_480, %c4_i32_485, %c0_i32_486] : memref<2x8x128xf32, #tpu.memory_space<vmem>> -> memref<1x1x128xf32, #tpu.memory_space<vmem>>
    %477 = tpu.memref_squeeze %476 : memref<1x1x128xf32, #tpu.memory_space<vmem>> -> memref<1x128xf32, #tpu.memory_space<vmem>>
    %478 = tpu.memref_slice %arg5[%c1_i32_481, %c4_i32_482] : memref<2x8x!tpu.dma_semaphore, #tpu.memory_space<semaphore_mem>> -> memref<1x1x!tpu.dma_semaphore, #tpu.memory_space<semaphore_mem>>
    %479 = tpu.memref_squeeze %478 : memref<1x1x!tpu.dma_semaphore, #tpu.memory_space<semaphore_mem>> -> memref<!tpu.dma_semaphore, #tpu.memory_space<semaphore_mem>>
    tpu.wait_dma2 semaphore(%479 : memref<!tpu.dma_semaphore, #tpu.memory_space<semaphore_mem>>) src(%475 : memref<1x128xf32, #tpu.memory_space<any>>) dst(%477 : memref<1x128xf32, #tpu.memory_space<vmem>>)
    %c1_i32_487 = arith.constant 1 : i32
    %c1_i32_488 = arith.constant 1 : i32
    %c5_i32_489 = arith.constant 5 : i32
    %c0_i32_490 = arith.constant 0 : i32
    %c0_i32_491 = arith.constant 0 : i32
    %480 = tpu.memref_slice %arg2[%c0_i32_490, %c0_i32_491] : memref<16384x128xf32, #tpu.memory_space<any>> -> memref<1x128xf32, #tpu.memory_space<any>>
    %c5_i32_492 = arith.constant 5 : i32
    %c0_i32_493 = arith.constant 0 : i32
    %481 = tpu.memref_slice %arg4[%c1_i32_487, %c5_i32_492, %c0_i32_493] : memref<2x8x128xf32, #tpu.memory_space<vmem>> -> memref<1x1x128xf32, #tpu.memory_space<vmem>>
    %482 = tpu.memref_squeeze %481 : memref<1x1x128xf32, #tpu.memory_space<vmem>> -> memref<1x128xf32, #tpu.memory_space<vmem>>
    %483 = tpu.memref_slice %arg5[%c1_i32_488, %c5_i32_489] : memref<2x8x!tpu.dma_semaphore, #tpu.memory_space<semaphore_mem>> -> memref<1x1x!tpu.dma_semaphore, #tpu.memory_space<semaphore_mem>>
    %484 = tpu.memref_squeeze %483 : memref<1x1x!tpu.dma_semaphore, #tpu.memory_space<semaphore_mem>> -> memref<!tpu.dma_semaphore, #tpu.memory_space<semaphore_mem>>
    tpu.wait_dma2 semaphore(%484 : memref<!tpu.dma_semaphore, #tpu.memory_space<semaphore_mem>>) src(%480 : memref<1x128xf32, #tpu.memory_space<any>>) dst(%482 : memref<1x128xf32, #tpu.memory_space<vmem>>)
    %c1_i32_494 = arith.constant 1 : i32
    %c1_i32_495 = arith.constant 1 : i32
    %c6_i32_496 = arith.constant 6 : i32
    %c0_i32_497 = arith.constant 0 : i32
    %c0_i32_498 = arith.constant 0 : i32
    %485 = tpu.memref_slice %arg2[%c0_i32_497, %c0_i32_498] : memref<16384x128xf32, #tpu.memory_space<any>> -> memref<1x128xf32, #tpu.memory_space<any>>
    %c6_i32_499 = arith.constant 6 : i32
    %c0_i32_500 = arith.constant 0 : i32
    %486 = tpu.memref_slice %arg4[%c1_i32_494, %c6_i32_499, %c0_i32_500] : memref<2x8x128xf32, #tpu.memory_space<vmem>> -> memref<1x1x128xf32, #tpu.memory_space<vmem>>
    %487 = tpu.memref_squeeze %486 : memref<1x1x128xf32, #tpu.memory_space<vmem>> -> memref<1x128xf32, #tpu.memory_space<vmem>>
    %488 = tpu.memref_slice %arg5[%c1_i32_495, %c6_i32_496] : memref<2x8x!tpu.dma_semaphore, #tpu.memory_space<semaphore_mem>> -> memref<1x1x!tpu.dma_semaphore, #tpu.memory_space<semaphore_mem>>
    %489 = tpu.memref_squeeze %488 : memref<1x1x!tpu.dma_semaphore, #tpu.memory_space<semaphore_mem>> -> memref<!tpu.dma_semaphore, #tpu.memory_space<semaphore_mem>>
    tpu.wait_dma2 semaphore(%489 : memref<!tpu.dma_semaphore, #tpu.memory_space<semaphore_mem>>) src(%485 : memref<1x128xf32, #tpu.memory_space<any>>) dst(%487 : memref<1x128xf32, #tpu.memory_space<vmem>>)
    %c1_i32_501 = arith.constant 1 : i32
    %c1_i32_502 = arith.constant 1 : i32
    %c7_i32_503 = arith.constant 7 : i32
    %c0_i32_504 = arith.constant 0 : i32
    %c0_i32_505 = arith.constant 0 : i32
    %490 = tpu.memref_slice %arg2[%c0_i32_504, %c0_i32_505] : memref<16384x128xf32, #tpu.memory_space<any>> -> memref<1x128xf32, #tpu.memory_space<any>>
    %c7_i32_506 = arith.constant 7 : i32
    %c0_i32_507 = arith.constant 0 : i32
    %491 = tpu.memref_slice %arg4[%c1_i32_501, %c7_i32_506, %c0_i32_507] : memref<2x8x128xf32, #tpu.memory_space<vmem>> -> memref<1x1x128xf32, #tpu.memory_space<vmem>>
    %492 = tpu.memref_squeeze %491 : memref<1x1x128xf32, #tpu.memory_space<vmem>> -> memref<1x128xf32, #tpu.memory_space<vmem>>
    %493 = tpu.memref_slice %arg5[%c1_i32_502, %c7_i32_503] : memref<2x8x!tpu.dma_semaphore, #tpu.memory_space<semaphore_mem>> -> memref<1x1x!tpu.dma_semaphore, #tpu.memory_space<semaphore_mem>>
    %494 = tpu.memref_squeeze %493 : memref<1x1x!tpu.dma_semaphore, #tpu.memory_space<semaphore_mem>> -> memref<!tpu.dma_semaphore, #tpu.memory_space<semaphore_mem>>
    tpu.wait_dma2 semaphore(%494 : memref<!tpu.dma_semaphore, #tpu.memory_space<semaphore_mem>>) src(%490 : memref<1x128xf32, #tpu.memory_space<any>>) dst(%492 : memref<1x128xf32, #tpu.memory_space<vmem>>)
    %c1_508 = arith.constant 1 : index
    %c0_509 = arith.constant 0 : index
    %c0_510 = arith.constant 0 : index
    %495 = vector.load %arg4[%c1_508, %c0_509, %c0_510] : memref<2x8x128xf32, #tpu.memory_space<vmem>>, vector<1x8x128xf32>
    %496 = vector.shape_cast %495 : vector<1x8x128xf32> to vector<8x128xf32>
    %c24 = arith.constant 24 : index
    %c0_511 = arith.constant 0 : index
    %497 = vector.load %arg3[%c24, %c0_511] : memref<64x128xf32, #tpu.memory_space<vmem>>, vector<8x128xf32>
    tpu.vector_store %arg3[%c24, %c0_511], %496 {strides = array<i32>} : memref<64x128xf32, #tpu.memory_space<vmem>>, vector<8x128xf32>,
    %c40_i32 = arith.constant 40 : i32
    %498 = arith.addi %0, %c40_i32 : i32
    %c0_i32_512 = arith.constant 0 : i32
    %499 = arith.addi %498, %c0_i32_512 : i32
    %500 = arith.index_cast %499 : i32 to index
    %501 = memref.load %arg1[%500] : memref<64xi32, #tpu.memory_space<smem>>
    %c1_i32_513 = arith.constant 1 : i32
    %c1_i32_514 = arith.constant 1 : i32
    %c0_i32_515 = arith.constant 0 : i32
    %c0_i32_516 = arith.constant 0 : i32
    %502 = tpu.memref_slice %arg2[%501, %c0_i32_516] : memref<16384x128xf32, #tpu.memory_space<any>> -> memref<1x128xf32, #tpu.memory_space<any>>
    %c0_i32_517 = arith.constant 0 : i32
    %c0_i32_518 = arith.constant 0 : i32
    %503 = tpu.memref_slice %arg4[%c1_i32_513, %c0_i32_517, %c0_i32_518] : memref<2x8x128xf32, #tpu.memory_space<vmem>> -> memref<1x1x128xf32, #tpu.memory_space<vmem>>
    %504 = tpu.memref_squeeze %503 : memref<1x1x128xf32, #tpu.memory_space<vmem>> -> memref<1x128xf32, #tpu.memory_space<vmem>>
    %505 = tpu.memref_slice %arg5[%c1_i32_514, %c0_i32_515] : memref<2x8x!tpu.dma_semaphore, #tpu.memory_space<semaphore_mem>> -> memref<1x1x!tpu.dma_semaphore, #tpu.memory_space<semaphore_mem>>
    %506 = tpu.memref_squeeze %505 : memref<1x1x!tpu.dma_semaphore, #tpu.memory_space<semaphore_mem>> -> memref<!tpu.dma_semaphore, #tpu.memory_space<semaphore_mem>>
    tpu.enqueue_dma source(%502 : memref<1x128xf32, #tpu.memory_space<any>>) target(%504 : memref<1x128xf32, #tpu.memory_space<vmem>>) target_semaphore(%506 : memref<!tpu.dma_semaphore, #tpu.memory_space<semaphore_mem>>)
    %c1_i32_519 = arith.constant 1 : i32
    %507 = arith.addi %498, %c1_i32_519 : i32
    %508 = arith.index_cast %507 : i32 to index
    %509 = memref.load %arg1[%508] : memref<64xi32, #tpu.memory_space<smem>>
    %c1_i32_520 = arith.constant 1 : i32
    %c1_i32_521 = arith.constant 1 : i32
    %c1_i32_522 = arith.constant 1 : i32
    %c0_i32_523 = arith.constant 0 : i32
    %510 = tpu.memref_slice %arg2[%509, %c0_i32_523] : memref<16384x128xf32, #tpu.memory_space<any>> -> memref<1x128xf32, #tpu.memory_space<any>>
    %c1_i32_524 = arith.constant 1 : i32
    %c0_i32_525 = arith.constant 0 : i32
    %511 = tpu.memref_slice %arg4[%c1_i32_520, %c1_i32_524, %c0_i32_525] : memref<2x8x128xf32, #tpu.memory_space<vmem>> -> memref<1x1x128xf32, #tpu.memory_space<vmem>>
    %512 = tpu.memref_squeeze %511 : memref<1x1x128xf32, #tpu.memory_space<vmem>> -> memref<1x128xf32, #tpu.memory_space<vmem>>
    %513 = tpu.memref_slice %arg5[%c1_i32_521, %c1_i32_522] : memref<2x8x!tpu.dma_semaphore, #tpu.memory_space<semaphore_mem>> -> memref<1x1x!tpu.dma_semaphore, #tpu.memory_space<semaphore_mem>>
    %514 = tpu.memref_squeeze %513 : memref<1x1x!tpu.dma_semaphore, #tpu.memory_space<semaphore_mem>> -> memref<!tpu.dma_semaphore, #tpu.memory_space<semaphore_mem>>
    tpu.enqueue_dma source(%510 : memref<1x128xf32, #tpu.memory_space<any>>) target(%512 : memref<1x128xf32, #tpu.memory_space<vmem>>) target_semaphore(%514 : memref<!tpu.dma_semaphore, #tpu.memory_space<semaphore_mem>>)
    %c2_i32_526 = arith.constant 2 : i32
    %515 = arith.addi %498, %c2_i32_526 : i32
    %516 = arith.index_cast %515 : i32 to index
    %517 = memref.load %arg1[%516] : memref<64xi32, #tpu.memory_space<smem>>
    %c1_i32_527 = arith.constant 1 : i32
    %c1_i32_528 = arith.constant 1 : i32
    %c2_i32_529 = arith.constant 2 : i32
    %c0_i32_530 = arith.constant 0 : i32
    %518 = tpu.memref_slice %arg2[%517, %c0_i32_530] : memref<16384x128xf32, #tpu.memory_space<any>> -> memref<1x128xf32, #tpu.memory_space<any>>
    %c2_i32_531 = arith.constant 2 : i32
    %c0_i32_532 = arith.constant 0 : i32
    %519 = tpu.memref_slice %arg4[%c1_i32_527, %c2_i32_531, %c0_i32_532] : memref<2x8x128xf32, #tpu.memory_space<vmem>> -> memref<1x1x128xf32, #tpu.memory_space<vmem>>
    %520 = tpu.memref_squeeze %519 : memref<1x1x128xf32, #tpu.memory_space<vmem>> -> memref<1x128xf32, #tpu.memory_space<vmem>>
    %521 = tpu.memref_slice %arg5[%c1_i32_528, %c2_i32_529] : memref<2x8x!tpu.dma_semaphore, #tpu.memory_space<semaphore_mem>> -> memref<1x1x!tpu.dma_semaphore, #tpu.memory_space<semaphore_mem>>
    %522 = tpu.memref_squeeze %521 : memref<1x1x!tpu.dma_semaphore, #tpu.memory_space<semaphore_mem>> -> memref<!tpu.dma_semaphore, #tpu.memory_space<semaphore_mem>>
    tpu.enqueue_dma source(%518 : memref<1x128xf32, #tpu.memory_space<any>>) target(%520 : memref<1x128xf32, #tpu.memory_space<vmem>>) target_semaphore(%522 : memref<!tpu.dma_semaphore, #tpu.memory_space<semaphore_mem>>)
    %c3_i32_533 = arith.constant 3 : i32
    %523 = arith.addi %498, %c3_i32_533 : i32
    %524 = arith.index_cast %523 : i32 to index
    %525 = memref.load %arg1[%524] : memref<64xi32, #tpu.memory_space<smem>>
    %c1_i32_534 = arith.constant 1 : i32
    %c1_i32_535 = arith.constant 1 : i32
    %c3_i32_536 = arith.constant 3 : i32
    %c0_i32_537 = arith.constant 0 : i32
    %526 = tpu.memref_slice %arg2[%525, %c0_i32_537] : memref<16384x128xf32, #tpu.memory_space<any>> -> memref<1x128xf32, #tpu.memory_space<any>>
    %c3_i32_538 = arith.constant 3 : i32
    %c0_i32_539 = arith.constant 0 : i32
    %527 = tpu.memref_slice %arg4[%c1_i32_534, %c3_i32_538, %c0_i32_539] : memref<2x8x128xf32, #tpu.memory_space<vmem>> -> memref<1x1x128xf32, #tpu.memory_space<vmem>>
    %528 = tpu.memref_squeeze %527 : memref<1x1x128xf32, #tpu.memory_space<vmem>> -> memref<1x128xf32, #tpu.memory_space<vmem>>
    %529 = tpu.memref_slice %arg5[%c1_i32_535, %c3_i32_536] : memref<2x8x!tpu.dma_semaphore, #tpu.memory_space<semaphore_mem>> -> memref<1x1x!tpu.dma_semaphore, #tpu.memory_space<semaphore_mem>>
    %530 = tpu.memref_squeeze %529 : memref<1x1x!tpu.dma_semaphore, #tpu.memory_space<semaphore_mem>> -> memref<!tpu.dma_semaphore, #tpu.memory_space<semaphore_mem>>
    tpu.enqueue_dma source(%526 : memref<1x128xf32, #tpu.memory_space<any>>) target(%528 : memref<1x128xf32, #tpu.memory_space<vmem>>) target_semaphore(%530 : memref<!tpu.dma_semaphore, #tpu.memory_space<semaphore_mem>>)
    %c4_i32_540 = arith.constant 4 : i32
    %531 = arith.addi %498, %c4_i32_540 : i32
    %532 = arith.index_cast %531 : i32 to index
    %533 = memref.load %arg1[%532] : memref<64xi32, #tpu.memory_space<smem>>
    %c1_i32_541 = arith.constant 1 : i32
    %c1_i32_542 = arith.constant 1 : i32
    %c4_i32_543 = arith.constant 4 : i32
    %c0_i32_544 = arith.constant 0 : i32
    %534 = tpu.memref_slice %arg2[%533, %c0_i32_544] : memref<16384x128xf32, #tpu.memory_space<any>> -> memref<1x128xf32, #tpu.memory_space<any>>
    %c4_i32_545 = arith.constant 4 : i32
    %c0_i32_546 = arith.constant 0 : i32
    %535 = tpu.memref_slice %arg4[%c1_i32_541, %c4_i32_545, %c0_i32_546] : memref<2x8x128xf32, #tpu.memory_space<vmem>> -> memref<1x1x128xf32, #tpu.memory_space<vmem>>
    %536 = tpu.memref_squeeze %535 : memref<1x1x128xf32, #tpu.memory_space<vmem>> -> memref<1x128xf32, #tpu.memory_space<vmem>>
    %537 = tpu.memref_slice %arg5[%c1_i32_542, %c4_i32_543] : memref<2x8x!tpu.dma_semaphore, #tpu.memory_space<semaphore_mem>> -> memref<1x1x!tpu.dma_semaphore, #tpu.memory_space<semaphore_mem>>
    %538 = tpu.memref_squeeze %537 : memref<1x1x!tpu.dma_semaphore, #tpu.memory_space<semaphore_mem>> -> memref<!tpu.dma_semaphore, #tpu.memory_space<semaphore_mem>>
    tpu.enqueue_dma source(%534 : memref<1x128xf32, #tpu.memory_space<any>>) target(%536 : memref<1x128xf32, #tpu.memory_space<vmem>>) target_semaphore(%538 : memref<!tpu.dma_semaphore, #tpu.memory_space<semaphore_mem>>)
    %c5_i32_547 = arith.constant 5 : i32
    %539 = arith.addi %498, %c5_i32_547 : i32
    %540 = arith.index_cast %539 : i32 to index
    %541 = memref.load %arg1[%540] : memref<64xi32, #tpu.memory_space<smem>>
    %c1_i32_548 = arith.constant 1 : i32
    %c1_i32_549 = arith.constant 1 : i32
    %c5_i32_550 = arith.constant 5 : i32
    %c0_i32_551 = arith.constant 0 : i32
    %542 = tpu.memref_slice %arg2[%541, %c0_i32_551] : memref<16384x128xf32, #tpu.memory_space<any>> -> memref<1x128xf32, #tpu.memory_space<any>>
    %c5_i32_552 = arith.constant 5 : i32
    %c0_i32_553 = arith.constant 0 : i32
    %543 = tpu.memref_slice %arg4[%c1_i32_548, %c5_i32_552, %c0_i32_553] : memref<2x8x128xf32, #tpu.memory_space<vmem>> -> memref<1x1x128xf32, #tpu.memory_space<vmem>>
    %544 = tpu.memref_squeeze %543 : memref<1x1x128xf32, #tpu.memory_space<vmem>> -> memref<1x128xf32, #tpu.memory_space<vmem>>
    %545 = tpu.memref_slice %arg5[%c1_i32_549, %c5_i32_550] : memref<2x8x!tpu.dma_semaphore, #tpu.memory_space<semaphore_mem>> -> memref<1x1x!tpu.dma_semaphore, #tpu.memory_space<semaphore_mem>>
    %546 = tpu.memref_squeeze %545 : memref<1x1x!tpu.dma_semaphore, #tpu.memory_space<semaphore_mem>> -> memref<!tpu.dma_semaphore, #tpu.memory_space<semaphore_mem>>
    tpu.enqueue_dma source(%542 : memref<1x128xf32, #tpu.memory_space<any>>) target(%544 : memref<1x128xf32, #tpu.memory_space<vmem>>) target_semaphore(%546 : memref<!tpu.dma_semaphore, #tpu.memory_space<semaphore_mem>>)
    %c6_i32_554 = arith.constant 6 : i32
    %547 = arith.addi %498, %c6_i32_554 : i32
    %548 = arith.index_cast %547 : i32 to index
    %549 = memref.load %arg1[%548] : memref<64xi32, #tpu.memory_space<smem>>
    %c1_i32_555 = arith.constant 1 : i32
    %c1_i32_556 = arith.constant 1 : i32
    %c6_i32_557 = arith.constant 6 : i32
    %c0_i32_558 = arith.constant 0 : i32
    %550 = tpu.memref_slice %arg2[%549, %c0_i32_558] : memref<16384x128xf32, #tpu.memory_space<any>> -> memref<1x128xf32, #tpu.memory_space<any>>
    %c6_i32_559 = arith.constant 6 : i32
    %c0_i32_560 = arith.constant 0 : i32
    %551 = tpu.memref_slice %arg4[%c1_i32_555, %c6_i32_559, %c0_i32_560] : memref<2x8x128xf32, #tpu.memory_space<vmem>> -> memref<1x1x128xf32, #tpu.memory_space<vmem>>
    %552 = tpu.memref_squeeze %551 : memref<1x1x128xf32, #tpu.memory_space<vmem>> -> memref<1x128xf32, #tpu.memory_space<vmem>>
    %553 = tpu.memref_slice %arg5[%c1_i32_556, %c6_i32_557] : memref<2x8x!tpu.dma_semaphore, #tpu.memory_space<semaphore_mem>> -> memref<1x1x!tpu.dma_semaphore, #tpu.memory_space<semaphore_mem>>
    %554 = tpu.memref_squeeze %553 : memref<1x1x!tpu.dma_semaphore, #tpu.memory_space<semaphore_mem>> -> memref<!tpu.dma_semaphore, #tpu.memory_space<semaphore_mem>>
    tpu.enqueue_dma source(%550 : memref<1x128xf32, #tpu.memory_space<any>>) target(%552 : memref<1x128xf32, #tpu.memory_space<vmem>>) target_semaphore(%554 : memref<!tpu.dma_semaphore, #tpu.memory_space<semaphore_mem>>)
    %c7_i32_561 = arith.constant 7 : i32
    %555 = arith.addi %498, %c7_i32_561 : i32
    %556 = arith.index_cast %555 : i32 to index
    %557 = memref.load %arg1[%556] : memref<64xi32, #tpu.memory_space<smem>>
    %c1_i32_562 = arith.constant 1 : i32
    %c1_i32_563 = arith.constant 1 : i32
    %c7_i32_564 = arith.constant 7 : i32
    %c0_i32_565 = arith.constant 0 : i32
    %558 = tpu.memref_slice %arg2[%557, %c0_i32_565] : memref<16384x128xf32, #tpu.memory_space<any>> -> memref<1x128xf32, #tpu.memory_space<any>>
    %c7_i32_566 = arith.constant 7 : i32
    %c0_i32_567 = arith.constant 0 : i32
    %559 = tpu.memref_slice %arg4[%c1_i32_562, %c7_i32_566, %c0_i32_567] : memref<2x8x128xf32, #tpu.memory_space<vmem>> -> memref<1x1x128xf32, #tpu.memory_space<vmem>>
    %560 = tpu.memref_squeeze %559 : memref<1x1x128xf32, #tpu.memory_space<vmem>> -> memref<1x128xf32, #tpu.memory_space<vmem>>
    %561 = tpu.memref_slice %arg5[%c1_i32_563, %c7_i32_564] : memref<2x8x!tpu.dma_semaphore, #tpu.memory_space<semaphore_mem>> -> memref<1x1x!tpu.dma_semaphore, #tpu.memory_space<semaphore_mem>>
    %562 = tpu.memref_squeeze %561 : memref<1x1x!tpu.dma_semaphore, #tpu.memory_space<semaphore_mem>> -> memref<!tpu.dma_semaphore, #tpu.memory_space<semaphore_mem>>
    tpu.enqueue_dma source(%558 : memref<1x128xf32, #tpu.memory_space<any>>) target(%560 : memref<1x128xf32, #tpu.memory_space<vmem>>) target_semaphore(%562 : memref<!tpu.dma_semaphore, #tpu.memory_space<semaphore_mem>>)
    %c0_i32_568 = arith.constant 0 : i32
    %c0_i32_569 = arith.constant 0 : i32
    %c0_i32_570 = arith.constant 0 : i32
    %c0_i32_571 = arith.constant 0 : i32
    %c0_i32_572 = arith.constant 0 : i32
    %563 = tpu.memref_slice %arg2[%c0_i32_571, %c0_i32_572] : memref<16384x128xf32, #tpu.memory_space<any>> -> memref<1x128xf32, #tpu.memory_space<any>>
    %c0_i32_573 = arith.constant 0 : i32
    %c0_i32_574 = arith.constant 0 : i32
    %564 = tpu.memref_slice %arg4[%c0_i32_568, %c0_i32_573, %c0_i32_574] : memref<2x8x128xf32, #tpu.memory_space<vmem>> -> memref<1x1x128xf32, #tpu.memory_space<vmem>>
    %565 = tpu.memref_squeeze %564 : memref<1x1x128xf32, #tpu.memory_space<vmem>> -> memref<1x128xf32, #tpu.memory_space<vmem>>
    %566 = tpu.memref_slice %arg5[%c0_i32_569, %c0_i32_570] : memref<2x8x!tpu.dma_semaphore, #tpu.memory_space<semaphore_mem>> -> memref<1x1x!tpu.dma_semaphore, #tpu.memory_space<semaphore_mem>>
    %567 = tpu.memref_squeeze %566 : memref<1x1x!tpu.dma_semaphore, #tpu.memory_space<semaphore_mem>> -> memref<!tpu.dma_semaphore, #tpu.memory_space<semaphore_mem>>
    tpu.wait_dma2 semaphore(%567 : memref<!tpu.dma_semaphore, #tpu.memory_space<semaphore_mem>>) src(%563 : memref<1x128xf32, #tpu.memory_space<any>>) dst(%565 : memref<1x128xf32, #tpu.memory_space<vmem>>)
    %c0_i32_575 = arith.constant 0 : i32
    %c0_i32_576 = arith.constant 0 : i32
    %c1_i32_577 = arith.constant 1 : i32
    %c0_i32_578 = arith.constant 0 : i32
    %c0_i32_579 = arith.constant 0 : i32
    %568 = tpu.memref_slice %arg2[%c0_i32_578, %c0_i32_579] : memref<16384x128xf32, #tpu.memory_space<any>> -> memref<1x128xf32, #tpu.memory_space<any>>
    %c1_i32_580 = arith.constant 1 : i32
    %c0_i32_581 = arith.constant 0 : i32
    %569 = tpu.memref_slice %arg4[%c0_i32_575, %c1_i32_580, %c0_i32_581] : memref<2x8x128xf32, #tpu.memory_space<vmem>> -> memref<1x1x128xf32, #tpu.memory_space<vmem>>
    %570 = tpu.memref_squeeze %569 : memref<1x1x128xf32, #tpu.memory_space<vmem>> -> memref<1x128xf32, #tpu.memory_space<vmem>>
    %571 = tpu.memref_slice %arg5[%c0_i32_576, %c1_i32_577] : memref<2x8x!tpu.dma_semaphore, #tpu.memory_space<semaphore_mem>> -> memref<1x1x!tpu.dma_semaphore, #tpu.memory_space<semaphore_mem>>
    %572 = tpu.memref_squeeze %571 : memref<1x1x!tpu.dma_semaphore, #tpu.memory_space<semaphore_mem>> -> memref<!tpu.dma_semaphore, #tpu.memory_space<semaphore_mem>>
    tpu.wait_dma2 semaphore(%572 : memref<!tpu.dma_semaphore, #tpu.memory_space<semaphore_mem>>) src(%568 : memref<1x128xf32, #tpu.memory_space<any>>) dst(%570 : memref<1x128xf32, #tpu.memory_space<vmem>>)
    %c0_i32_582 = arith.constant 0 : i32
    %c0_i32_583 = arith.constant 0 : i32
    %c2_i32_584 = arith.constant 2 : i32
    %c0_i32_585 = arith.constant 0 : i32
    %c0_i32_586 = arith.constant 0 : i32
    %573 = tpu.memref_slice %arg2[%c0_i32_585, %c0_i32_586] : memref<16384x128xf32, #tpu.memory_space<any>> -> memref<1x128xf32, #tpu.memory_space<any>>
    %c2_i32_587 = arith.constant 2 : i32
    %c0_i32_588 = arith.constant 0 : i32
    %574 = tpu.memref_slice %arg4[%c0_i32_582, %c2_i32_587, %c0_i32_588] : memref<2x8x128xf32, #tpu.memory_space<vmem>> -> memref<1x1x128xf32, #tpu.memory_space<vmem>>
    %575 = tpu.memref_squeeze %574 : memref<1x1x128xf32, #tpu.memory_space<vmem>> -> memref<1x128xf32, #tpu.memory_space<vmem>>
    %576 = tpu.memref_slice %arg5[%c0_i32_583, %c2_i32_584] : memref<2x8x!tpu.dma_semaphore, #tpu.memory_space<semaphore_mem>> -> memref<1x1x!tpu.dma_semaphore, #tpu.memory_space<semaphore_mem>>
    %577 = tpu.memref_squeeze %576 : memref<1x1x!tpu.dma_semaphore, #tpu.memory_space<semaphore_mem>> -> memref<!tpu.dma_semaphore, #tpu.memory_space<semaphore_mem>>
    tpu.wait_dma2 semaphore(%577 : memref<!tpu.dma_semaphore, #tpu.memory_space<semaphore_mem>>) src(%573 : memref<1x128xf32, #tpu.memory_space<any>>) dst(%575 : memref<1x128xf32, #tpu.memory_space<vmem>>)
    %c0_i32_589 = arith.constant 0 : i32
    %c0_i32_590 = arith.constant 0 : i32
    %c3_i32_591 = arith.constant 3 : i32
    %c0_i32_592 = arith.constant 0 : i32
    %c0_i32_593 = arith.constant 0 : i32
    %578 = tpu.memref_slice %arg2[%c0_i32_592, %c0_i32_593] : memref<16384x128xf32, #tpu.memory_space<any>> -> memref<1x128xf32, #tpu.memory_space<any>>
    %c3_i32_594 = arith.constant 3 : i32
    %c0_i32_595 = arith.constant 0 : i32
    %579 = tpu.memref_slice %arg4[%c0_i32_589, %c3_i32_594, %c0_i32_595] : memref<2x8x128xf32, #tpu.memory_space<vmem>> -> memref<1x1x128xf32, #tpu.memory_space<vmem>>
    %580 = tpu.memref_squeeze %579 : memref<1x1x128xf32, #tpu.memory_space<vmem>> -> memref<1x128xf32, #tpu.memory_space<vmem>>
    %581 = tpu.memref_slice %arg5[%c0_i32_590, %c3_i32_591] : memref<2x8x!tpu.dma_semaphore, #tpu.memory_space<semaphore_mem>> -> memref<1x1x!tpu.dma_semaphore, #tpu.memory_space<semaphore_mem>>
    %582 = tpu.memref_squeeze %581 : memref<1x1x!tpu.dma_semaphore, #tpu.memory_space<semaphore_mem>> -> memref<!tpu.dma_semaphore, #tpu.memory_space<semaphore_mem>>
    tpu.wait_dma2 semaphore(%582 : memref<!tpu.dma_semaphore, #tpu.memory_space<semaphore_mem>>) src(%578 : memref<1x128xf32, #tpu.memory_space<any>>) dst(%580 : memref<1x128xf32, #tpu.memory_space<vmem>>)
    %c0_i32_596 = arith.constant 0 : i32
    %c0_i32_597 = arith.constant 0 : i32
    %c4_i32_598 = arith.constant 4 : i32
    %c0_i32_599 = arith.constant 0 : i32
    %c0_i32_600 = arith.constant 0 : i32
    %583 = tpu.memref_slice %arg2[%c0_i32_599, %c0_i32_600] : memref<16384x128xf32, #tpu.memory_space<any>> -> memref<1x128xf32, #tpu.memory_space<any>>
    %c4_i32_601 = arith.constant 4 : i32
    %c0_i32_602 = arith.constant 0 : i32
    %584 = tpu.memref_slice %arg4[%c0_i32_596, %c4_i32_601, %c0_i32_602] : memref<2x8x128xf32, #tpu.memory_space<vmem>> -> memref<1x1x128xf32, #tpu.memory_space<vmem>>
    %585 = tpu.memref_squeeze %584 : memref<1x1x128xf32, #tpu.memory_space<vmem>> -> memref<1x128xf32, #tpu.memory_space<vmem>>
    %586 = tpu.memref_slice %arg5[%c0_i32_597, %c4_i32_598] : memref<2x8x!tpu.dma_semaphore, #tpu.memory_space<semaphore_mem>> -> memref<1x1x!tpu.dma_semaphore, #tpu.memory_space<semaphore_mem>>
    %587 = tpu.memref_squeeze %586 : memref<1x1x!tpu.dma_semaphore, #tpu.memory_space<semaphore_mem>> -> memref<!tpu.dma_semaphore, #tpu.memory_space<semaphore_mem>>
    tpu.wait_dma2 semaphore(%587 : memref<!tpu.dma_semaphore, #tpu.memory_space<semaphore_mem>>) src(%583 : memref<1x128xf32, #tpu.memory_space<any>>) dst(%585 : memref<1x128xf32, #tpu.memory_space<vmem>>)
    %c0_i32_603 = arith.constant 0 : i32
    %c0_i32_604 = arith.constant 0 : i32
    %c5_i32_605 = arith.constant 5 : i32
    %c0_i32_606 = arith.constant 0 : i32
    %c0_i32_607 = arith.constant 0 : i32
    %588 = tpu.memref_slice %arg2[%c0_i32_606, %c0_i32_607] : memref<16384x128xf32, #tpu.memory_space<any>> -> memref<1x128xf32, #tpu.memory_space<any>>
    %c5_i32_608 = arith.constant 5 : i32
    %c0_i32_609 = arith.constant 0 : i32
    %589 = tpu.memref_slice %arg4[%c0_i32_603, %c5_i32_608, %c0_i32_609] : memref<2x8x128xf32, #tpu.memory_space<vmem>> -> memref<1x1x128xf32, #tpu.memory_space<vmem>>
    %590 = tpu.memref_squeeze %589 : memref<1x1x128xf32, #tpu.memory_space<vmem>> -> memref<1x128xf32, #tpu.memory_space<vmem>>
    %591 = tpu.memref_slice %arg5[%c0_i32_604, %c5_i32_605] : memref<2x8x!tpu.dma_semaphore, #tpu.memory_space<semaphore_mem>> -> memref<1x1x!tpu.dma_semaphore, #tpu.memory_space<semaphore_mem>>
    %592 = tpu.memref_squeeze %591 : memref<1x1x!tpu.dma_semaphore, #tpu.memory_space<semaphore_mem>> -> memref<!tpu.dma_semaphore, #tpu.memory_space<semaphore_mem>>
    tpu.wait_dma2 semaphore(%592 : memref<!tpu.dma_semaphore, #tpu.memory_space<semaphore_mem>>) src(%588 : memref<1x128xf32, #tpu.memory_space<any>>) dst(%590 : memref<1x128xf32, #tpu.memory_space<vmem>>)
    %c0_i32_610 = arith.constant 0 : i32
    %c0_i32_611 = arith.constant 0 : i32
    %c6_i32_612 = arith.constant 6 : i32
    %c0_i32_613 = arith.constant 0 : i32
    %c0_i32_614 = arith.constant 0 : i32
    %593 = tpu.memref_slice %arg2[%c0_i32_613, %c0_i32_614] : memref<16384x128xf32, #tpu.memory_space<any>> -> memref<1x128xf32, #tpu.memory_space<any>>
    %c6_i32_615 = arith.constant 6 : i32
    %c0_i32_616 = arith.constant 0 : i32
    %594 = tpu.memref_slice %arg4[%c0_i32_610, %c6_i32_615, %c0_i32_616] : memref<2x8x128xf32, #tpu.memory_space<vmem>> -> memref<1x1x128xf32, #tpu.memory_space<vmem>>
    %595 = tpu.memref_squeeze %594 : memref<1x1x128xf32, #tpu.memory_space<vmem>> -> memref<1x128xf32, #tpu.memory_space<vmem>>
    %596 = tpu.memref_slice %arg5[%c0_i32_611, %c6_i32_612] : memref<2x8x!tpu.dma_semaphore, #tpu.memory_space<semaphore_mem>> -> memref<1x1x!tpu.dma_semaphore, #tpu.memory_space<semaphore_mem>>
    %597 = tpu.memref_squeeze %596 : memref<1x1x!tpu.dma_semaphore, #tpu.memory_space<semaphore_mem>> -> memref<!tpu.dma_semaphore, #tpu.memory_space<semaphore_mem>>
    tpu.wait_dma2 semaphore(%597 : memref<!tpu.dma_semaphore, #tpu.memory_space<semaphore_mem>>) src(%593 : memref<1x128xf32, #tpu.memory_space<any>>) dst(%595 : memref<1x128xf32, #tpu.memory_space<vmem>>)
    %c0_i32_617 = arith.constant 0 : i32
    %c0_i32_618 = arith.constant 0 : i32
    %c7_i32_619 = arith.constant 7 : i32
    %c0_i32_620 = arith.constant 0 : i32
    %c0_i32_621 = arith.constant 0 : i32
    %598 = tpu.memref_slice %arg2[%c0_i32_620, %c0_i32_621] : memref<16384x128xf32, #tpu.memory_space<any>> -> memref<1x128xf32, #tpu.memory_space<any>>
    %c7_i32_622 = arith.constant 7 : i32
    %c0_i32_623 = arith.constant 0 : i32
    %599 = tpu.memref_slice %arg4[%c0_i32_617, %c7_i32_622, %c0_i32_623] : memref<2x8x128xf32, #tpu.memory_space<vmem>> -> memref<1x1x128xf32, #tpu.memory_space<vmem>>
    %600 = tpu.memref_squeeze %599 : memref<1x1x128xf32, #tpu.memory_space<vmem>> -> memref<1x128xf32, #tpu.memory_space<vmem>>
    %601 = tpu.memref_slice %arg5[%c0_i32_618, %c7_i32_619] : memref<2x8x!tpu.dma_semaphore, #tpu.memory_space<semaphore_mem>> -> memref<1x1x!tpu.dma_semaphore, #tpu.memory_space<semaphore_mem>>
    %602 = tpu.memref_squeeze %601 : memref<1x1x!tpu.dma_semaphore, #tpu.memory_space<semaphore_mem>> -> memref<!tpu.dma_semaphore, #tpu.memory_space<semaphore_mem>>
    tpu.wait_dma2 semaphore(%602 : memref<!tpu.dma_semaphore, #tpu.memory_space<semaphore_mem>>) src(%598 : memref<1x128xf32, #tpu.memory_space<any>>) dst(%600 : memref<1x128xf32, #tpu.memory_space<vmem>>)
    %c0_624 = arith.constant 0 : index
    %c0_625 = arith.constant 0 : index
    %c0_626 = arith.constant 0 : index
    %603 = vector.load %arg4[%c0_624, %c0_625, %c0_626] : memref<2x8x128xf32, #tpu.memory_space<vmem>>, vector<1x8x128xf32>
    %604 = vector.shape_cast %603 : vector<1x8x128xf32> to vector<8x128xf32>
    %c32 = arith.constant 32 : index
    %c0_627 = arith.constant 0 : index
    %605 = vector.load %arg3[%c32, %c0_627] : memref<64x128xf32, #tpu.memory_space<vmem>>, vector<8x128xf32>
    tpu.vector_store %arg3[%c32, %c0_627], %604 {strides = array<i32>} : memref<64x128xf32, #tpu.memory_space<vmem>>, vector<8x128xf32>,
    %c48_i32 = arith.constant 48 : i32
    %606 = arith.addi %0, %c48_i32 : i32
    %c0_i32_628 = arith.constant 0 : i32
    %607 = arith.addi %606, %c0_i32_628 : i32
    %608 = arith.index_cast %607 : i32 to index
    %609 = memref.load %arg1[%608] : memref<64xi32, #tpu.memory_space<smem>>
    %c0_i32_629 = arith.constant 0 : i32
    %c0_i32_630 = arith.constant 0 : i32
    %c0_i32_631 = arith.constant 0 : i32
    %c0_i32_632 = arith.constant 0 : i32
    %610 = tpu.memref_slice %arg2[%609, %c0_i32_632] : memref<16384x128xf32, #tpu.memory_space<any>> -> memref<1x128xf32, #tpu.memory_space<any>>
    %c0_i32_633 = arith.constant 0 : i32
    %c0_i32_634 = arith.constant 0 : i32
    %611 = tpu.memref_slice %arg4[%c0_i32_629, %c0_i32_633, %c0_i32_634] : memref<2x8x128xf32, #tpu.memory_space<vmem>> -> memref<1x1x128xf32, #tpu.memory_space<vmem>>
    %612 = tpu.memref_squeeze %611 : memref<1x1x128xf32, #tpu.memory_space<vmem>> -> memref<1x128xf32, #tpu.memory_space<vmem>>
    %613 = tpu.memref_slice %arg5[%c0_i32_630, %c0_i32_631] : memref<2x8x!tpu.dma_semaphore, #tpu.memory_space<semaphore_mem>> -> memref<1x1x!tpu.dma_semaphore, #tpu.memory_space<semaphore_mem>>
    %614 = tpu.memref_squeeze %613 : memref<1x1x!tpu.dma_semaphore, #tpu.memory_space<semaphore_mem>> -> memref<!tpu.dma_semaphore, #tpu.memory_space<semaphore_mem>>
    tpu.enqueue_dma source(%610 : memref<1x128xf32, #tpu.memory_space<any>>) target(%612 : memref<1x128xf32, #tpu.memory_space<vmem>>) target_semaphore(%614 : memref<!tpu.dma_semaphore, #tpu.memory_space<semaphore_mem>>)
    %c1_i32_635 = arith.constant 1 : i32
    %615 = arith.addi %606, %c1_i32_635 : i32
    %616 = arith.index_cast %615 : i32 to index
    %617 = memref.load %arg1[%616] : memref<64xi32, #tpu.memory_space<smem>>
    %c0_i32_636 = arith.constant 0 : i32
    %c0_i32_637 = arith.constant 0 : i32
    %c1_i32_638 = arith.constant 1 : i32
    %c0_i32_639 = arith.constant 0 : i32
    %618 = tpu.memref_slice %arg2[%617, %c0_i32_639] : memref<16384x128xf32, #tpu.memory_space<any>> -> memref<1x128xf32, #tpu.memory_space<any>>
    %c1_i32_640 = arith.constant 1 : i32
    %c0_i32_641 = arith.constant 0 : i32
    %619 = tpu.memref_slice %arg4[%c0_i32_636, %c1_i32_640, %c0_i32_641] : memref<2x8x128xf32, #tpu.memory_space<vmem>> -> memref<1x1x128xf32, #tpu.memory_space<vmem>>
    %620 = tpu.memref_squeeze %619 : memref<1x1x128xf32, #tpu.memory_space<vmem>> -> memref<1x128xf32, #tpu.memory_space<vmem>>
    %621 = tpu.memref_slice %arg5[%c0_i32_637, %c1_i32_638] : memref<2x8x!tpu.dma_semaphore, #tpu.memory_space<semaphore_mem>> -> memref<1x1x!tpu.dma_semaphore, #tpu.memory_space<semaphore_mem>>
    %622 = tpu.memref_squeeze %621 : memref<1x1x!tpu.dma_semaphore, #tpu.memory_space<semaphore_mem>> -> memref<!tpu.dma_semaphore, #tpu.memory_space<semaphore_mem>>
    tpu.enqueue_dma source(%618 : memref<1x128xf32, #tpu.memory_space<any>>) target(%620 : memref<1x128xf32, #tpu.memory_space<vmem>>) target_semaphore(%622 : memref<!tpu.dma_semaphore, #tpu.memory_space<semaphore_mem>>)
    %c2_i32_642 = arith.constant 2 : i32
    %623 = arith.addi %606, %c2_i32_642 : i32
    %624 = arith.index_cast %623 : i32 to index
    %625 = memref.load %arg1[%624] : memref<64xi32, #tpu.memory_space<smem>>
    %c0_i32_643 = arith.constant 0 : i32
    %c0_i32_644 = arith.constant 0 : i32
    %c2_i32_645 = arith.constant 2 : i32
    %c0_i32_646 = arith.constant 0 : i32
    %626 = tpu.memref_slice %arg2[%625, %c0_i32_646] : memref<16384x128xf32, #tpu.memory_space<any>> -> memref<1x128xf32, #tpu.memory_space<any>>
    %c2_i32_647 = arith.constant 2 : i32
    %c0_i32_648 = arith.constant 0 : i32
    %627 = tpu.memref_slice %arg4[%c0_i32_643, %c2_i32_647, %c0_i32_648] : memref<2x8x128xf32, #tpu.memory_space<vmem>> -> memref<1x1x128xf32, #tpu.memory_space<vmem>>
    %628 = tpu.memref_squeeze %627 : memref<1x1x128xf32, #tpu.memory_space<vmem>> -> memref<1x128xf32, #tpu.memory_space<vmem>>
    %629 = tpu.memref_slice %arg5[%c0_i32_644, %c2_i32_645] : memref<2x8x!tpu.dma_semaphore, #tpu.memory_space<semaphore_mem>> -> memref<1x1x!tpu.dma_semaphore, #tpu.memory_space<semaphore_mem>>
    %630 = tpu.memref_squeeze %629 : memref<1x1x!tpu.dma_semaphore, #tpu.memory_space<semaphore_mem>> -> memref<!tpu.dma_semaphore, #tpu.memory_space<semaphore_mem>>
    tpu.enqueue_dma source(%626 : memref<1x128xf32, #tpu.memory_space<any>>) target(%628 : memref<1x128xf32, #tpu.memory_space<vmem>>) target_semaphore(%630 : memref<!tpu.dma_semaphore, #tpu.memory_space<semaphore_mem>>)
    %c3_i32_649 = arith.constant 3 : i32
    %631 = arith.addi %606, %c3_i32_649 : i32
    %632 = arith.index_cast %631 : i32 to index
    %633 = memref.load %arg1[%632] : memref<64xi32, #tpu.memory_space<smem>>
    %c0_i32_650 = arith.constant 0 : i32
    %c0_i32_651 = arith.constant 0 : i32
    %c3_i32_652 = arith.constant 3 : i32
    %c0_i32_653 = arith.constant 0 : i32
    %634 = tpu.memref_slice %arg2[%633, %c0_i32_653] : memref<16384x128xf32, #tpu.memory_space<any>> -> memref<1x128xf32, #tpu.memory_space<any>>
    %c3_i32_654 = arith.constant 3 : i32
    %c0_i32_655 = arith.constant 0 : i32
    %635 = tpu.memref_slice %arg4[%c0_i32_650, %c3_i32_654, %c0_i32_655] : memref<2x8x128xf32, #tpu.memory_space<vmem>> -> memref<1x1x128xf32, #tpu.memory_space<vmem>>
    %636 = tpu.memref_squeeze %635 : memref<1x1x128xf32, #tpu.memory_space<vmem>> -> memref<1x128xf32, #tpu.memory_space<vmem>>
    %637 = tpu.memref_slice %arg5[%c0_i32_651, %c3_i32_652] : memref<2x8x!tpu.dma_semaphore, #tpu.memory_space<semaphore_mem>> -> memref<1x1x!tpu.dma_semaphore, #tpu.memory_space<semaphore_mem>>
    %638 = tpu.memref_squeeze %637 : memref<1x1x!tpu.dma_semaphore, #tpu.memory_space<semaphore_mem>> -> memref<!tpu.dma_semaphore, #tpu.memory_space<semaphore_mem>>
    tpu.enqueue_dma source(%634 : memref<1x128xf32, #tpu.memory_space<any>>) target(%636 : memref<1x128xf32, #tpu.memory_space<vmem>>) target_semaphore(%638 : memref<!tpu.dma_semaphore, #tpu.memory_space<semaphore_mem>>)
    %c4_i32_656 = arith.constant 4 : i32
    %639 = arith.addi %606, %c4_i32_656 : i32
    %640 = arith.index_cast %639 : i32 to index
    %641 = memref.load %arg1[%640] : memref<64xi32, #tpu.memory_space<smem>>
    %c0_i32_657 = arith.constant 0 : i32
    %c0_i32_658 = arith.constant 0 : i32
    %c4_i32_659 = arith.constant 4 : i32
    %c0_i32_660 = arith.constant 0 : i32
    %642 = tpu.memref_slice %arg2[%641, %c0_i32_660] : memref<16384x128xf32, #tpu.memory_space<any>> -> memref<1x128xf32, #tpu.memory_space<any>>
    %c4_i32_661 = arith.constant 4 : i32
    %c0_i32_662 = arith.constant 0 : i32
    %643 = tpu.memref_slice %arg4[%c0_i32_657, %c4_i32_661, %c0_i32_662] : memref<2x8x128xf32, #tpu.memory_space<vmem>> -> memref<1x1x128xf32, #tpu.memory_space<vmem>>
    %644 = tpu.memref_squeeze %643 : memref<1x1x128xf32, #tpu.memory_space<vmem>> -> memref<1x128xf32, #tpu.memory_space<vmem>>
    %645 = tpu.memref_slice %arg5[%c0_i32_658, %c4_i32_659] : memref<2x8x!tpu.dma_semaphore, #tpu.memory_space<semaphore_mem>> -> memref<1x1x!tpu.dma_semaphore, #tpu.memory_space<semaphore_mem>>
    %646 = tpu.memref_squeeze %645 : memref<1x1x!tpu.dma_semaphore, #tpu.memory_space<semaphore_mem>> -> memref<!tpu.dma_semaphore, #tpu.memory_space<semaphore_mem>>
    tpu.enqueue_dma source(%642 : memref<1x128xf32, #tpu.memory_space<any>>) target(%644 : memref<1x128xf32, #tpu.memory_space<vmem>>) target_semaphore(%646 : memref<!tpu.dma_semaphore, #tpu.memory_space<semaphore_mem>>)
    %c5_i32_663 = arith.constant 5 : i32
    %647 = arith.addi %606, %c5_i32_663 : i32
    %648 = arith.index_cast %647 : i32 to index
    %649 = memref.load %arg1[%648] : memref<64xi32, #tpu.memory_space<smem>>
    %c0_i32_664 = arith.constant 0 : i32
    %c0_i32_665 = arith.constant 0 : i32
    %c5_i32_666 = arith.constant 5 : i32
    %c0_i32_667 = arith.constant 0 : i32
    %650 = tpu.memref_slice %arg2[%649, %c0_i32_667] : memref<16384x128xf32, #tpu.memory_space<any>> -> memref<1x128xf32, #tpu.memory_space<any>>
    %c5_i32_668 = arith.constant 5 : i32
    %c0_i32_669 = arith.constant 0 : i32
    %651 = tpu.memref_slice %arg4[%c0_i32_664, %c5_i32_668, %c0_i32_669] : memref<2x8x128xf32, #tpu.memory_space<vmem>> -> memref<1x1x128xf32, #tpu.memory_space<vmem>>
    %652 = tpu.memref_squeeze %651 : memref<1x1x128xf32, #tpu.memory_space<vmem>> -> memref<1x128xf32, #tpu.memory_space<vmem>>
    %653 = tpu.memref_slice %arg5[%c0_i32_665, %c5_i32_666] : memref<2x8x!tpu.dma_semaphore, #tpu.memory_space<semaphore_mem>> -> memref<1x1x!tpu.dma_semaphore, #tpu.memory_space<semaphore_mem>>
    %654 = tpu.memref_squeeze %653 : memref<1x1x!tpu.dma_semaphore, #tpu.memory_space<semaphore_mem>> -> memref<!tpu.dma_semaphore, #tpu.memory_space<semaphore_mem>>
    tpu.enqueue_dma source(%650 : memref<1x128xf32, #tpu.memory_space<any>>) target(%652 : memref<1x128xf32, #tpu.memory_space<vmem>>) target_semaphore(%654 : memref<!tpu.dma_semaphore, #tpu.memory_space<semaphore_mem>>)
    %c6_i32_670 = arith.constant 6 : i32
    %655 = arith.addi %606, %c6_i32_670 : i32
    %656 = arith.index_cast %655 : i32 to index
    %657 = memref.load %arg1[%656] : memref<64xi32, #tpu.memory_space<smem>>
    %c0_i32_671 = arith.constant 0 : i32
    %c0_i32_672 = arith.constant 0 : i32
    %c6_i32_673 = arith.constant 6 : i32
    %c0_i32_674 = arith.constant 0 : i32
    %658 = tpu.memref_slice %arg2[%657, %c0_i32_674] : memref<16384x128xf32, #tpu.memory_space<any>> -> memref<1x128xf32, #tpu.memory_space<any>>
    %c6_i32_675 = arith.constant 6 : i32
    %c0_i32_676 = arith.constant 0 : i32
    %659 = tpu.memref_slice %arg4[%c0_i32_671, %c6_i32_675, %c0_i32_676] : memref<2x8x128xf32, #tpu.memory_space<vmem>> -> memref<1x1x128xf32, #tpu.memory_space<vmem>>
    %660 = tpu.memref_squeeze %659 : memref<1x1x128xf32, #tpu.memory_space<vmem>> -> memref<1x128xf32, #tpu.memory_space<vmem>>
    %661 = tpu.memref_slice %arg5[%c0_i32_672, %c6_i32_673] : memref<2x8x!tpu.dma_semaphore, #tpu.memory_space<semaphore_mem>> -> memref<1x1x!tpu.dma_semaphore, #tpu.memory_space<semaphore_mem>>
    %662 = tpu.memref_squeeze %661 : memref<1x1x!tpu.dma_semaphore, #tpu.memory_space<semaphore_mem>> -> memref<!tpu.dma_semaphore, #tpu.memory_space<semaphore_mem>>
    tpu.enqueue_dma source(%658 : memref<1x128xf32, #tpu.memory_space<any>>) target(%660 : memref<1x128xf32, #tpu.memory_space<vmem>>) target_semaphore(%662 : memref<!tpu.dma_semaphore, #tpu.memory_space<semaphore_mem>>)
    %c7_i32_677 = arith.constant 7 : i32
    %663 = arith.addi %606, %c7_i32_677 : i32
    %664 = arith.index_cast %663 : i32 to index
    %665 = memref.load %arg1[%664] : memref<64xi32, #tpu.memory_space<smem>>
    %c0_i32_678 = arith.constant 0 : i32
    %c0_i32_679 = arith.constant 0 : i32
    %c7_i32_680 = arith.constant 7 : i32
    %c0_i32_681 = arith.constant 0 : i32
    %666 = tpu.memref_slice %arg2[%665, %c0_i32_681] : memref<16384x128xf32, #tpu.memory_space<any>> -> memref<1x128xf32, #tpu.memory_space<any>>
    %c7_i32_682 = arith.constant 7 : i32
    %c0_i32_683 = arith.constant 0 : i32
    %667 = tpu.memref_slice %arg4[%c0_i32_678, %c7_i32_682, %c0_i32_683] : memref<2x8x128xf32, #tpu.memory_space<vmem>> -> memref<1x1x128xf32, #tpu.memory_space<vmem>>
    %668 = tpu.memref_squeeze %667 : memref<1x1x128xf32, #tpu.memory_space<vmem>> -> memref<1x128xf32, #tpu.memory_space<vmem>>
    %669 = tpu.memref_slice %arg5[%c0_i32_679, %c7_i32_680] : memref<2x8x!tpu.dma_semaphore, #tpu.memory_space<semaphore_mem>> -> memref<1x1x!tpu.dma_semaphore, #tpu.memory_space<semaphore_mem>>
    %670 = tpu.memref_squeeze %669 : memref<1x1x!tpu.dma_semaphore, #tpu.memory_space<semaphore_mem>> -> memref<!tpu.dma_semaphore, #tpu.memory_space<semaphore_mem>>
    tpu.enqueue_dma source(%666 : memref<1x128xf32, #tpu.memory_space<any>>) target(%668 : memref<1x128xf32, #tpu.memory_space<vmem>>) target_semaphore(%670 : memref<!tpu.dma_semaphore, #tpu.memory_space<semaphore_mem>>)
    %c1_i32_684 = arith.constant 1 : i32
    %c1_i32_685 = arith.constant 1 : i32
    %c0_i32_686 = arith.constant 0 : i32
    %c0_i32_687 = arith.constant 0 : i32
    %c0_i32_688 = arith.constant 0 : i32
    %671 = tpu.memref_slice %arg2[%c0_i32_687, %c0_i32_688] : memref<16384x128xf32, #tpu.memory_space<any>> -> memref<1x128xf32, #tpu.memory_space<any>>
    %c0_i32_689 = arith.constant 0 : i32
    %c0_i32_690 = arith.constant 0 : i32
    %672 = tpu.memref_slice %arg4[%c1_i32_684, %c0_i32_689, %c0_i32_690] : memref<2x8x128xf32, #tpu.memory_space<vmem>> -> memref<1x1x128xf32, #tpu.memory_space<vmem>>
    %673 = tpu.memref_squeeze %672 : memref<1x1x128xf32, #tpu.memory_space<vmem>> -> memref<1x128xf32, #tpu.memory_space<vmem>>
    %674 = tpu.memref_slice %arg5[%c1_i32_685, %c0_i32_686] : memref<2x8x!tpu.dma_semaphore, #tpu.memory_space<semaphore_mem>> -> memref<1x1x!tpu.dma_semaphore, #tpu.memory_space<semaphore_mem>>
    %675 = tpu.memref_squeeze %674 : memref<1x1x!tpu.dma_semaphore, #tpu.memory_space<semaphore_mem>> -> memref<!tpu.dma_semaphore, #tpu.memory_space<semaphore_mem>>
    tpu.wait_dma2 semaphore(%675 : memref<!tpu.dma_semaphore, #tpu.memory_space<semaphore_mem>>) src(%671 : memref<1x128xf32, #tpu.memory_space<any>>) dst(%673 : memref<1x128xf32, #tpu.memory_space<vmem>>)
    %c1_i32_691 = arith.constant 1 : i32
    %c1_i32_692 = arith.constant 1 : i32
    %c1_i32_693 = arith.constant 1 : i32
    %c0_i32_694 = arith.constant 0 : i32
    %c0_i32_695 = arith.constant 0 : i32
    %676 = tpu.memref_slice %arg2[%c0_i32_694, %c0_i32_695] : memref<16384x128xf32, #tpu.memory_space<any>> -> memref<1x128xf32, #tpu.memory_space<any>>
    %c1_i32_696 = arith.constant 1 : i32
    %c0_i32_697 = arith.constant 0 : i32
    %677 = tpu.memref_slice %arg4[%c1_i32_691, %c1_i32_696, %c0_i32_697] : memref<2x8x128xf32, #tpu.memory_space<vmem>> -> memref<1x1x128xf32, #tpu.memory_space<vmem>>
    %678 = tpu.memref_squeeze %677 : memref<1x1x128xf32, #tpu.memory_space<vmem>> -> memref<1x128xf32, #tpu.memory_space<vmem>>
    %679 = tpu.memref_slice %arg5[%c1_i32_692, %c1_i32_693] : memref<2x8x!tpu.dma_semaphore, #tpu.memory_space<semaphore_mem>> -> memref<1x1x!tpu.dma_semaphore, #tpu.memory_space<semaphore_mem>>
    %680 = tpu.memref_squeeze %679 : memref<1x1x!tpu.dma_semaphore, #tpu.memory_space<semaphore_mem>> -> memref<!tpu.dma_semaphore, #tpu.memory_space<semaphore_mem>>
    tpu.wait_dma2 semaphore(%680 : memref<!tpu.dma_semaphore, #tpu.memory_space<semaphore_mem>>) src(%676 : memref<1x128xf32, #tpu.memory_space<any>>) dst(%678 : memref<1x128xf32, #tpu.memory_space<vmem>>)
    %c1_i32_698 = arith.constant 1 : i32
    %c1_i32_699 = arith.constant 1 : i32
    %c2_i32_700 = arith.constant 2 : i32
    %c0_i32_701 = arith.constant 0 : i32
    %c0_i32_702 = arith.constant 0 : i32
    %681 = tpu.memref_slice %arg2[%c0_i32_701, %c0_i32_702] : memref<16384x128xf32, #tpu.memory_space<any>> -> memref<1x128xf32, #tpu.memory_space<any>>
    %c2_i32_703 = arith.constant 2 : i32
    %c0_i32_704 = arith.constant 0 : i32
    %682 = tpu.memref_slice %arg4[%c1_i32_698, %c2_i32_703, %c0_i32_704] : memref<2x8x128xf32, #tpu.memory_space<vmem>> -> memref<1x1x128xf32, #tpu.memory_space<vmem>>
    %683 = tpu.memref_squeeze %682 : memref<1x1x128xf32, #tpu.memory_space<vmem>> -> memref<1x128xf32, #tpu.memory_space<vmem>>
    %684 = tpu.memref_slice %arg5[%c1_i32_699, %c2_i32_700] : memref<2x8x!tpu.dma_semaphore, #tpu.memory_space<semaphore_mem>> -> memref<1x1x!tpu.dma_semaphore, #tpu.memory_space<semaphore_mem>>
    %685 = tpu.memref_squeeze %684 : memref<1x1x!tpu.dma_semaphore, #tpu.memory_space<semaphore_mem>> -> memref<!tpu.dma_semaphore, #tpu.memory_space<semaphore_mem>>
    tpu.wait_dma2 semaphore(%685 : memref<!tpu.dma_semaphore, #tpu.memory_space<semaphore_mem>>) src(%681 : memref<1x128xf32, #tpu.memory_space<any>>) dst(%683 : memref<1x128xf32, #tpu.memory_space<vmem>>)
    %c1_i32_705 = arith.constant 1 : i32
    %c1_i32_706 = arith.constant 1 : i32
    %c3_i32_707 = arith.constant 3 : i32
    %c0_i32_708 = arith.constant 0 : i32
    %c0_i32_709 = arith.constant 0 : i32
    %686 = tpu.memref_slice %arg2[%c0_i32_708, %c0_i32_709] : memref<16384x128xf32, #tpu.memory_space<any>> -> memref<1x128xf32, #tpu.memory_space<any>>
    %c3_i32_710 = arith.constant 3 : i32
    %c0_i32_711 = arith.constant 0 : i32
    %687 = tpu.memref_slice %arg4[%c1_i32_705, %c3_i32_710, %c0_i32_711] : memref<2x8x128xf32, #tpu.memory_space<vmem>> -> memref<1x1x128xf32, #tpu.memory_space<vmem>>
    %688 = tpu.memref_squeeze %687 : memref<1x1x128xf32, #tpu.memory_space<vmem>> -> memref<1x128xf32, #tpu.memory_space<vmem>>
    %689 = tpu.memref_slice %arg5[%c1_i32_706, %c3_i32_707] : memref<2x8x!tpu.dma_semaphore, #tpu.memory_space<semaphore_mem>> -> memref<1x1x!tpu.dma_semaphore, #tpu.memory_space<semaphore_mem>>
    %690 = tpu.memref_squeeze %689 : memref<1x1x!tpu.dma_semaphore, #tpu.memory_space<semaphore_mem>> -> memref<!tpu.dma_semaphore, #tpu.memory_space<semaphore_mem>>
    tpu.wait_dma2 semaphore(%690 : memref<!tpu.dma_semaphore, #tpu.memory_space<semaphore_mem>>) src(%686 : memref<1x128xf32, #tpu.memory_space<any>>) dst(%688 : memref<1x128xf32, #tpu.memory_space<vmem>>)
    %c1_i32_712 = arith.constant 1 : i32
    %c1_i32_713 = arith.constant 1 : i32
    %c4_i32_714 = arith.constant 4 : i32
    %c0_i32_715 = arith.constant 0 : i32
    %c0_i32_716 = arith.constant 0 : i32
    %691 = tpu.memref_slice %arg2[%c0_i32_715, %c0_i32_716] : memref<16384x128xf32, #tpu.memory_space<any>> -> memref<1x128xf32, #tpu.memory_space<any>>
    %c4_i32_717 = arith.constant 4 : i32
    %c0_i32_718 = arith.constant 0 : i32
    %692 = tpu.memref_slice %arg4[%c1_i32_712, %c4_i32_717, %c0_i32_718] : memref<2x8x128xf32, #tpu.memory_space<vmem>> -> memref<1x1x128xf32, #tpu.memory_space<vmem>>
    %693 = tpu.memref_squeeze %692 : memref<1x1x128xf32, #tpu.memory_space<vmem>> -> memref<1x128xf32, #tpu.memory_space<vmem>>
    %694 = tpu.memref_slice %arg5[%c1_i32_713, %c4_i32_714] : memref<2x8x!tpu.dma_semaphore, #tpu.memory_space<semaphore_mem>> -> memref<1x1x!tpu.dma_semaphore, #tpu.memory_space<semaphore_mem>>
    %695 = tpu.memref_squeeze %694 : memref<1x1x!tpu.dma_semaphore, #tpu.memory_space<semaphore_mem>> -> memref<!tpu.dma_semaphore, #tpu.memory_space<semaphore_mem>>
    tpu.wait_dma2 semaphore(%695 : memref<!tpu.dma_semaphore, #tpu.memory_space<semaphore_mem>>) src(%691 : memref<1x128xf32, #tpu.memory_space<any>>) dst(%693 : memref<1x128xf32, #tpu.memory_space<vmem>>)
    %c1_i32_719 = arith.constant 1 : i32
    %c1_i32_720 = arith.constant 1 : i32
    %c5_i32_721 = arith.constant 5 : i32
    %c0_i32_722 = arith.constant 0 : i32
    %c0_i32_723 = arith.constant 0 : i32
    %696 = tpu.memref_slice %arg2[%c0_i32_722, %c0_i32_723] : memref<16384x128xf32, #tpu.memory_space<any>> -> memref<1x128xf32, #tpu.memory_space<any>>
    %c5_i32_724 = arith.constant 5 : i32
    %c0_i32_725 = arith.constant 0 : i32
    %697 = tpu.memref_slice %arg4[%c1_i32_719, %c5_i32_724, %c0_i32_725] : memref<2x8x128xf32, #tpu.memory_space<vmem>> -> memref<1x1x128xf32, #tpu.memory_space<vmem>>
    %698 = tpu.memref_squeeze %697 : memref<1x1x128xf32, #tpu.memory_space<vmem>> -> memref<1x128xf32, #tpu.memory_space<vmem>>
    %699 = tpu.memref_slice %arg5[%c1_i32_720, %c5_i32_721] : memref<2x8x!tpu.dma_semaphore, #tpu.memory_space<semaphore_mem>> -> memref<1x1x!tpu.dma_semaphore, #tpu.memory_space<semaphore_mem>>
    %700 = tpu.memref_squeeze %699 : memref<1x1x!tpu.dma_semaphore, #tpu.memory_space<semaphore_mem>> -> memref<!tpu.dma_semaphore, #tpu.memory_space<semaphore_mem>>
    tpu.wait_dma2 semaphore(%700 : memref<!tpu.dma_semaphore, #tpu.memory_space<semaphore_mem>>) src(%696 : memref<1x128xf32, #tpu.memory_space<any>>) dst(%698 : memref<1x128xf32, #tpu.memory_space<vmem>>)
    %c1_i32_726 = arith.constant 1 : i32
    %c1_i32_727 = arith.constant 1 : i32
    %c6_i32_728 = arith.constant 6 : i32
    %c0_i32_729 = arith.constant 0 : i32
    %c0_i32_730 = arith.constant 0 : i32
    %701 = tpu.memref_slice %arg2[%c0_i32_729, %c0_i32_730] : memref<16384x128xf32, #tpu.memory_space<any>> -> memref<1x128xf32, #tpu.memory_space<any>>
    %c6_i32_731 = arith.constant 6 : i32
    %c0_i32_732 = arith.constant 0 : i32
    %702 = tpu.memref_slice %arg4[%c1_i32_726, %c6_i32_731, %c0_i32_732] : memref<2x8x128xf32, #tpu.memory_space<vmem>> -> memref<1x1x128xf32, #tpu.memory_space<vmem>>
    %703 = tpu.memref_squeeze %702 : memref<1x1x128xf32, #tpu.memory_space<vmem>> -> memref<1x128xf32, #tpu.memory_space<vmem>>
    %704 = tpu.memref_slice %arg5[%c1_i32_727, %c6_i32_728] : memref<2x8x!tpu.dma_semaphore, #tpu.memory_space<semaphore_mem>> -> memref<1x1x!tpu.dma_semaphore, #tpu.memory_space<semaphore_mem>>
    %705 = tpu.memref_squeeze %704 : memref<1x1x!tpu.dma_semaphore, #tpu.memory_space<semaphore_mem>> -> memref<!tpu.dma_semaphore, #tpu.memory_space<semaphore_mem>>
    tpu.wait_dma2 semaphore(%705 : memref<!tpu.dma_semaphore, #tpu.memory_space<semaphore_mem>>) src(%701 : memref<1x128xf32, #tpu.memory_space<any>>) dst(%703 : memref<1x128xf32, #tpu.memory_space<vmem>>)
    %c1_i32_733 = arith.constant 1 : i32
    %c1_i32_734 = arith.constant 1 : i32
    %c7_i32_735 = arith.constant 7 : i32
    %c0_i32_736 = arith.constant 0 : i32
    %c0_i32_737 = arith.constant 0 : i32
    %706 = tpu.memref_slice %arg2[%c0_i32_736, %c0_i32_737] : memref<16384x128xf32, #tpu.memory_space<any>> -> memref<1x128xf32, #tpu.memory_space<any>>
    %c7_i32_738 = arith.constant 7 : i32
    %c0_i32_739 = arith.constant 0 : i32
    %707 = tpu.memref_slice %arg4[%c1_i32_733, %c7_i32_738, %c0_i32_739] : memref<2x8x128xf32, #tpu.memory_space<vmem>> -> memref<1x1x128xf32, #tpu.memory_space<vmem>>
    %708 = tpu.memref_squeeze %707 : memref<1x1x128xf32, #tpu.memory_space<vmem>> -> memref<1x128xf32, #tpu.memory_space<vmem>>
    %709 = tpu.memref_slice %arg5[%c1_i32_734, %c7_i32_735] : memref<2x8x!tpu.dma_semaphore, #tpu.memory_space<semaphore_mem>> -> memref<1x1x!tpu.dma_semaphore, #tpu.memory_space<semaphore_mem>>
    %710 = tpu.memref_squeeze %709 : memref<1x1x!tpu.dma_semaphore, #tpu.memory_space<semaphore_mem>> -> memref<!tpu.dma_semaphore, #tpu.memory_space<semaphore_mem>>
    tpu.wait_dma2 semaphore(%710 : memref<!tpu.dma_semaphore, #tpu.memory_space<semaphore_mem>>) src(%706 : memref<1x128xf32, #tpu.memory_space<any>>) dst(%708 : memref<1x128xf32, #tpu.memory_space<vmem>>)
    %c1_740 = arith.constant 1 : index
    %c0_741 = arith.constant 0 : index
    %c0_742 = arith.constant 0 : index
    %711 = vector.load %arg4[%c1_740, %c0_741, %c0_742] : memref<2x8x128xf32, #tpu.memory_space<vmem>>, vector<1x8x128xf32>
    %712 = vector.shape_cast %711 : vector<1x8x128xf32> to vector<8x128xf32>
    %c40 = arith.constant 40 : index
    %c0_743 = arith.constant 0 : index
    %713 = vector.load %arg3[%c40, %c0_743] : memref<64x128xf32, #tpu.memory_space<vmem>>, vector<8x128xf32>
    tpu.vector_store %arg3[%c40, %c0_743], %712 {strides = array<i32>} : memref<64x128xf32, #tpu.memory_space<vmem>>, vector<8x128xf32>,
    %c56_i32 = arith.constant 56 : i32
    %714 = arith.addi %0, %c56_i32 : i32
    %c0_i32_744 = arith.constant 0 : i32
    %715 = arith.addi %714, %c0_i32_744 : i32
    %716 = arith.index_cast %715 : i32 to index
    %717 = memref.load %arg1[%716] : memref<64xi32, #tpu.memory_space<smem>>
    %c1_i32_745 = arith.constant 1 : i32
    %c1_i32_746 = arith.constant 1 : i32
    %c0_i32_747 = arith.constant 0 : i32
    %c0_i32_748 = arith.constant 0 : i32
    %718 = tpu.memref_slice %arg2[%717, %c0_i32_748] : memref<16384x128xf32, #tpu.memory_space<any>> -> memref<1x128xf32, #tpu.memory_space<any>>
    %c0_i32_749 = arith.constant 0 : i32
    %c0_i32_750 = arith.constant 0 : i32
    %719 = tpu.memref_slice %arg4[%c1_i32_745, %c0_i32_749, %c0_i32_750] : memref<2x8x128xf32, #tpu.memory_space<vmem>> -> memref<1x1x128xf32, #tpu.memory_space<vmem>>
    %720 = tpu.memref_squeeze %719 : memref<1x1x128xf32, #tpu.memory_space<vmem>> -> memref<1x128xf32, #tpu.memory_space<vmem>>
    %721 = tpu.memref_slice %arg5[%c1_i32_746, %c0_i32_747] : memref<2x8x!tpu.dma_semaphore, #tpu.memory_space<semaphore_mem>> -> memref<1x1x!tpu.dma_semaphore, #tpu.memory_space<semaphore_mem>>
    %722 = tpu.memref_squeeze %721 : memref<1x1x!tpu.dma_semaphore, #tpu.memory_space<semaphore_mem>> -> memref<!tpu.dma_semaphore, #tpu.memory_space<semaphore_mem>>
    tpu.enqueue_dma source(%718 : memref<1x128xf32, #tpu.memory_space<any>>) target(%720 : memref<1x128xf32, #tpu.memory_space<vmem>>) target_semaphore(%722 : memref<!tpu.dma_semaphore, #tpu.memory_space<semaphore_mem>>)
    %c1_i32_751 = arith.constant 1 : i32
    %723 = arith.addi %714, %c1_i32_751 : i32
    %724 = arith.index_cast %723 : i32 to index
    %725 = memref.load %arg1[%724] : memref<64xi32, #tpu.memory_space<smem>>
    %c1_i32_752 = arith.constant 1 : i32
    %c1_i32_753 = arith.constant 1 : i32
    %c1_i32_754 = arith.constant 1 : i32
    %c0_i32_755 = arith.constant 0 : i32
    %726 = tpu.memref_slice %arg2[%725, %c0_i32_755] : memref<16384x128xf32, #tpu.memory_space<any>> -> memref<1x128xf32, #tpu.memory_space<any>>
    %c1_i32_756 = arith.constant 1 : i32
    %c0_i32_757 = arith.constant 0 : i32
    %727 = tpu.memref_slice %arg4[%c1_i32_752, %c1_i32_756, %c0_i32_757] : memref<2x8x128xf32, #tpu.memory_space<vmem>> -> memref<1x1x128xf32, #tpu.memory_space<vmem>>
    %728 = tpu.memref_squeeze %727 : memref<1x1x128xf32, #tpu.memory_space<vmem>> -> memref<1x128xf32, #tpu.memory_space<vmem>>
    %729 = tpu.memref_slice %arg5[%c1_i32_753, %c1_i32_754] : memref<2x8x!tpu.dma_semaphore, #tpu.memory_space<semaphore_mem>> -> memref<1x1x!tpu.dma_semaphore, #tpu.memory_space<semaphore_mem>>
    %730 = tpu.memref_squeeze %729 : memref<1x1x!tpu.dma_semaphore, #tpu.memory_space<semaphore_mem>> -> memref<!tpu.dma_semaphore, #tpu.memory_space<semaphore_mem>>
    tpu.enqueue_dma source(%726 : memref<1x128xf32, #tpu.memory_space<any>>) target(%728 : memref<1x128xf32, #tpu.memory_space<vmem>>) target_semaphore(%730 : memref<!tpu.dma_semaphore, #tpu.memory_space<semaphore_mem>>)
    %c2_i32_758 = arith.constant 2 : i32
    %731 = arith.addi %714, %c2_i32_758 : i32
    %732 = arith.index_cast %731 : i32 to index
    %733 = memref.load %arg1[%732] : memref<64xi32, #tpu.memory_space<smem>>
    %c1_i32_759 = arith.constant 1 : i32
    %c1_i32_760 = arith.constant 1 : i32
    %c2_i32_761 = arith.constant 2 : i32
    %c0_i32_762 = arith.constant 0 : i32
    %734 = tpu.memref_slice %arg2[%733, %c0_i32_762] : memref<16384x128xf32, #tpu.memory_space<any>> -> memref<1x128xf32, #tpu.memory_space<any>>
    %c2_i32_763 = arith.constant 2 : i32
    %c0_i32_764 = arith.constant 0 : i32
    %735 = tpu.memref_slice %arg4[%c1_i32_759, %c2_i32_763, %c0_i32_764] : memref<2x8x128xf32, #tpu.memory_space<vmem>> -> memref<1x1x128xf32, #tpu.memory_space<vmem>>
    %736 = tpu.memref_squeeze %735 : memref<1x1x128xf32, #tpu.memory_space<vmem>> -> memref<1x128xf32, #tpu.memory_space<vmem>>
    %737 = tpu.memref_slice %arg5[%c1_i32_760, %c2_i32_761] : memref<2x8x!tpu.dma_semaphore, #tpu.memory_space<semaphore_mem>> -> memref<1x1x!tpu.dma_semaphore, #tpu.memory_space<semaphore_mem>>
    %738 = tpu.memref_squeeze %737 : memref<1x1x!tpu.dma_semaphore, #tpu.memory_space<semaphore_mem>> -> memref<!tpu.dma_semaphore, #tpu.memory_space<semaphore_mem>>
    tpu.enqueue_dma source(%734 : memref<1x128xf32, #tpu.memory_space<any>>) target(%736 : memref<1x128xf32, #tpu.memory_space<vmem>>) target_semaphore(%738 : memref<!tpu.dma_semaphore, #tpu.memory_space<semaphore_mem>>)
    %c3_i32_765 = arith.constant 3 : i32
    %739 = arith.addi %714, %c3_i32_765 : i32
    %740 = arith.index_cast %739 : i32 to index
    %741 = memref.load %arg1[%740] : memref<64xi32, #tpu.memory_space<smem>>
    %c1_i32_766 = arith.constant 1 : i32
    %c1_i32_767 = arith.constant 1 : i32
    %c3_i32_768 = arith.constant 3 : i32
    %c0_i32_769 = arith.constant 0 : i32
    %742 = tpu.memref_slice %arg2[%741, %c0_i32_769] : memref<16384x128xf32, #tpu.memory_space<any>> -> memref<1x128xf32, #tpu.memory_space<any>>
    %c3_i32_770 = arith.constant 3 : i32
    %c0_i32_771 = arith.constant 0 : i32
    %743 = tpu.memref_slice %arg4[%c1_i32_766, %c3_i32_770, %c0_i32_771] : memref<2x8x128xf32, #tpu.memory_space<vmem>> -> memref<1x1x128xf32, #tpu.memory_space<vmem>>
    %744 = tpu.memref_squeeze %743 : memref<1x1x128xf32, #tpu.memory_space<vmem>> -> memref<1x128xf32, #tpu.memory_space<vmem>>
    %745 = tpu.memref_slice %arg5[%c1_i32_767, %c3_i32_768] : memref<2x8x!tpu.dma_semaphore, #tpu.memory_space<semaphore_mem>> -> memref<1x1x!tpu.dma_semaphore, #tpu.memory_space<semaphore_mem>>
    %746 = tpu.memref_squeeze %745 : memref<1x1x!tpu.dma_semaphore, #tpu.memory_space<semaphore_mem>> -> memref<!tpu.dma_semaphore, #tpu.memory_space<semaphore_mem>>
    tpu.enqueue_dma source(%742 : memref<1x128xf32, #tpu.memory_space<any>>) target(%744 : memref<1x128xf32, #tpu.memory_space<vmem>>) target_semaphore(%746 : memref<!tpu.dma_semaphore, #tpu.memory_space<semaphore_mem>>)
    %c4_i32_772 = arith.constant 4 : i32
    %747 = arith.addi %714, %c4_i32_772 : i32
    %748 = arith.index_cast %747 : i32 to index
    %749 = memref.load %arg1[%748] : memref<64xi32, #tpu.memory_space<smem>>
    %c1_i32_773 = arith.constant 1 : i32
    %c1_i32_774 = arith.constant 1 : i32
    %c4_i32_775 = arith.constant 4 : i32
    %c0_i32_776 = arith.constant 0 : i32
    %750 = tpu.memref_slice %arg2[%749, %c0_i32_776] : memref<16384x128xf32, #tpu.memory_space<any>> -> memref<1x128xf32, #tpu.memory_space<any>>
    %c4_i32_777 = arith.constant 4 : i32
    %c0_i32_778 = arith.constant 0 : i32
    %751 = tpu.memref_slice %arg4[%c1_i32_773, %c4_i32_777, %c0_i32_778] : memref<2x8x128xf32, #tpu.memory_space<vmem>> -> memref<1x1x128xf32, #tpu.memory_space<vmem>>
    %752 = tpu.memref_squeeze %751 : memref<1x1x128xf32, #tpu.memory_space<vmem>> -> memref<1x128xf32, #tpu.memory_space<vmem>>
    %753 = tpu.memref_slice %arg5[%c1_i32_774, %c4_i32_775] : memref<2x8x!tpu.dma_semaphore, #tpu.memory_space<semaphore_mem>> -> memref<1x1x!tpu.dma_semaphore, #tpu.memory_space<semaphore_mem>>
    %754 = tpu.memref_squeeze %753 : memref<1x1x!tpu.dma_semaphore, #tpu.memory_space<semaphore_mem>> -> memref<!tpu.dma_semaphore, #tpu.memory_space<semaphore_mem>>
    tpu.enqueue_dma source(%750 : memref<1x128xf32, #tpu.memory_space<any>>) target(%752 : memref<1x128xf32, #tpu.memory_space<vmem>>) target_semaphore(%754 : memref<!tpu.dma_semaphore, #tpu.memory_space<semaphore_mem>>)
    %c5_i32_779 = arith.constant 5 : i32
    %755 = arith.addi %714, %c5_i32_779 : i32
    %756 = arith.index_cast %755 : i32 to index
    %757 = memref.load %arg1[%756] : memref<64xi32, #tpu.memory_space<smem>>
    %c1_i32_780 = arith.constant 1 : i32
    %c1_i32_781 = arith.constant 1 : i32
    %c5_i32_782 = arith.constant 5 : i32
    %c0_i32_783 = arith.constant 0 : i32
    %758 = tpu.memref_slice %arg2[%757, %c0_i32_783] : memref<16384x128xf32, #tpu.memory_space<any>> -> memref<1x128xf32, #tpu.memory_space<any>>
    %c5_i32_784 = arith.constant 5 : i32
    %c0_i32_785 = arith.constant 0 : i32
    %759 = tpu.memref_slice %arg4[%c1_i32_780, %c5_i32_784, %c0_i32_785] : memref<2x8x128xf32, #tpu.memory_space<vmem>> -> memref<1x1x128xf32, #tpu.memory_space<vmem>>
    %760 = tpu.memref_squeeze %759 : memref<1x1x128xf32, #tpu.memory_space<vmem>> -> memref<1x128xf32, #tpu.memory_space<vmem>>
    %761 = tpu.memref_slice %arg5[%c1_i32_781, %c5_i32_782] : memref<2x8x!tpu.dma_semaphore, #tpu.memory_space<semaphore_mem>> -> memref<1x1x!tpu.dma_semaphore, #tpu.memory_space<semaphore_mem>>
    %762 = tpu.memref_squeeze %761 : memref<1x1x!tpu.dma_semaphore, #tpu.memory_space<semaphore_mem>> -> memref<!tpu.dma_semaphore, #tpu.memory_space<semaphore_mem>>
    tpu.enqueue_dma source(%758 : memref<1x128xf32, #tpu.memory_space<any>>) target(%760 : memref<1x128xf32, #tpu.memory_space<vmem>>) target_semaphore(%762 : memref<!tpu.dma_semaphore, #tpu.memory_space<semaphore_mem>>)
    %c6_i32_786 = arith.constant 6 : i32
    %763 = arith.addi %714, %c6_i32_786 : i32
    %764 = arith.index_cast %763 : i32 to index
    %765 = memref.load %arg1[%764] : memref<64xi32, #tpu.memory_space<smem>>
    %c1_i32_787 = arith.constant 1 : i32
    %c1_i32_788 = arith.constant 1 : i32
    %c6_i32_789 = arith.constant 6 : i32
    %c0_i32_790 = arith.constant 0 : i32
    %766 = tpu.memref_slice %arg2[%765, %c0_i32_790] : memref<16384x128xf32, #tpu.memory_space<any>> -> memref<1x128xf32, #tpu.memory_space<any>>
    %c6_i32_791 = arith.constant 6 : i32
    %c0_i32_792 = arith.constant 0 : i32
    %767 = tpu.memref_slice %arg4[%c1_i32_787, %c6_i32_791, %c0_i32_792] : memref<2x8x128xf32, #tpu.memory_space<vmem>> -> memref<1x1x128xf32, #tpu.memory_space<vmem>>
    %768 = tpu.memref_squeeze %767 : memref<1x1x128xf32, #tpu.memory_space<vmem>> -> memref<1x128xf32, #tpu.memory_space<vmem>>
    %769 = tpu.memref_slice %arg5[%c1_i32_788, %c6_i32_789] : memref<2x8x!tpu.dma_semaphore, #tpu.memory_space<semaphore_mem>> -> memref<1x1x!tpu.dma_semaphore, #tpu.memory_space<semaphore_mem>>
    %770 = tpu.memref_squeeze %769 : memref<1x1x!tpu.dma_semaphore, #tpu.memory_space<semaphore_mem>> -> memref<!tpu.dma_semaphore, #tpu.memory_space<semaphore_mem>>
    tpu.enqueue_dma source(%766 : memref<1x128xf32, #tpu.memory_space<any>>) target(%768 : memref<1x128xf32, #tpu.memory_space<vmem>>) target_semaphore(%770 : memref<!tpu.dma_semaphore, #tpu.memory_space<semaphore_mem>>)
    %c7_i32_793 = arith.constant 7 : i32
    %771 = arith.addi %714, %c7_i32_793 : i32
    %772 = arith.index_cast %771 : i32 to index
    %773 = memref.load %arg1[%772] : memref<64xi32, #tpu.memory_space<smem>>
    %c1_i32_794 = arith.constant 1 : i32
    %c1_i32_795 = arith.constant 1 : i32
    %c7_i32_796 = arith.constant 7 : i32
    %c0_i32_797 = arith.constant 0 : i32
    %774 = tpu.memref_slice %arg2[%773, %c0_i32_797] : memref<16384x128xf32, #tpu.memory_space<any>> -> memref<1x128xf32, #tpu.memory_space<any>>
    %c7_i32_798 = arith.constant 7 : i32
    %c0_i32_799 = arith.constant 0 : i32
    %775 = tpu.memref_slice %arg4[%c1_i32_794, %c7_i32_798, %c0_i32_799] : memref<2x8x128xf32, #tpu.memory_space<vmem>> -> memref<1x1x128xf32, #tpu.memory_space<vmem>>
    %776 = tpu.memref_squeeze %775 : memref<1x1x128xf32, #tpu.memory_space<vmem>> -> memref<1x128xf32, #tpu.memory_space<vmem>>
    %777 = tpu.memref_slice %arg5[%c1_i32_795, %c7_i32_796] : memref<2x8x!tpu.dma_semaphore, #tpu.memory_space<semaphore_mem>> -> memref<1x1x!tpu.dma_semaphore, #tpu.memory_space<semaphore_mem>>
    %778 = tpu.memref_squeeze %777 : memref<1x1x!tpu.dma_semaphore, #tpu.memory_space<semaphore_mem>> -> memref<!tpu.dma_semaphore, #tpu.memory_space<semaphore_mem>>
    tpu.enqueue_dma source(%774 : memref<1x128xf32, #tpu.memory_space<any>>) target(%776 : memref<1x128xf32, #tpu.memory_space<vmem>>) target_semaphore(%778 : memref<!tpu.dma_semaphore, #tpu.memory_space<semaphore_mem>>)
    %c0_i32_800 = arith.constant 0 : i32
    %c0_i32_801 = arith.constant 0 : i32
    %c0_i32_802 = arith.constant 0 : i32
    %c0_i32_803 = arith.constant 0 : i32
    %c0_i32_804 = arith.constant 0 : i32
    %779 = tpu.memref_slice %arg2[%c0_i32_803, %c0_i32_804] : memref<16384x128xf32, #tpu.memory_space<any>> -> memref<1x128xf32, #tpu.memory_space<any>>
    %c0_i32_805 = arith.constant 0 : i32
    %c0_i32_806 = arith.constant 0 : i32
    %780 = tpu.memref_slice %arg4[%c0_i32_800, %c0_i32_805, %c0_i32_806] : memref<2x8x128xf32, #tpu.memory_space<vmem>> -> memref<1x1x128xf32, #tpu.memory_space<vmem>>
    %781 = tpu.memref_squeeze %780 : memref<1x1x128xf32, #tpu.memory_space<vmem>> -> memref<1x128xf32, #tpu.memory_space<vmem>>
    %782 = tpu.memref_slice %arg5[%c0_i32_801, %c0_i32_802] : memref<2x8x!tpu.dma_semaphore, #tpu.memory_space<semaphore_mem>> -> memref<1x1x!tpu.dma_semaphore, #tpu.memory_space<semaphore_mem>>
    %783 = tpu.memref_squeeze %782 : memref<1x1x!tpu.dma_semaphore, #tpu.memory_space<semaphore_mem>> -> memref<!tpu.dma_semaphore, #tpu.memory_space<semaphore_mem>>
    tpu.wait_dma2 semaphore(%783 : memref<!tpu.dma_semaphore, #tpu.memory_space<semaphore_mem>>) src(%779 : memref<1x128xf32, #tpu.memory_space<any>>) dst(%781 : memref<1x128xf32, #tpu.memory_space<vmem>>)
    %c0_i32_807 = arith.constant 0 : i32
    %c0_i32_808 = arith.constant 0 : i32
    %c1_i32_809 = arith.constant 1 : i32
    %c0_i32_810 = arith.constant 0 : i32
    %c0_i32_811 = arith.constant 0 : i32
    %784 = tpu.memref_slice %arg2[%c0_i32_810, %c0_i32_811] : memref<16384x128xf32, #tpu.memory_space<any>> -> memref<1x128xf32, #tpu.memory_space<any>>
    %c1_i32_812 = arith.constant 1 : i32
    %c0_i32_813 = arith.constant 0 : i32
    %785 = tpu.memref_slice %arg4[%c0_i32_807, %c1_i32_812, %c0_i32_813] : memref<2x8x128xf32, #tpu.memory_space<vmem>> -> memref<1x1x128xf32, #tpu.memory_space<vmem>>
    %786 = tpu.memref_squeeze %785 : memref<1x1x128xf32, #tpu.memory_space<vmem>> -> memref<1x128xf32, #tpu.memory_space<vmem>>
    %787 = tpu.memref_slice %arg5[%c0_i32_808, %c1_i32_809] : memref<2x8x!tpu.dma_semaphore, #tpu.memory_space<semaphore_mem>> -> memref<1x1x!tpu.dma_semaphore, #tpu.memory_space<semaphore_mem>>
    %788 = tpu.memref_squeeze %787 : memref<1x1x!tpu.dma_semaphore, #tpu.memory_space<semaphore_mem>> -> memref<!tpu.dma_semaphore, #tpu.memory_space<semaphore_mem>>
    tpu.wait_dma2 semaphore(%788 : memref<!tpu.dma_semaphore, #tpu.memory_space<semaphore_mem>>) src(%784 : memref<1x128xf32, #tpu.memory_space<any>>) dst(%786 : memref<1x128xf32, #tpu.memory_space<vmem>>)
    %c0_i32_814 = arith.constant 0 : i32
    %c0_i32_815 = arith.constant 0 : i32
    %c2_i32_816 = arith.constant 2 : i32
    %c0_i32_817 = arith.constant 0 : i32
    %c0_i32_818 = arith.constant 0 : i32
    %789 = tpu.memref_slice %arg2[%c0_i32_817, %c0_i32_818] : memref<16384x128xf32, #tpu.memory_space<any>> -> memref<1x128xf32, #tpu.memory_space<any>>
    %c2_i32_819 = arith.constant 2 : i32
    %c0_i32_820 = arith.constant 0 : i32
    %790 = tpu.memref_slice %arg4[%c0_i32_814, %c2_i32_819, %c0_i32_820] : memref<2x8x128xf32, #tpu.memory_space<vmem>> -> memref<1x1x128xf32, #tpu.memory_space<vmem>>
    %791 = tpu.memref_squeeze %790 : memref<1x1x128xf32, #tpu.memory_space<vmem>> -> memref<1x128xf32, #tpu.memory_space<vmem>>
    %792 = tpu.memref_slice %arg5[%c0_i32_815, %c2_i32_816] : memref<2x8x!tpu.dma_semaphore, #tpu.memory_space<semaphore_mem>> -> memref<1x1x!tpu.dma_semaphore, #tpu.memory_space<semaphore_mem>>
    %793 = tpu.memref_squeeze %792 : memref<1x1x!tpu.dma_semaphore, #tpu.memory_space<semaphore_mem>> -> memref<!tpu.dma_semaphore, #tpu.memory_space<semaphore_mem>>
    tpu.wait_dma2 semaphore(%793 : memref<!tpu.dma_semaphore, #tpu.memory_space<semaphore_mem>>) src(%789 : memref<1x128xf32, #tpu.memory_space<any>>) dst(%791 : memref<1x128xf32, #tpu.memory_space<vmem>>)
    %c0_i32_821 = arith.constant 0 : i32
    %c0_i32_822 = arith.constant 0 : i32
    %c3_i32_823 = arith.constant 3 : i32
    %c0_i32_824 = arith.constant 0 : i32
    %c0_i32_825 = arith.constant 0 : i32
    %794 = tpu.memref_slice %arg2[%c0_i32_824, %c0_i32_825] : memref<16384x128xf32, #tpu.memory_space<any>> -> memref<1x128xf32, #tpu.memory_space<any>>
    %c3_i32_826 = arith.constant 3 : i32
    %c0_i32_827 = arith.constant 0 : i32
    %795 = tpu.memref_slice %arg4[%c0_i32_821, %c3_i32_826, %c0_i32_827] : memref<2x8x128xf32, #tpu.memory_space<vmem>> -> memref<1x1x128xf32, #tpu.memory_space<vmem>>
    %796 = tpu.memref_squeeze %795 : memref<1x1x128xf32, #tpu.memory_space<vmem>> -> memref<1x128xf32, #tpu.memory_space<vmem>>
    %797 = tpu.memref_slice %arg5[%c0_i32_822, %c3_i32_823] : memref<2x8x!tpu.dma_semaphore, #tpu.memory_space<semaphore_mem>> -> memref<1x1x!tpu.dma_semaphore, #tpu.memory_space<semaphore_mem>>
    %798 = tpu.memref_squeeze %797 : memref<1x1x!tpu.dma_semaphore, #tpu.memory_space<semaphore_mem>> -> memref<!tpu.dma_semaphore, #tpu.memory_space<semaphore_mem>>
    tpu.wait_dma2 semaphore(%798 : memref<!tpu.dma_semaphore, #tpu.memory_space<semaphore_mem>>) src(%794 : memref<1x128xf32, #tpu.memory_space<any>>) dst(%796 : memref<1x128xf32, #tpu.memory_space<vmem>>)
    %c0_i32_828 = arith.constant 0 : i32
    %c0_i32_829 = arith.constant 0 : i32
    %c4_i32_830 = arith.constant 4 : i32
    %c0_i32_831 = arith.constant 0 : i32
    %c0_i32_832 = arith.constant 0 : i32
    %799 = tpu.memref_slice %arg2[%c0_i32_831, %c0_i32_832] : memref<16384x128xf32, #tpu.memory_space<any>> -> memref<1x128xf32, #tpu.memory_space<any>>
    %c4_i32_833 = arith.constant 4 : i32
    %c0_i32_834 = arith.constant 0 : i32
    %800 = tpu.memref_slice %arg4[%c0_i32_828, %c4_i32_833, %c0_i32_834] : memref<2x8x128xf32, #tpu.memory_space<vmem>> -> memref<1x1x128xf32, #tpu.memory_space<vmem>>
    %801 = tpu.memref_squeeze %800 : memref<1x1x128xf32, #tpu.memory_space<vmem>> -> memref<1x128xf32, #tpu.memory_space<vmem>>
    %802 = tpu.memref_slice %arg5[%c0_i32_829, %c4_i32_830] : memref<2x8x!tpu.dma_semaphore, #tpu.memory_space<semaphore_mem>> -> memref<1x1x!tpu.dma_semaphore, #tpu.memory_space<semaphore_mem>>
    %803 = tpu.memref_squeeze %802 : memref<1x1x!tpu.dma_semaphore, #tpu.memory_space<semaphore_mem>> -> memref<!tpu.dma_semaphore, #tpu.memory_space<semaphore_mem>>
    tpu.wait_dma2 semaphore(%803 : memref<!tpu.dma_semaphore, #tpu.memory_space<semaphore_mem>>) src(%799 : memref<1x128xf32, #tpu.memory_space<any>>) dst(%801 : memref<1x128xf32, #tpu.memory_space<vmem>>)
    %c0_i32_835 = arith.constant 0 : i32
    %c0_i32_836 = arith.constant 0 : i32
    %c5_i32_837 = arith.constant 5 : i32
    %c0_i32_838 = arith.constant 0 : i32
    %c0_i32_839 = arith.constant 0 : i32
    %804 = tpu.memref_slice %arg2[%c0_i32_838, %c0_i32_839] : memref<16384x128xf32, #tpu.memory_space<any>> -> memref<1x128xf32, #tpu.memory_space<any>>
    %c5_i32_840 = arith.constant 5 : i32
    %c0_i32_841 = arith.constant 0 : i32
    %805 = tpu.memref_slice %arg4[%c0_i32_835, %c5_i32_840, %c0_i32_841] : memref<2x8x128xf32, #tpu.memory_space<vmem>> -> memref<1x1x128xf32, #tpu.memory_space<vmem>>
    %806 = tpu.memref_squeeze %805 : memref<1x1x128xf32, #tpu.memory_space<vmem>> -> memref<1x128xf32, #tpu.memory_space<vmem>>
    %807 = tpu.memref_slice %arg5[%c0_i32_836, %c5_i32_837] : memref<2x8x!tpu.dma_semaphore, #tpu.memory_space<semaphore_mem>> -> memref<1x1x!tpu.dma_semaphore, #tpu.memory_space<semaphore_mem>>
    %808 = tpu.memref_squeeze %807 : memref<1x1x!tpu.dma_semaphore, #tpu.memory_space<semaphore_mem>> -> memref<!tpu.dma_semaphore, #tpu.memory_space<semaphore_mem>>
    tpu.wait_dma2 semaphore(%808 : memref<!tpu.dma_semaphore, #tpu.memory_space<semaphore_mem>>) src(%804 : memref<1x128xf32, #tpu.memory_space<any>>) dst(%806 : memref<1x128xf32, #tpu.memory_space<vmem>>)
    %c0_i32_842 = arith.constant 0 : i32
    %c0_i32_843 = arith.constant 0 : i32
    %c6_i32_844 = arith.constant 6 : i32
    %c0_i32_845 = arith.constant 0 : i32
    %c0_i32_846 = arith.constant 0 : i32
    %809 = tpu.memref_slice %arg2[%c0_i32_845, %c0_i32_846] : memref<16384x128xf32, #tpu.memory_space<any>> -> memref<1x128xf32, #tpu.memory_space<any>>
    %c6_i32_847 = arith.constant 6 : i32
    %c0_i32_848 = arith.constant 0 : i32
    %810 = tpu.memref_slice %arg4[%c0_i32_842, %c6_i32_847, %c0_i32_848] : memref<2x8x128xf32, #tpu.memory_space<vmem>> -> memref<1x1x128xf32, #tpu.memory_space<vmem>>
    %811 = tpu.memref_squeeze %810 : memref<1x1x128xf32, #tpu.memory_space<vmem>> -> memref<1x128xf32, #tpu.memory_space<vmem>>
    %812 = tpu.memref_slice %arg5[%c0_i32_843, %c6_i32_844] : memref<2x8x!tpu.dma_semaphore, #tpu.memory_space<semaphore_mem>> -> memref<1x1x!tpu.dma_semaphore, #tpu.memory_space<semaphore_mem>>
    %813 = tpu.memref_squeeze %812 : memref<1x1x!tpu.dma_semaphore, #tpu.memory_space<semaphore_mem>> -> memref<!tpu.dma_semaphore, #tpu.memory_space<semaphore_mem>>
    tpu.wait_dma2 semaphore(%813 : memref<!tpu.dma_semaphore, #tpu.memory_space<semaphore_mem>>) src(%809 : memref<1x128xf32, #tpu.memory_space<any>>) dst(%811 : memref<1x128xf32, #tpu.memory_space<vmem>>)
    %c0_i32_849 = arith.constant 0 : i32
    %c0_i32_850 = arith.constant 0 : i32
    %c7_i32_851 = arith.constant 7 : i32
    %c0_i32_852 = arith.constant 0 : i32
    %c0_i32_853 = arith.constant 0 : i32
    %814 = tpu.memref_slice %arg2[%c0_i32_852, %c0_i32_853] : memref<16384x128xf32, #tpu.memory_space<any>> -> memref<1x128xf32, #tpu.memory_space<any>>
    %c7_i32_854 = arith.constant 7 : i32
    %c0_i32_855 = arith.constant 0 : i32
    %815 = tpu.memref_slice %arg4[%c0_i32_849, %c7_i32_854, %c0_i32_855] : memref<2x8x128xf32, #tpu.memory_space<vmem>> -> memref<1x1x128xf32, #tpu.memory_space<vmem>>
    %816 = tpu.memref_squeeze %815 : memref<1x1x128xf32, #tpu.memory_space<vmem>> -> memref<1x128xf32, #tpu.memory_space<vmem>>
    %817 = tpu.memref_slice %arg5[%c0_i32_850, %c7_i32_851] : memref<2x8x!tpu.dma_semaphore, #tpu.memory_space<semaphore_mem>> -> memref<1x1x!tpu.dma_semaphore, #tpu.memory_space<semaphore_mem>>
    %818 = tpu.memref_squeeze %817 : memref<1x1x!tpu.dma_semaphore, #tpu.memory_space<semaphore_mem>> -> memref<!tpu.dma_semaphore, #tpu.memory_space<semaphore_mem>>
    tpu.wait_dma2 semaphore(%818 : memref<!tpu.dma_semaphore, #tpu.memory_space<semaphore_mem>>) src(%814 : memref<1x128xf32, #tpu.memory_space<any>>) dst(%816 : memref<1x128xf32, #tpu.memory_space<vmem>>)
    %c0_856 = arith.constant 0 : index
    %c0_857 = arith.constant 0 : index
    %c0_858 = arith.constant 0 : index
    %819 = vector.load %arg4[%c0_856, %c0_857, %c0_858] : memref<2x8x128xf32, #tpu.memory_space<vmem>>, vector<1x8x128xf32>
    %820 = vector.shape_cast %819 : vector<1x8x128xf32> to vector<8x128xf32>
    %c48 = arith.constant 48 : index
    %c0_859 = arith.constant 0 : index
    %821 = vector.load %arg3[%c48, %c0_859] : memref<64x128xf32, #tpu.memory_space<vmem>>, vector<8x128xf32>
    tpu.vector_store %arg3[%c48, %c0_859], %820 {strides = array<i32>} : memref<64x128xf32, #tpu.memory_space<vmem>>, vector<8x128xf32>,
    %c1_i32_860 = arith.constant 1 : i32
    %c1_i32_861 = arith.constant 1 : i32
    %c0_i32_862 = arith.constant 0 : i32
    %c0_i32_863 = arith.constant 0 : i32
    %c0_i32_864 = arith.constant 0 : i32
    %822 = tpu.memref_slice %arg2[%c0_i32_863, %c0_i32_864] : memref<16384x128xf32, #tpu.memory_space<any>> -> memref<1x128xf32, #tpu.memory_space<any>>
    %c0_i32_865 = arith.constant 0 : i32
    %c0_i32_866 = arith.constant 0 : i32
    %823 = tpu.memref_slice %arg4[%c1_i32_860, %c0_i32_865, %c0_i32_866] : memref<2x8x128xf32, #tpu.memory_space<vmem>> -> memref<1x1x128xf32, #tpu.memory_space<vmem>>
    %824 = tpu.memref_squeeze %823 : memref<1x1x128xf32, #tpu.memory_space<vmem>> -> memref<1x128xf32, #tpu.memory_space<vmem>>
    %825 = tpu.memref_slice %arg5[%c1_i32_861, %c0_i32_862] : memref<2x8x!tpu.dma_semaphore, #tpu.memory_space<semaphore_mem>> -> memref<1x1x!tpu.dma_semaphore, #tpu.memory_space<semaphore_mem>>
    %826 = tpu.memref_squeeze %825 : memref<1x1x!tpu.dma_semaphore, #tpu.memory_space<semaphore_mem>> -> memref<!tpu.dma_semaphore, #tpu.memory_space<semaphore_mem>>
    tpu.wait_dma2 semaphore(%826 : memref<!tpu.dma_semaphore, #tpu.memory_space<semaphore_mem>>) src(%822 : memref<1x128xf32, #tpu.memory_space<any>>) dst(%824 : memref<1x128xf32, #tpu.memory_space<vmem>>)
    %c1_i32_867 = arith.constant 1 : i32
    %c1_i32_868 = arith.constant 1 : i32
    %c1_i32_869 = arith.constant 1 : i32
    %c0_i32_870 = arith.constant 0 : i32
    %c0_i32_871 = arith.constant 0 : i32
    %827 = tpu.memref_slice %arg2[%c0_i32_870, %c0_i32_871] : memref<16384x128xf32, #tpu.memory_space<any>> -> memref<1x128xf32, #tpu.memory_space<any>>
    %c1_i32_872 = arith.constant 1 : i32
    %c0_i32_873 = arith.constant 0 : i32
    %828 = tpu.memref_slice %arg4[%c1_i32_867, %c1_i32_872, %c0_i32_873] : memref<2x8x128xf32, #tpu.memory_space<vmem>> -> memref<1x1x128xf32, #tpu.memory_space<vmem>>
    %829 = tpu.memref_squeeze %828 : memref<1x1x128xf32, #tpu.memory_space<vmem>> -> memref<1x128xf32, #tpu.memory_space<vmem>>
    %830 = tpu.memref_slice %arg5[%c1_i32_868, %c1_i32_869] : memref<2x8x!tpu.dma_semaphore, #tpu.memory_space<semaphore_mem>> -> memref<1x1x!tpu.dma_semaphore, #tpu.memory_space<semaphore_mem>>
    %831 = tpu.memref_squeeze %830 : memref<1x1x!tpu.dma_semaphore, #tpu.memory_space<semaphore_mem>> -> memref<!tpu.dma_semaphore, #tpu.memory_space<semaphore_mem>>
    tpu.wait_dma2 semaphore(%831 : memref<!tpu.dma_semaphore, #tpu.memory_space<semaphore_mem>>) src(%827 : memref<1x128xf32, #tpu.memory_space<any>>) dst(%829 : memref<1x128xf32, #tpu.memory_space<vmem>>)
    %c1_i32_874 = arith.constant 1 : i32
    %c1_i32_875 = arith.constant 1 : i32
    %c2_i32_876 = arith.constant 2 : i32
    %c0_i32_877 = arith.constant 0 : i32
    %c0_i32_878 = arith.constant 0 : i32
    %832 = tpu.memref_slice %arg2[%c0_i32_877, %c0_i32_878] : memref<16384x128xf32, #tpu.memory_space<any>> -> memref<1x128xf32, #tpu.memory_space<any>>
    %c2_i32_879 = arith.constant 2 : i32
    %c0_i32_880 = arith.constant 0 : i32
    %833 = tpu.memref_slice %arg4[%c1_i32_874, %c2_i32_879, %c0_i32_880] : memref<2x8x128xf32, #tpu.memory_space<vmem>> -> memref<1x1x128xf32, #tpu.memory_space<vmem>>
    %834 = tpu.memref_squeeze %833 : memref<1x1x128xf32, #tpu.memory_space<vmem>> -> memref<1x128xf32, #tpu.memory_space<vmem>>
    %835 = tpu.memref_slice %arg5[%c1_i32_875, %c2_i32_876] : memref<2x8x!tpu.dma_semaphore, #tpu.memory_space<semaphore_mem>> -> memref<1x1x!tpu.dma_semaphore, #tpu.memory_space<semaphore_mem>>
    %836 = tpu.memref_squeeze %835 : memref<1x1x!tpu.dma_semaphore, #tpu.memory_space<semaphore_mem>> -> memref<!tpu.dma_semaphore, #tpu.memory_space<semaphore_mem>>
    tpu.wait_dma2 semaphore(%836 : memref<!tpu.dma_semaphore, #tpu.memory_space<semaphore_mem>>) src(%832 : memref<1x128xf32, #tpu.memory_space<any>>) dst(%834 : memref<1x128xf32, #tpu.memory_space<vmem>>)
    %c1_i32_881 = arith.constant 1 : i32
    %c1_i32_882 = arith.constant 1 : i32
    %c3_i32_883 = arith.constant 3 : i32
    %c0_i32_884 = arith.constant 0 : i32
    %c0_i32_885 = arith.constant 0 : i32
    %837 = tpu.memref_slice %arg2[%c0_i32_884, %c0_i32_885] : memref<16384x128xf32, #tpu.memory_space<any>> -> memref<1x128xf32, #tpu.memory_space<any>>
    %c3_i32_886 = arith.constant 3 : i32
    %c0_i32_887 = arith.constant 0 : i32
    %838 = tpu.memref_slice %arg4[%c1_i32_881, %c3_i32_886, %c0_i32_887] : memref<2x8x128xf32, #tpu.memory_space<vmem>> -> memref<1x1x128xf32, #tpu.memory_space<vmem>>
    %839 = tpu.memref_squeeze %838 : memref<1x1x128xf32, #tpu.memory_space<vmem>> -> memref<1x128xf32, #tpu.memory_space<vmem>>
    %840 = tpu.memref_slice %arg5[%c1_i32_882, %c3_i32_883] : memref<2x8x!tpu.dma_semaphore, #tpu.memory_space<semaphore_mem>> -> memref<1x1x!tpu.dma_semaphore, #tpu.memory_space<semaphore_mem>>
    %841 = tpu.memref_squeeze %840 : memref<1x1x!tpu.dma_semaphore, #tpu.memory_space<semaphore_mem>> -> memref<!tpu.dma_semaphore, #tpu.memory_space<semaphore_mem>>
    tpu.wait_dma2 semaphore(%841 : memref<!tpu.dma_semaphore, #tpu.memory_space<semaphore_mem>>) src(%837 : memref<1x128xf32, #tpu.memory_space<any>>) dst(%839 : memref<1x128xf32, #tpu.memory_space<vmem>>)
    %c1_i32_888 = arith.constant 1 : i32
    %c1_i32_889 = arith.constant 1 : i32
    %c4_i32_890 = arith.constant 4 : i32
    %c0_i32_891 = arith.constant 0 : i32
    %c0_i32_892 = arith.constant 0 : i32
    %842 = tpu.memref_slice %arg2[%c0_i32_891, %c0_i32_892] : memref<16384x128xf32, #tpu.memory_space<any>> -> memref<1x128xf32, #tpu.memory_space<any>>
    %c4_i32_893 = arith.constant 4 : i32
    %c0_i32_894 = arith.constant 0 : i32
    %843 = tpu.memref_slice %arg4[%c1_i32_888, %c4_i32_893, %c0_i32_894] : memref<2x8x128xf32, #tpu.memory_space<vmem>> -> memref<1x1x128xf32, #tpu.memory_space<vmem>>
    %844 = tpu.memref_squeeze %843 : memref<1x1x128xf32, #tpu.memory_space<vmem>> -> memref<1x128xf32, #tpu.memory_space<vmem>>
    %845 = tpu.memref_slice %arg5[%c1_i32_889, %c4_i32_890] : memref<2x8x!tpu.dma_semaphore, #tpu.memory_space<semaphore_mem>> -> memref<1x1x!tpu.dma_semaphore, #tpu.memory_space<semaphore_mem>>
    %846 = tpu.memref_squeeze %845 : memref<1x1x!tpu.dma_semaphore, #tpu.memory_space<semaphore_mem>> -> memref<!tpu.dma_semaphore, #tpu.memory_space<semaphore_mem>>
    tpu.wait_dma2 semaphore(%846 : memref<!tpu.dma_semaphore, #tpu.memory_space<semaphore_mem>>) src(%842 : memref<1x128xf32, #tpu.memory_space<any>>) dst(%844 : memref<1x128xf32, #tpu.memory_space<vmem>>)
    %c1_i32_895 = arith.constant 1 : i32
    %c1_i32_896 = arith.constant 1 : i32
    %c5_i32_897 = arith.constant 5 : i32
    %c0_i32_898 = arith.constant 0 : i32
    %c0_i32_899 = arith.constant 0 : i32
    %847 = tpu.memref_slice %arg2[%c0_i32_898, %c0_i32_899] : memref<16384x128xf32, #tpu.memory_space<any>> -> memref<1x128xf32, #tpu.memory_space<any>>
    %c5_i32_900 = arith.constant 5 : i32
    %c0_i32_901 = arith.constant 0 : i32
    %848 = tpu.memref_slice %arg4[%c1_i32_895, %c5_i32_900, %c0_i32_901] : memref<2x8x128xf32, #tpu.memory_space<vmem>> -> memref<1x1x128xf32, #tpu.memory_space<vmem>>
    %849 = tpu.memref_squeeze %848 : memref<1x1x128xf32, #tpu.memory_space<vmem>> -> memref<1x128xf32, #tpu.memory_space<vmem>>
    %850 = tpu.memref_slice %arg5[%c1_i32_896, %c5_i32_897] : memref<2x8x!tpu.dma_semaphore, #tpu.memory_space<semaphore_mem>> -> memref<1x1x!tpu.dma_semaphore, #tpu.memory_space<semaphore_mem>>
    %851 = tpu.memref_squeeze %850 : memref<1x1x!tpu.dma_semaphore, #tpu.memory_space<semaphore_mem>> -> memref<!tpu.dma_semaphore, #tpu.memory_space<semaphore_mem>>
    tpu.wait_dma2 semaphore(%851 : memref<!tpu.dma_semaphore, #tpu.memory_space<semaphore_mem>>) src(%847 : memref<1x128xf32, #tpu.memory_space<any>>) dst(%849 : memref<1x128xf32, #tpu.memory_space<vmem>>)
    %c1_i32_902 = arith.constant 1 : i32
    %c1_i32_903 = arith.constant 1 : i32
    %c6_i32_904 = arith.constant 6 : i32
    %c0_i32_905 = arith.constant 0 : i32
    %c0_i32_906 = arith.constant 0 : i32
    %852 = tpu.memref_slice %arg2[%c0_i32_905, %c0_i32_906] : memref<16384x128xf32, #tpu.memory_space<any>> -> memref<1x128xf32, #tpu.memory_space<any>>
    %c6_i32_907 = arith.constant 6 : i32
    %c0_i32_908 = arith.constant 0 : i32
    %853 = tpu.memref_slice %arg4[%c1_i32_902, %c6_i32_907, %c0_i32_908] : memref<2x8x128xf32, #tpu.memory_space<vmem>> -> memref<1x1x128xf32, #tpu.memory_space<vmem>>
    %854 = tpu.memref_squeeze %853 : memref<1x1x128xf32, #tpu.memory_space<vmem>> -> memref<1x128xf32, #tpu.memory_space<vmem>>
    %855 = tpu.memref_slice %arg5[%c1_i32_903, %c6_i32_904] : memref<2x8x!tpu.dma_semaphore, #tpu.memory_space<semaphore_mem>> -> memref<1x1x!tpu.dma_semaphore, #tpu.memory_space<semaphore_mem>>
    %856 = tpu.memref_squeeze %855 : memref<1x1x!tpu.dma_semaphore, #tpu.memory_space<semaphore_mem>> -> memref<!tpu.dma_semaphore, #tpu.memory_space<semaphore_mem>>
    tpu.wait_dma2 semaphore(%856 : memref<!tpu.dma_semaphore, #tpu.memory_space<semaphore_mem>>) src(%852 : memref<1x128xf32, #tpu.memory_space<any>>) dst(%854 : memref<1x128xf32, #tpu.memory_space<vmem>>)
    %c1_i32_909 = arith.constant 1 : i32
    %c1_i32_910 = arith.constant 1 : i32
    %c7_i32_911 = arith.constant 7 : i32
    %c0_i32_912 = arith.constant 0 : i32
    %c0_i32_913 = arith.constant 0 : i32
    %857 = tpu.memref_slice %arg2[%c0_i32_912, %c0_i32_913] : memref<16384x128xf32, #tpu.memory_space<any>> -> memref<1x128xf32, #tpu.memory_space<any>>
    %c7_i32_914 = arith.constant 7 : i32
    %c0_i32_915 = arith.constant 0 : i32
    %858 = tpu.memref_slice %arg4[%c1_i32_909, %c7_i32_914, %c0_i32_915] : memref<2x8x128xf32, #tpu.memory_space<vmem>> -> memref<1x1x128xf32, #tpu.memory_space<vmem>>
    %859 = tpu.memref_squeeze %858 : memref<1x1x128xf32, #tpu.memory_space<vmem>> -> memref<1x128xf32, #tpu.memory_space<vmem>>
    %860 = tpu.memref_slice %arg5[%c1_i32_910, %c7_i32_911] : memref<2x8x!tpu.dma_semaphore, #tpu.memory_space<semaphore_mem>> -> memref<1x1x!tpu.dma_semaphore, #tpu.memory_space<semaphore_mem>>
    %861 = tpu.memref_squeeze %860 : memref<1x1x!tpu.dma_semaphore, #tpu.memory_space<semaphore_mem>> -> memref<!tpu.dma_semaphore, #tpu.memory_space<semaphore_mem>>
    tpu.wait_dma2 semaphore(%861 : memref<!tpu.dma_semaphore, #tpu.memory_space<semaphore_mem>>) src(%857 : memref<1x128xf32, #tpu.memory_space<any>>) dst(%859 : memref<1x128xf32, #tpu.memory_space<vmem>>)
    %c1_916 = arith.constant 1 : index
    %c0_917 = arith.constant 0 : index
    %c0_918 = arith.constant 0 : index
    %862 = vector.load %arg4[%c1_916, %c0_917, %c0_918] : memref<2x8x128xf32, #tpu.memory_space<vmem>>, vector<1x8x128xf32>
    %863 = vector.shape_cast %862 : vector<1x8x128xf32> to vector<8x128xf32>
    %c56 = arith.constant 56 : index
    %c0_919 = arith.constant 0 : index
    %864 = vector.load %arg3[%c56, %c0_919] : memref<64x128xf32, #tpu.memory_space<vmem>>, vector<8x128xf32>
    tpu.vector_store %arg3[%c56, %c0_919], %863 {strides = array<i32>} : memref<64x128xf32, #tpu.memory_space<vmem>>, vector<8x128xf32>,
    return
  }
  func.func @transform_1(%arg0: i32, %arg1: memref<64xi32, #tpu.memory_space<smem>>) -> (i32, i32) {
    %c0_i32 = arith.constant 0 : i32
    %c0_i32_0 = arith.constant 0 : i32
    return %arg0, %c0_i32 : i32, i32
  }
}

</mosaic_0001>

<llo_original>
// kernel: tpu_custom_call.1
$region0: #{tpu_custom_call.1}
  #allocation0 [shape = 'u32[]', space=smem, size = 0x4, offset = 0x4, fixed_abs, tag = 'smem constant byte address 0x4 - core index']
  #allocation1 [shape = 'u32[144,128]{1,0:T(1,128)}', space=vmem, size = 0x12000, scoped, tag = 'internal scratch']
  #allocation2 [shape = 'f32[2,8,128]{2,1,0:T(8,128)}', space=vmem, size = 0x2000, scoped, tag = 'scratch operand']
  #allocation3 [shape = 's32[16]{0}', space=sflag, size = 0x40, scoped, tag = 'scratch operand']
  #allocation4 [shape = 's32[1]{0}', space=sflag, size = 0x4, scoped, tag = 'scoped memory for tpu_custom_call.1']
  #allocation5 [shape = 'u8[512]{0}', space=smem, size = 0x200, scoped, tag = 'prefetched SMEM operand 0']
  #allocation8 [shape = 's32[]', space=sflag, size = 0x4, offset = 0, fixed_abs, tag = 'sflag constant byte address 0x0 - dummy sync flag']
  #allocation9 [shape = 's32[]', space=sflag, size = 0x4, offset = 0, fixed_abs, tag = 'sflag constant byte address 0x0 - dummy sync flag']
  #allocation10 [shape = 'u32[]', space=smem, size = 0x4, offset = 0x44, fixed_abs, tag = 'smem constant byte address 0x44 - assertion arg 0']
  #allocation11 [shape = 'u32[]', space=smem, size = 0x4, offset = 0x48, fixed_abs, tag = 'smem constant byte address 0x48 - assertion arg 1']
  #allocation12 [shape = 's32[]', space=sflag, size = 0x4, offset = 0, fixed_abs, tag = 'sflag constant byte address 0x0 - dummy sync flag']
  #allocation13 [shape = 's32[]', space=sflag, size = 0x4, offset = 0, fixed_abs, tag = 'sflag constant byte address 0x0 - dummy sync flag']
  #allocation14 [shape = 's32[]', space=sflag, size = 0x4, offset = 0, fixed_abs, tag = 'sflag constant byte address 0x0 - dummy sync flag']
  #allocation15 [shape = 's32[]', space=sflag, size = 0x4, offset = 0, fixed_abs, tag = 'sflag constant byte address 0x0 - dummy sync flag']
  #allocation16 [shape = 's32[]', space=sflag, size = 0x4, offset = 0, fixed_abs, tag = 'sflag constant byte address 0x0 - dummy sync flag']
  #allocation17 [shape = 's32[]', space=sflag, size = 0x4, offset = 0, fixed_abs, tag = 'sflag constant byte address 0x0 - dummy sync flag']
  #allocation18 [shape = 's32[]', space=sflag, size = 0x4, offset = 0, fixed_abs, tag = 'sflag constant byte address 0x0 - dummy sync flag']
  #allocation19 [shape = 's32[]', space=sflag, size = 0x4, offset = 0, fixed_abs, tag = 'sflag constant byte address 0x0 - dummy sync flag']
  #allocation20 [shape = 's32[]', space=sflag, size = 0x4, offset = 0, fixed_abs, tag = 'sflag constant byte address 0x0 - dummy sync flag']
  #allocation21 [shape = 's32[]', space=sflag, size = 0x4, offset = 0, fixed_abs, tag = 'sflag constant byte address 0x0 - dummy sync flag']
  #allocation22 [shape = 's32[]', space=sflag, size = 0x4, offset = 0, fixed_abs, tag = 'sflag constant byte address 0x0 - dummy sync flag']
  #allocation23 [shape = 's32[]', space=sflag, size = 0x4, offset = 0, fixed_abs, tag = 'sflag constant byte address 0x0 - dummy sync flag']
  #allocation24 [shape = 's32[]', space=sflag, size = 0x4, offset = 0, fixed_abs, tag = 'sflag constant byte address 0x0 - dummy sync flag']
  #allocation25 [shape = 's32[]', space=sflag, size = 0x4, offset = 0, fixed_abs, tag = 'sflag constant byte address 0x0 - dummy sync flag']
  #allocation26 [shape = 's32[]', space=sflag, size = 0x4, offset = 0, fixed_abs, tag = 'sflag constant byte address 0x0 - dummy sync flag']
  #allocation27 [shape = 's32[]', space=sflag, size = 0x4, offset = 0, fixed_abs, tag = 'sflag constant byte address 0x0 - dummy sync flag']
  #allocation28 [shape = 's32[]', space=sflag, size = 0x4, offset = 0, fixed_abs, tag = 'sflag constant byte address 0x0 - dummy sync flag']
  #allocation29 [shape = 's32[]', space=sflag, size = 0x4, offset = 0, fixed_abs, tag = 'sflag constant byte address 0x0 - dummy sync flag']
  #allocation30 [shape = 's32[]', space=sflag, size = 0x4, offset = 0, fixed_abs, tag = 'sflag constant byte address 0x0 - dummy sync flag']
  #allocation31 [shape = 's32[]', space=sflag, size = 0x4, offset = 0, fixed_abs, tag = 'sflag constant byte address 0x0 - dummy sync flag']
  #allocation32 [shape = 's32[]', space=sflag, size = 0x4, offset = 0, fixed_abs, tag = 'sflag constant byte address 0x0 - dummy sync flag']
  #allocation33 [shape = 's32[]', space=sflag, size = 0x4, offset = 0, fixed_abs, tag = 'sflag constant byte address 0x0 - dummy sync flag']
  #allocation34 [shape = 's32[]', space=sflag, size = 0x4, offset = 0, fixed_abs, tag = 'sflag constant byte address 0x0 - dummy sync flag']
  #allocation35 [shape = 's32[]', space=sflag, size = 0x4, offset = 0, fixed_abs, tag = 'sflag constant byte address 0x0 - dummy sync flag']
  #allocation36 [shape = 's32[]', space=sflag, size = 0x4, offset = 0, fixed_abs, tag = 'sflag constant byte address 0x0 - dummy sync flag']
  #allocation37 [shape = 's32[]', space=sflag, size = 0x4, offset = 0, fixed_abs, tag = 'sflag constant byte address 0x0 - dummy sync flag']
  #allocation38 [shape = 's32[]', space=sflag, size = 0x4, offset = 0, fixed_abs, tag = 'sflag constant byte address 0x0 - dummy sync flag']
  #allocation39 [shape = 's32[]', space=sflag, size = 0x4, offset = 0, fixed_abs, tag = 'sflag constant byte address 0x0 - dummy sync flag']
  #allocation40 [shape = 's32[]', space=sflag, size = 0x4, offset = 0, fixed_abs, tag = 'sflag constant byte address 0x0 - dummy sync flag']
  #allocation41 [shape = 's32[]', space=sflag, size = 0x4, offset = 0, fixed_abs, tag = 'sflag constant byte address 0x0 - dummy sync flag']
  #allocation42 [shape = 's32[]', space=sflag, size = 0x4, offset = 0, fixed_abs, tag = 'sflag constant byte address 0x0 - dummy sync flag']
  #allocation43 [shape = 's32[]', space=sflag, size = 0x4, offset = 0, fixed_abs, tag = 'sflag constant byte address 0x0 - dummy sync flag']
  #allocation44 [shape = 's32[]', space=sflag, size = 0x4, offset = 0, fixed_abs, tag = 'sflag constant byte address 0x0 - dummy sync flag']
  #allocation45 [shape = 's32[]', space=sflag, size = 0x4, offset = 0, fixed_abs, tag = 'sflag constant byte address 0x0 - dummy sync flag']
  #allocation46 [shape = 's32[]', space=sflag, size = 0x4, offset = 0, fixed_abs, tag = 'sflag constant byte address 0x0 - dummy sync flag']
  #allocation47 [shape = 's32[]', space=sflag, size = 0x4, offset = 0, fixed_abs, tag = 'sflag constant byte address 0x0 - dummy sync flag']
  #allocation48 [shape = 's32[]', space=sflag, size = 0x4, offset = 0, fixed_abs, tag = 'sflag constant byte address 0x0 - dummy sync flag']
  #allocation49 [shape = 's32[]', space=sflag, size = 0x4, offset = 0, fixed_abs, tag = 'sflag constant byte address 0x0 - dummy sync flag']
  #allocation50 [shape = 's32[]', space=sflag, size = 0x4, offset = 0, fixed_abs, tag = 'sflag constant byte address 0x0 - dummy sync flag']
  #allocation51 [shape = 's32[]', space=sflag, size = 0x4, offset = 0, fixed_abs, tag = 'sflag constant byte address 0x0 - dummy sync flag']
  #allocation52 [shape = 's32[]', space=sflag, size = 0x4, offset = 0, fixed_abs, tag = 'sflag constant byte address 0x0 - dummy sync flag']
  #allocation53 [shape = 's32[]', space=sflag, size = 0x4, offset = 0, fixed_abs, tag = 'sflag constant byte address 0x0 - dummy sync flag']
  #allocation54 [shape = 's32[]', space=sflag, size = 0x4, offset = 0, fixed_abs, tag = 'sflag constant byte address 0x0 - dummy sync flag']
  #allocation55 [shape = 's32[]', space=sflag, size = 0x4, offset = 0, fixed_abs, tag = 'sflag constant byte address 0x0 - dummy sync flag']
  #allocation56 [shape = 's32[]', space=sflag, size = 0x4, offset = 0, fixed_abs, tag = 'sflag constant byte address 0x0 - dummy sync flag']
  #allocation57 [shape = 's32[]', space=sflag, size = 0x4, offset = 0, fixed_abs, tag = 'sflag constant byte address 0x0 - dummy sync flag']
  #allocation58 [shape = 's32[]', space=sflag, size = 0x4, offset = 0, fixed_abs, tag = 'sflag constant byte address 0x0 - dummy sync flag']
  #allocation59 [shape = 's32[]', space=sflag, size = 0x4, offset = 0, fixed_abs, tag = 'sflag constant byte address 0x0 - dummy sync flag']
  #allocation60 [shape = 's32[]', space=sflag, size = 0x4, offset = 0, fixed_abs, tag = 'sflag constant byte address 0x0 - dummy sync flag']
  #allocation61 [shape = 's32[]', space=sflag, size = 0x4, offset = 0, fixed_abs, tag = 'sflag constant byte address 0x0 - dummy sync flag']
  #allocation62 [shape = 's32[]', space=sflag, size = 0x4, offset = 0, fixed_abs, tag = 'sflag constant byte address 0x0 - dummy sync flag']
  #allocation63 [shape = 's32[]', space=sflag, size = 0x4, offset = 0, fixed_abs, tag = 'sflag constant byte address 0x0 - dummy sync flag']
  #allocation64 [shape = 's32[]', space=sflag, size = 0x4, offset = 0, fixed_abs, tag = 'sflag constant byte address 0x0 - dummy sync flag']
  #allocation65 [shape = 's32[]', space=sflag, size = 0x4, offset = 0, fixed_abs, tag = 'sflag constant byte address 0x0 - dummy sync flag']
  #allocation66 [shape = 's32[]', space=sflag, size = 0x4, offset = 0, fixed_abs, tag = 'sflag constant byte address 0x0 - dummy sync flag']
  #allocation67 [shape = 's32[]', space=sflag, size = 0x4, offset = 0, fixed_abs, tag = 'sflag constant byte address 0x0 - dummy sync flag']
  #allocation68 [shape = 's32[]', space=sflag, size = 0x4, offset = 0, fixed_abs, tag = 'sflag constant byte address 0x0 - dummy sync flag']
  #allocation69 [shape = 's32[]', space=sflag, size = 0x4, offset = 0, fixed_abs, tag = 'sflag constant byte address 0x0 - dummy sync flag']
  #allocation70 [shape = 's32[]', space=sflag, size = 0x4, offset = 0, fixed_abs, tag = 'sflag constant byte address 0x0 - dummy sync flag']
  #allocation71 [shape = 's32[]', space=sflag, size = 0x4, offset = 0, fixed_abs, tag = 'sflag constant byte address 0x0 - dummy sync flag']
  #allocation72 [shape = 's32[]', space=sflag, size = 0x4, offset = 0, fixed_abs, tag = 'sflag constant byte address 0x0 - dummy sync flag']
  #allocation73 [shape = 's32[]', space=sflag, size = 0x4, offset = 0, fixed_abs, tag = 'sflag constant byte address 0x0 - dummy sync flag']
  #allocation74 [shape = 's32[]', space=sflag, size = 0x4, offset = 0, fixed_abs, tag = 'sflag constant byte address 0x0 - dummy sync flag']
  #allocation75 [shape = 's32[]', space=sflag, size = 0x4, offset = 0, fixed_abs, tag = 'sflag constant byte address 0x0 - dummy sync flag']
  #allocation76 [shape = 's32[]', space=sflag, size = 0x4, offset = 0, fixed_abs, tag = 'sflag constant byte address 0x0 - dummy sync flag']
  #allocation77 [shape = 's32[]', space=sflag, size = 0x4, offset = 0, fixed_abs, tag = 'sflag constant byte address 0x0 - dummy sync flag']
  #allocation78 [shape = 's32[]', space=sflag, size = 0x4, offset = 0, fixed_abs, tag = 'sflag constant byte address 0x0 - dummy sync flag']
  #allocation79 [shape = 's32[]', space=sflag, size = 0x4, offset = 0, fixed_abs, tag = 'sflag constant byte address 0x0 - dummy sync flag']
  #allocation80 [shape = 's32[]', space=sflag, size = 0x4, offset = 0, fixed_abs, tag = 'sflag constant byte address 0x0 - dummy sync flag']
  #allocation81 [shape = 's32[]', space=sflag, size = 0x4, offset = 0, fixed_abs, tag = 'sflag constant byte address 0x0 - dummy sync flag']
  #allocation82 [shape = 's32[]', space=sflag, size = 0x4, offset = 0, fixed_abs, tag = 'sflag constant byte address 0x0 - dummy sync flag']
  #allocation83 [shape = 's32[]', space=sflag, size = 0x4, offset = 0, fixed_abs, tag = 'sflag constant byte address 0x0 - dummy sync flag']
  #allocation84 [shape = 's32[]', space=sflag, size = 0x4, offset = 0, fixed_abs, tag = 'sflag constant byte address 0x0 - dummy sync flag']
  #allocation85 [shape = 's32[]', space=sflag, size = 0x4, offset = 0, fixed_abs, tag = 'sflag constant byte address 0x0 - dummy sync flag']
  #allocation86 [shape = 's32[]', space=sflag, size = 0x4, offset = 0, fixed_abs, tag = 'sflag constant byte address 0x0 - dummy sync flag']
  #allocation87 [shape = 's32[]', space=sflag, size = 0x4, offset = 0, fixed_abs, tag = 'sflag constant byte address 0x0 - dummy sync flag']
  #allocation88 [shape = 's32[]', space=sflag, size = 0x4, offset = 0, fixed_abs, tag = 'sflag constant byte address 0x0 - dummy sync flag']
  #allocation89 [shape = 's32[]', space=sflag, size = 0x4, offset = 0, fixed_abs, tag = 'sflag constant byte address 0x0 - dummy sync flag']
  #allocation90 [shape = 's32[]', space=sflag, size = 0x4, offset = 0, fixed_abs, tag = 'sflag constant byte address 0x0 - dummy sync flag']
  #allocation91 [shape = 's32[]', space=sflag, size = 0x4, offset = 0, fixed_abs, tag = 'sflag constant byte address 0x0 - dummy sync flag']
  #allocation92 [shape = 's32[]', space=sflag, size = 0x4, offset = 0, fixed_abs, tag = 'sflag constant byte address 0x0 - dummy sync flag']
  #allocation93 [shape = 's32[]', space=sflag, size = 0x4, offset = 0, fixed_abs, tag = 'sflag constant byte address 0x0 - dummy sync flag']
  #allocation94 [shape = 's32[]', space=sflag, size = 0x4, offset = 0, fixed_abs, tag = 'sflag constant byte address 0x0 - dummy sync flag']
  #allocation95 [shape = 's32[]', space=sflag, size = 0x4, offset = 0, fixed_abs, tag = 'sflag constant byte address 0x0 - dummy sync flag']
  #allocation96 [shape = 's32[]', space=sflag, size = 0x4, offset = 0, fixed_abs, tag = 'sflag constant byte address 0x0 - dummy sync flag']
  #allocation97 [shape = 's32[]', space=sflag, size = 0x4, offset = 0, fixed_abs, tag = 'sflag constant byte address 0x0 - dummy sync flag']
  #allocation98 [shape = 's32[]', space=sflag, size = 0x4, offset = 0, fixed_abs, tag = 'sflag constant byte address 0x0 - dummy sync flag']
  #allocation99 [shape = 's32[]', space=sflag, size = 0x4, offset = 0, fixed_abs, tag = 'sflag constant byte address 0x0 - dummy sync flag']
  #allocation100 [shape = 's32[]', space=sflag, size = 0x4, offset = 0, fixed_abs, tag = 'sflag constant byte address 0x0 - dummy sync flag']
  #allocation101 [shape = 's32[]', space=sflag, size = 0x4, offset = 0, fixed_abs, tag = 'sflag constant byte address 0x0 - dummy sync flag']
  #allocation102 [shape = 's32[]', space=sflag, size = 0x4, offset = 0, fixed_abs, tag = 'sflag constant byte address 0x0 - dummy sync flag']
  #allocation103 [shape = 's32[]', space=sflag, size = 0x4, offset = 0, fixed_abs, tag = 'sflag constant byte address 0x0 - dummy sync flag']
  #allocation104 [shape = 's32[]', space=sflag, size = 0x4, offset = 0, fixed_abs, tag = 'sflag constant byte address 0x0 - dummy sync flag']
  #allocation105 [shape = 's32[]', space=sflag, size = 0x4, offset = 0, fixed_abs, tag = 'sflag constant byte address 0x0 - dummy sync flag']
  #allocation106 [shape = 's32[]', space=sflag, size = 0x4, offset = 0, fixed_abs, tag = 'sflag constant byte address 0x0 - dummy sync flag']
  #allocation107 [shape = 's32[]', space=sflag, size = 0x4, offset = 0, fixed_abs, tag = 'sflag constant byte address 0x0 - dummy sync flag']
  #allocation108 [shape = 's32[]', space=sflag, size = 0x4, offset = 0, fixed_abs, tag = 'sflag constant byte address 0x0 - dummy sync flag']
  #allocation109 [shape = 's32[]', space=sflag, size = 0x4, offset = 0, fixed_abs, tag = 'sflag constant byte address 0x0 - dummy sync flag']
  #allocation110 [shape = 's32[]', space=sflag, size = 0x4, offset = 0, fixed_abs, tag = 'sflag constant byte address 0x0 - dummy sync flag']
  #allocation111 [shape = 's32[]', space=sflag, size = 0x4, offset = 0, fixed_abs, tag = 'sflag constant byte address 0x0 - dummy sync flag']
  #allocation112 [shape = 's32[]', space=sflag, size = 0x4, offset = 0, fixed_abs, tag = 'sflag constant byte address 0x0 - dummy sync flag']
  #allocation113 [shape = 's32[]', space=sflag, size = 0x4, offset = 0, fixed_abs, tag = 'sflag constant byte address 0x0 - dummy sync flag']
  #allocation114 [shape = 's32[]', space=sflag, size = 0x4, offset = 0, fixed_abs, tag = 'sflag constant byte address 0x0 - dummy sync flag']
  #allocation115 [shape = 's32[]', space=sflag, size = 0x4, offset = 0, fixed_abs, tag = 'sflag constant byte address 0x0 - dummy sync flag']
  #allocation116 [shape = 's32[]', space=sflag, size = 0x4, offset = 0, fixed_abs, tag = 'sflag constant byte address 0x0 - dummy sync flag']
  #allocation117 [shape = 's32[]', space=sflag, size = 0x4, offset = 0, fixed_abs, tag = 'sflag constant byte address 0x0 - dummy sync flag']
  #allocation118 [shape = 's32[]', space=sflag, size = 0x4, offset = 0, fixed_abs, tag = 'sflag constant byte address 0x0 - dummy sync flag']
  #allocation119 [shape = 's32[]', space=sflag, size = 0x4, offset = 0, fixed_abs, tag = 'sflag constant byte address 0x0 - dummy sync flag']
  #allocation120 [shape = 's32[]', space=sflag, size = 0x4, offset = 0, fixed_abs, tag = 'sflag constant byte address 0x0 - dummy sync flag']
  #allocation121 [shape = 's32[]', space=sflag, size = 0x4, offset = 0, fixed_abs, tag = 'sflag constant byte address 0x0 - dummy sync flag']
  #allocation122 [shape = 's32[]', space=sflag, size = 0x4, offset = 0, fixed_abs, tag = 'sflag constant byte address 0x0 - dummy sync flag']
  #allocation123 [shape = 's32[]', space=sflag, size = 0x4, offset = 0, fixed_abs, tag = 'sflag constant byte address 0x0 - dummy sync flag']
  #allocation124 [shape = 's32[]', space=sflag, size = 0x4, offset = 0, fixed_abs, tag = 'sflag constant byte address 0x0 - dummy sync flag']
  #allocation125 [shape = 's32[]', space=sflag, size = 0x4, offset = 0, fixed_abs, tag = 'sflag constant byte address 0x0 - dummy sync flag']
  #allocation126 [shape = 's32[]', space=sflag, size = 0x4, offset = 0, fixed_abs, tag = 'sflag constant byte address 0x0 - dummy sync flag']
  #allocation127 [shape = 's32[]', space=sflag, size = 0x4, offset = 0, fixed_abs, tag = 'sflag constant byte address 0x0 - dummy sync flag']
  #allocation128 [shape = 's32[]', space=sflag, size = 0x4, offset = 0, fixed_abs, tag = 'sflag constant byte address 0x0 - dummy sync flag']
  #allocation129 [shape = 's32[]', space=sflag, size = 0x4, offset = 0, fixed_abs, tag = 'sflag constant byte address 0x0 - dummy sync flag']
  #allocation130 [shape = 's32[]', space=sflag, size = 0x4, offset = 0, fixed_abs, tag = 'sflag constant byte address 0x0 - dummy sync flag']
  #allocation131 [shape = 's32[]', space=sflag, size = 0x4, offset = 0, fixed_abs, tag = 'sflag constant byte address 0x0 - dummy sync flag']
  #allocation132 [shape = 's32[]', space=sflag, size = 0x4, offset = 0, fixed_abs, tag = 'sflag constant byte address 0x0 - dummy sync flag']
  #allocation133 [shape = 's32[]', space=sflag, size = 0x4, offset = 0, fixed_abs, tag = 'sflag constant byte address 0x0 - dummy sync flag']
  #allocation134 [shape = 's32[]', space=sflag, size = 0x4, offset = 0, fixed_abs, tag = 'sflag constant byte address 0x0 - dummy sync flag']
  #allocation135 [shape = 's32[]', space=sflag, size = 0x4, offset = 0, fixed_abs, tag = 'sflag constant byte address 0x0 - dummy sync flag']
  #allocation136 [shape = 's32[]', space=sflag, size = 0x4, offset = 0, fixed_abs, tag = 'sflag constant byte address 0x0 - dummy sync flag']
  #allocation137 [shape = 's32[]', space=sflag, size = 0x4, offset = 0, fixed_abs, tag = 'sflag constant byte address 0x0 - dummy sync flag']
  %s0 = inlined_call_operand.hbm [shape: s32[64], index: 0, kind: input, shape index: {}]
  %s1 = inlined_call_operand.hbm [shape: f32[16384,128], index: 1, kind: input, shape index: {}]
  %s2 = inlined_call_operand.hbm [shape: f32[64,128], index: 2, kind: output, shape index: {}]
  %s3 = sld [smem:[#allocation0]]
  $region266: #{tpu_custom_call.1} parent=0
    _
  %s5 = ssub.s32 1, %s3
  %s6 = scalar_select 0, %s5, %s3
  %8 = dma.hbm_to_smem %s0, 16, [#allocation5], [#allocation4]
  %9 = dma.done [#allocation4], 16
  %10 = sfence
  $region1: #{tpu_custom_call.1} parent=0
    #allocation6 [shape = 'u8[32768]{0}', space=vmem, size = 0x8000, scoped, tag = 'output window, operand 0, single buffered']
    #allocation7 [shape = 's32[1]{0}', space=sflag, size = 0x4, scoped, tag = 'scoped memory for tpu_custom_call.1']
    %11 = vsyncpa [#allocation7], 0
    %s12 = smul.u32 0, 64
    %s13 = sld [smem:[#allocation5 + %s12]]
    %s14 = smul.addr %s13, 16
    %s15 = scalar_lea.hbm %s1, %s14
    // Predicated region
    $region2: #{tpu_custom_call.1} parent=1 // pred_check
      _
    $region3: #{tpu_custom_call.1} parent=1 // pred_check_branch
      %17 = sbr.rel target = $region5
    $region4: #{tpu_custom_call.1} parent=1 // pred_region
      %18 = sst [smem:[#allocation10]] [#allocation9]
      %19 = sst [smem:[#allocation11]] [#allocation8]
    $region5: #{tpu_custom_call.1} parent=1 // pred_fallthru
      _
    %21 = shalt.err (0)
    %s23 = sshll.u32 [#allocation2], 4
    %s24 = int_to_ptr.vmem [resolvable:$true] %s23
    %26 = dma.hbm_to_vmem [thread:$0]  %s15, 16, %s24, [#allocation3]
    %s27 = sadd.s32 %s12, 1
    %s28 = sld [smem:[#allocation5 + %s27]]
    %s29 = smul.addr %s28, 16
    %s30 = scalar_lea.hbm %s1, %s29
    %s31 = scalar_lea.vmem [#allocation2], 1
    %s32 = scalar_lea.sflag [#allocation3], 1
    // Predicated region
    $region6: #{tpu_custom_call.1} parent=1 // pred_check
      _
    $region7: #{tpu_custom_call.1} parent=1 // pred_check_branch
      %34 = sbr.rel target = $region9
    $region8: #{tpu_custom_call.1} parent=1 // pred_region
      %35 = sst [smem:[#allocation10]] [#allocation13]
      %36 = sst [smem:[#allocation11]] [#allocation12]
    $region9: #{tpu_custom_call.1} parent=1 // pred_fallthru
      _
    %38 = shalt.err (0)
    %s40 = sshll.u32 %s31, 4
    %s41 = int_to_ptr.vmem [resolvable:$true] %s40
    %43 = dma.hbm_to_vmem [thread:$0]  %s30, 16, %s41, %s32
    %s44 = sadd.s32 %s12, 2
    %s45 = sld [smem:[#allocation5 + %s44]]
    %s46 = smul.addr %s45, 16
    %s47 = scalar_lea.hbm %s1, %s46
    %s48 = scalar_lea.vmem [#allocation2], 2
    %s49 = scalar_lea.sflag [#allocation3], 2
    // Predicated region
    $region10: #{tpu_custom_call.1} parent=1 // pred_check
      _
    $region11: #{tpu_custom_call.1} parent=1 // pred_check_branch
      %51 = sbr.rel target = $region13
    $region12: #{tpu_custom_call.1} parent=1 // pred_region
      %52 = sst [smem:[#allocation10]] [#allocation15]
      %53 = sst [smem:[#allocation11]] [#allocation14]
    $region13: #{tpu_custom_call.1} parent=1 // pred_fallthru
      _
    %55 = shalt.err (0)
    %s57 = sshll.u32 %s48, 4
    %s58 = int_to_ptr.vmem [resolvable:$true] %s57
    %60 = dma.hbm_to_vmem [thread:$0]  %s47, 16, %s58, %s49
    %s61 = sadd.s32 %s12, 3
    %s62 = sld [smem:[#allocation5 + %s61]]
    %s63 = smul.addr %s62, 16
    %s64 = scalar_lea.hbm %s1, %s63
    %s65 = scalar_lea.vmem [#allocation2], 3
    %s66 = scalar_lea.sflag [#allocation3], 3
    // Predicated region
    $region14: #{tpu_custom_call.1} parent=1 // pred_check
      _
    $region15: #{tpu_custom_call.1} parent=1 // pred_check_branch
      %68 = sbr.rel target = $region17
    $region16: #{tpu_custom_call.1} parent=1 // pred_region
      %69 = sst [smem:[#allocation10]] [#allocation17]
      %70 = sst [smem:[#allocation11]] [#allocation16]
    $region17: #{tpu_custom_call.1} parent=1 // pred_fallthru
      _
    %72 = shalt.err (0)
    %s74 = sshll.u32 %s65, 4
    %s75 = int_to_ptr.vmem [resolvable:$true] %s74
    %77 = dma.hbm_to_vmem [thread:$0]  %s64, 16, %s75, %s66
    %s78 = sadd.s32 %s12, 4
    %s79 = sld [smem:[#allocation5 + %s78]]
    %s80 = smul.addr %s79, 16
    %s81 = scalar_lea.hbm %s1, %s80
    %s82 = scalar_lea.vmem [#allocation2], 4
    %s83 = scalar_lea.sflag [#allocation3], 4
    // Predicated region
    $region18: #{tpu_custom_call.1} parent=1 // pred_check
      _
    $region19: #{tpu_custom_call.1} parent=1 // pred_check_branch
      %85 = sbr.rel target = $region21
    $region20: #{tpu_custom_call.1} parent=1 // pred_region
      %86 = sst [smem:[#allocation10]] [#allocation19]
      %87 = sst [smem:[#allocation11]] [#allocation18]
    $region21: #{tpu_custom_call.1} parent=1 // pred_fallthru
      _
    %89 = shalt.err (0)
    %s91 = sshll.u32 %s82, 4
    %s92 = int_to_ptr.vmem [resolvable:$true] %s91
    %94 = dma.hbm_to_vmem [thread:$0]  %s81, 16, %s92, %s83
    %s95 = sadd.s32 %s12, 5
    %s96 = sld [smem:[#allocation5 + %s95]]
    %s97 = smul.addr %s96, 16
    %s98 = scalar_lea.hbm %s1, %s97
    %s99 = scalar_lea.vmem [#allocation2], 5
    %s100 = scalar_lea.sflag [#allocation3], 5
    // Predicated region
    $region22: #{tpu_custom_call.1} parent=1 // pred_check
      _
    $region23: #{tpu_custom_call.1} parent=1 // pred_check_branch
      %102 = sbr.rel target = $region25
    $region24: #{tpu_custom_call.1} parent=1 // pred_region
      %103 = sst [smem:[#allocation10]] [#allocation21]
      %104 = sst [smem:[#allocation11]] [#allocation20]
    $region25: #{tpu_custom_call.1} parent=1 // pred_fallthru
      _
    %106 = shalt.err (0)
    %s108 = sshll.u32 %s99, 4
    %s109 = int_to_ptr.vmem [resolvable:$true] %s108
    %111 = dma.hbm_to_vmem [thread:$0]  %s98, 16, %s109, %s100
    %s112 = sadd.s32 %s12, 6
    %s113 = sld [smem:[#allocation5 + %s112]]
    %s114 = smul.addr %s113, 16
    %s115 = scalar_lea.hbm %s1, %s114
    %s116 = scalar_lea.vmem [#allocation2], 6
    %s117 = scalar_lea.sflag [#allocation3], 6
    // Predicated region
    $region26: #{tpu_custom_call.1} parent=1 // pred_check
      _
    $region27: #{tpu_custom_call.1} parent=1 // pred_check_branch
      %119 = sbr.rel target = $region29
    $region28: #{tpu_custom_call.1} parent=1 // pred_region
      %120 = sst [smem:[#allocation10]] [#allocation23]
      %121 = sst [smem:[#allocation11]] [#allocation22]
    $region29: #{tpu_custom_call.1} parent=1 // pred_fallthru
      _
    %123 = shalt.err (0)
    %s125 = sshll.u32 %s116, 4
    %s126 = int_to_ptr.vmem [resolvable:$true] %s125
    %128 = dma.hbm_to_vmem [thread:$0]  %s115, 16, %s126, %s117
    %s129 = sadd.s32 %s12, 7
    %s130 = sld [smem:[#allocation5 + %s129]]
    %s131 = smul.addr %s130, 16
    %s132 = scalar_lea.hbm %s1, %s131
    %s133 = scalar_lea.vmem [#allocation2], 7
    %s134 = scalar_lea.sflag [#allocation3], 7
    // Predicated region
    $region30: #{tpu_custom_call.1} parent=1 // pred_check
      _
    $region31: #{tpu_custom_call.1} parent=1 // pred_check_branch
      %136 = sbr.rel target = $region33
    $region32: #{tpu_custom_call.1} parent=1 // pred_region
      %137 = sst [smem:[#allocation10]] [#allocation25]
      %138 = sst [smem:[#allocation11]] [#allocation24]
    $region33: #{tpu_custom_call.1} parent=1 // pred_fallthru
      _
    %140 = shalt.err (0)
    %s142 = sshll.u32 %s133, 4
    %s143 = int_to_ptr.vmem [resolvable:$true] %s142
    %145 = dma.hbm_to_vmem [thread:$0]  %s132, 16, %s143, %s134
    %s146 = sadd.s32 %s12, 8
    %s147 = sld [smem:[#allocation5 + %s146]]
    %s148 = smul.addr %s147, 16
    %s149 = scalar_lea.hbm %s1, %s148
    %s150 = scalar_lea.vmem [#allocation2], 8
    %s151 = scalar_lea.sflag [#allocation3], 8
    // Predicated region
    $region34: #{tpu_custom_call.1} parent=1 // pred_check
      _
    $region35: #{tpu_custom_call.1} parent=1 // pred_check_branch
      %153 = sbr.rel target = $region37
    $region36: #{tpu_custom_call.1} parent=1 // pred_region
      %154 = sst [smem:[#allocation10]] [#allocation27]
      %155 = sst [smem:[#allocation11]] [#allocation26]
    $region37: #{tpu_custom_call.1} parent=1 // pred_fallthru
      _
    %157 = shalt.err (0)
    %s159 = sshll.u32 %s150, 4
    %s160 = int_to_ptr.vmem [resolvable:$true] %s159
    %162 = dma.hbm_to_vmem [thread:$0]  %s149, 16, %s160, %s151
    %s163 = sadd.s32 %s12, 9
    %s164 = sld [smem:[#allocation5 + %s163]]
    %s165 = smul.addr %s164, 16
    %s166 = scalar_lea.hbm %s1, %s165
    %s167 = scalar_lea.vmem [#allocation2], 9
    %s168 = scalar_lea.sflag [#allocation3], 9
    // Predicated region
    $region38: #{tpu_custom_call.1} parent=1 // pred_check
      _
    $region39: #{tpu_custom_call.1} parent=1 // pred_check_branch
      %170 = sbr.rel target = $region41
    $region40: #{tpu_custom_call.1} parent=1 // pred_region
      %171 = sst [smem:[#allocation10]] [#allocation29]
      %172 = sst [smem:[#allocation11]] [#allocation28]
    $region41: #{tpu_custom_call.1} parent=1 // pred_fallthru
      _
    %174 = shalt.err (0)
    %s176 = sshll.u32 %s167, 4
    %s177 = int_to_ptr.vmem [resolvable:$true] %s176
    %179 = dma.hbm_to_vmem [thread:$0]  %s166, 16, %s177, %s168
    %s180 = sadd.s32 %s12, 10
    %s181 = sld [smem:[#allocation5 + %s180]]
    %s182 = smul.addr %s181, 16
    %s183 = scalar_lea.hbm %s1, %s182
    %s184 = scalar_lea.vmem [#allocation2], 10
    %s185 = scalar_lea.sflag [#allocation3], 10
    // Predicated region
    $region42: #{tpu_custom_call.1} parent=1 // pred_check
      _
    $region43: #{tpu_custom_call.1} parent=1 // pred_check_branch
      %187 = sbr.rel target = $region45
    $region44: #{tpu_custom_call.1} parent=1 // pred_region
      %188 = sst [smem:[#allocation10]] [#allocation31]
      %189 = sst [smem:[#allocation11]] [#allocation30]
    $region45: #{tpu_custom_call.1} parent=1 // pred_fallthru
      _
    %191 = shalt.err (0)
    %s193 = sshll.u32 %s184, 4
    %s194 = int_to_ptr.vmem [resolvable:$true] %s193
    %196 = dma.hbm_to_vmem [thread:$0]  %s183, 16, %s194, %s185
    %s197 = sadd.s32 %s12, 11
    %s198 = sld [smem:[#allocation5 + %s197]]
    %s199 = smul.addr %s198, 16
    %s200 = scalar_lea.hbm %s1, %s199
    %s201 = scalar_lea.vmem [#allocation2], 11
    %s202 = scalar_lea.sflag [#allocation3], 11
    // Predicated region
    $region46: #{tpu_custom_call.1} parent=1 // pred_check
      _
    $region47: #{tpu_custom_call.1} parent=1 // pred_check_branch
      %204 = sbr.rel target = $region49
    $region48: #{tpu_custom_call.1} parent=1 // pred_region
      %205 = sst [smem:[#allocation10]] [#allocation33]
      %206 = sst [smem:[#allocation11]] [#allocation32]
    $region49: #{tpu_custom_call.1} parent=1 // pred_fallthru
      _
    %208 = shalt.err (0)
    %s210 = sshll.u32 %s201, 4
    %s211 = int_to_ptr.vmem [resolvable:$true] %s210
    %213 = dma.hbm_to_vmem [thread:$0]  %s200, 16, %s211, %s202
    %s214 = sadd.s32 %s12, 12
    %s215 = sld [smem:[#allocation5 + %s214]]
    %s216 = smul.addr %s215, 16
    %s217 = scalar_lea.hbm %s1, %s216
    %s218 = scalar_lea.vmem [#allocation2], 12
    %s219 = scalar_lea.sflag [#allocation3], 12
    // Predicated region
    $region50: #{tpu_custom_call.1} parent=1 // pred_check
      _
    $region51: #{tpu_custom_call.1} parent=1 // pred_check_branch
      %221 = sbr.rel target = $region53
    $region52: #{tpu_custom_call.1} parent=1 // pred_region
      %222 = sst [smem:[#allocation10]] [#allocation35]
      %223 = sst [smem:[#allocation11]] [#allocation34]
    $region53: #{tpu_custom_call.1} parent=1 // pred_fallthru
      _
    %225 = shalt.err (0)
    %s227 = sshll.u32 %s218, 4
    %s228 = int_to_ptr.vmem [resolvable:$true] %s227
    %230 = dma.hbm_to_vmem [thread:$0]  %s217, 16, %s228, %s219
    %s231 = sadd.s32 %s12, 13
    %s232 = sld [smem:[#allocation5 + %s231]]
    %s233 = smul.addr %s232, 16
    %s234 = scalar_lea.hbm %s1, %s233
    %s235 = scalar_lea.vmem [#allocation2], 13
    %s236 = scalar_lea.sflag [#allocation3], 13
    // Predicated region
    $region54: #{tpu_custom_call.1} parent=1 // pred_check
      _
    $region55: #{tpu_custom_call.1} parent=1 // pred_check_branch
      %238 = sbr.rel target = $region57
    $region56: #{tpu_custom_call.1} parent=1 // pred_region
      %239 = sst [smem:[#allocation10]] [#allocation37]
      %240 = sst [smem:[#allocation11]] [#allocation36]
    $region57: #{tpu_custom_call.1} parent=1 // pred_fallthru
      _
    %242 = shalt.err (0)
    %s244 = sshll.u32 %s235, 4
    %s245 = int_to_ptr.vmem [resolvable:$true] %s244
    %247 = dma.hbm_to_vmem [thread:$0]  %s234, 16, %s245, %s236
    %s248 = sadd.s32 %s12, 14
    %s249 = sld [smem:[#allocation5 + %s248]]
    %s250 = smul.addr %s249, 16
    %s251 = scalar_lea.hbm %s1, %s250
    %s252 = scalar_lea.vmem [#allocation2], 14
    %s253 = scalar_lea.sflag [#allocation3], 14
    // Predicated region
    $region58: #{tpu_custom_call.1} parent=1 // pred_check
      _
    $region59: #{tpu_custom_call.1} parent=1 // pred_check_branch
      %255 = sbr.rel target = $region61
    $region60: #{tpu_custom_call.1} parent=1 // pred_region
      %256 = sst [smem:[#allocation10]] [#allocation39]
      %257 = sst [smem:[#allocation11]] [#allocation38]
    $region61: #{tpu_custom_call.1} parent=1 // pred_fallthru
      _
    %259 = shalt.err (0)
    %s261 = sshll.u32 %s252, 4
    %s262 = int_to_ptr.vmem [resolvable:$true] %s261
    %264 = dma.hbm_to_vmem [thread:$0]  %s251, 16, %s262, %s253
    %s265 = sadd.s32 %s12, 15
    %s266 = sld [smem:[#allocation5 + %s265]]
    %s267 = smul.addr %s266, 16
    %s268 = scalar_lea.hbm %s1, %s267
    %s269 = scalar_lea.vmem [#allocation2], 15
    %s270 = scalar_lea.sflag [#allocation3], 15
    // Predicated region
    $region62: #{tpu_custom_call.1} parent=1 // pred_check
      _
    $region63: #{tpu_custom_call.1} parent=1 // pred_check_branch
      %272 = sbr.rel target = $region65
    $region64: #{tpu_custom_call.1} parent=1 // pred_region
      %273 = sst [smem:[#allocation10]] [#allocation41]
      %274 = sst [smem:[#allocation11]] [#allocation40]
    $region65: #{tpu_custom_call.1} parent=1 // pred_fallthru
      _
    %276 = shalt.err (0)
    %s278 = sshll.u32 %s269, 4
    %s279 = int_to_ptr.vmem [resolvable:$true] %s278
    %281 = dma.hbm_to_vmem [thread:$0]  %s268, 16, %s279, %s270
    %s282 = smul.u32 1, 1
    %s283 = sshll.u32 %s282, 4
    %284 = dma.done [#allocation3], %s283
    %s285 = sshll.u32 %s282, 4
    %286 = dma.done %s32, %s285
    %s287 = sshll.u32 %s282, 4
    %288 = dma.done %s49, %s287
    %s289 = sshll.u32 %s282, 4
    %290 = dma.done %s66, %s289
    %s291 = sshll.u32 %s282, 4
    %292 = dma.done %s83, %s291
    %s293 = sshll.u32 %s282, 4
    %294 = dma.done %s100, %s293
    %s295 = sshll.u32 %s282, 4
    %296 = dma.done %s117, %s295
    %s297 = sshll.u32 %s282, 4
    %298 = dma.done %s134, %s297
    %v299 = vld [vmem:[#allocation2] sm:$0xff]
    %300 = vst [vmem:[#allocation6] sm:$0xff] %v299
    %s301 = sadd.s32 %s12, 16
    %s302 = sld [smem:[#allocation5 + %s301]]
    %s303 = smul.addr %s302, 16
    %s304 = scalar_lea.hbm %s1, %s303
    // Predicated region
    $region66: #{tpu_custom_call.1} parent=1 // pred_check
      _
    $region67: #{tpu_custom_call.1} parent=1 // pred_check_branch
      %306 = sbr.rel target = $region69
    $region68: #{tpu_custom_call.1} parent=1 // pred_region
      %307 = sst [smem:[#allocation10]] [#allocation43]
      %308 = sst [smem:[#allocation11]] [#allocation42]
    $region69: #{tpu_custom_call.1} parent=1 // pred_fallthru
      _
    %310 = shalt.err (0)
    %s312 = sshll.u32 [#allocation2], 4
    %s313 = int_to_ptr.vmem [resolvable:$true] %s312
    %315 = dma.hbm_to_vmem [thread:$0]  %s304, 16, %s313, [#allocation3]
    %s316 = sadd.s32 %s12, 17
    %s317 = sld [smem:[#allocation5 + %s316]]
    %s318 = smul.addr %s317, 16
    %s319 = scalar_lea.hbm %s1, %s318
    // Predicated region
    $region70: #{tpu_custom_call.1} parent=1 // pred_check
      _
    $region71: #{tpu_custom_call.1} parent=1 // pred_check_branch
      %321 = sbr.rel target = $region73
    $region72: #{tpu_custom_call.1} parent=1 // pred_region
      %322 = sst [smem:[#allocation10]] [#allocation45]
      %323 = sst [smem:[#allocation11]] [#allocation44]
    $region73: #{tpu_custom_call.1} parent=1 // pred_fallthru
      _
    %325 = shalt.err (0)
    %s327 = sshll.u32 %s31, 4
    %s328 = int_to_ptr.vmem [resolvable:$true] %s327
    %330 = dma.hbm_to_vmem [thread:$0]  %s319, 16, %s328, %s32
    %s331 = sadd.s32 %s12, 18
    %s332 = sld [smem:[#allocation5 + %s331]]
    %s333 = smul.addr %s332, 16
    %s334 = scalar_lea.hbm %s1, %s333
    // Predicated region
    $region74: #{tpu_custom_call.1} parent=1 // pred_check
      _
    $region75: #{tpu_custom_call.1} parent=1 // pred_check_branch
      %336 = sbr.rel target = $region77
    $region76: #{tpu_custom_call.1} parent=1 // pred_region
      %337 = sst [smem:[#allocation10]] [#allocation47]
      %338 = sst [smem:[#allocation11]] [#allocation46]
    $region77: #{tpu_custom_call.1} parent=1 // pred_fallthru
      _
    %340 = shalt.err (0)
    %s342 = sshll.u32 %s48, 4
    %s343 = int_to_ptr.vmem [resolvable:$true] %s342
    %345 = dma.hbm_to_vmem [thread:$0]  %s334, 16, %s343, %s49
    %s346 = sadd.s32 %s12, 19
    %s347 = sld [smem:[#allocation5 + %s346]]
    %s348 = smul.addr %s347, 16
    %s349 = scalar_lea.hbm %s1, %s348
    // Predicated region
    $region78: #{tpu_custom_call.1} parent=1 // pred_check
      _
    $region79: #{tpu_custom_call.1} parent=1 // pred_check_branch
      %351 = sbr.rel target = $region81
    $region80: #{tpu_custom_call.1} parent=1 // pred_region
      %352 = sst [smem:[#allocation10]] [#allocation49]
      %353 = sst [smem:[#allocation11]] [#allocation48]
    $region81: #{tpu_custom_call.1} parent=1 // pred_fallthru
      _
    %355 = shalt.err (0)
    %s357 = sshll.u32 %s65, 4
    %s358 = int_to_ptr.vmem [resolvable:$true] %s357
    %360 = dma.hbm_to_vmem [thread:$0]  %s349, 16, %s358, %s66
    %s361 = sadd.s32 %s12, 20
    %s362 = sld [smem:[#allocation5 + %s361]]
    %s363 = smul.addr %s362, 16
    %s364 = scalar_lea.hbm %s1, %s363
    // Predicated region
    $region82: #{tpu_custom_call.1} parent=1 // pred_check
      _
    $region83: #{tpu_custom_call.1} parent=1 // pred_check_branch
      %366 = sbr.rel target = $region85
    $region84: #{tpu_custom_call.1} parent=1 // pred_region
      %367 = sst [smem:[#allocation10]] [#allocation51]
      %368 = sst [smem:[#allocation11]] [#allocation50]
    $region85: #{tpu_custom_call.1} parent=1 // pred_fallthru
      _
    %370 = shalt.err (0)
    %s372 = sshll.u32 %s82, 4
    %s373 = int_to_ptr.vmem [resolvable:$true] %s372
    %375 = dma.hbm_to_vmem [thread:$0]  %s364, 16, %s373, %s83
    %s376 = sadd.s32 %s12, 21
    %s377 = sld [smem:[#allocation5 + %s376]]
    %s378 = smul.addr %s377, 16
    %s379 = scalar_lea.hbm %s1, %s378
    // Predicated region
    $region86: #{tpu_custom_call.1} parent=1 // pred_check
      _
    $region87: #{tpu_custom_call.1} parent=1 // pred_check_branch
      %381 = sbr.rel target = $region89
    $region88: #{tpu_custom_call.1} parent=1 // pred_region
      %382 = sst [smem:[#allocation10]] [#allocation53]
      %383 = sst [smem:[#allocation11]] [#allocation52]
    $region89: #{tpu_custom_call.1} parent=1 // pred_fallthru
      _
    %385 = shalt.err (0)
    %s387 = sshll.u32 %s99, 4
    %s388 = int_to_ptr.vmem [resolvable:$true] %s387
    %390 = dma.hbm_to_vmem [thread:$0]  %s379, 16, %s388, %s100
    %s391 = sadd.s32 %s12, 22
    %s392 = sld [smem:[#allocation5 + %s391]]
    %s393 = smul.addr %s392, 16
    %s394 = scalar_lea.hbm %s1, %s393
    // Predicated region
    $region90: #{tpu_custom_call.1} parent=1 // pred_check
      _
    $region91: #{tpu_custom_call.1} parent=1 // pred_check_branch
      %396 = sbr.rel target = $region93
    $region92: #{tpu_custom_call.1} parent=1 // pred_region
      %397 = sst [smem:[#allocation10]] [#allocation55]
      %398 = sst [smem:[#allocation11]] [#allocation54]
    $region93: #{tpu_custom_call.1} parent=1 // pred_fallthru
      _
    %400 = shalt.err (0)
    %s402 = sshll.u32 %s116, 4
    %s403 = int_to_ptr.vmem [resolvable:$true] %s402
    %405 = dma.hbm_to_vmem [thread:$0]  %s394, 16, %s403, %s117
    %s406 = sadd.s32 %s12, 23
    %s407 = sld [smem:[#allocation5 + %s406]]
    %s408 = smul.addr %s407, 16
    %s409 = scalar_lea.hbm %s1, %s408
    // Predicated region
    $region94: #{tpu_custom_call.1} parent=1 // pred_check
      _
    $region95: #{tpu_custom_call.1} parent=1 // pred_check_branch
      %411 = sbr.rel target = $region97
    $region96: #{tpu_custom_call.1} parent=1 // pred_region
      %412 = sst [smem:[#allocation10]] [#allocation57]
      %413 = sst [smem:[#allocation11]] [#allocation56]
    $region97: #{tpu_custom_call.1} parent=1 // pred_fallthru
      _
    %415 = shalt.err (0)
    %s417 = sshll.u32 %s133, 4
    %s418 = int_to_ptr.vmem [resolvable:$true] %s417
    %420 = dma.hbm_to_vmem [thread:$0]  %s409, 16, %s418, %s134
    %s421 = sshll.u32 %s282, 4
    %422 = dma.done %s151, %s421
    %s423 = sshll.u32 %s282, 4
    %424 = dma.done %s168, %s423
    %s425 = sshll.u32 %s282, 4
    %426 = dma.done %s185, %s425
    %s427 = sshll.u32 %s282, 4
    %428 = dma.done %s202, %s427
    %s429 = sshll.u32 %s282, 4
    %430 = dma.done %s219, %s429
    %s431 = sshll.u32 %s282, 4
    %432 = dma.done %s236, %s431
    %s433 = sshll.u32 %s282, 4
    %434 = dma.done %s253, %s433
    %s435 = sshll.u32 %s282, 4
    %436 = dma.done %s270, %s435
    %v437 = vld [vmem:[%s150] sm:$0xff]
    %438 = vst [vmem:[#allocation6 + $0x8] sm:$0xff] %v437
    %s439 = sadd.s32 %s12, 24
    %s440 = sld [smem:[#allocation5 + %s439]]
    %s441 = smul.addr %s440, 16
    %s442 = scalar_lea.hbm %s1, %s441
    // Predicated region
    $region98: #{tpu_custom_call.1} parent=1 // pred_check
      _
    $region99: #{tpu_custom_call.1} parent=1 // pred_check_branch
      %444 = sbr.rel target = $region101
    $region100: #{tpu_custom_call.1} parent=1 // pred_region
      %445 = sst [smem:[#allocation10]] [#allocation59]
      %446 = sst [smem:[#allocation11]] [#allocation58]
    $region101: #{tpu_custom_call.1} parent=1 // pred_fallthru
      _
    %448 = shalt.err (0)
    %s450 = sshll.u32 %s150, 4
    %s451 = int_to_ptr.vmem [resolvable:$true] %s450
    %453 = dma.hbm_to_vmem [thread:$0]  %s442, 16, %s451, %s151
    %s454 = sadd.s32 %s12, 25
    %s455 = sld [smem:[#allocation5 + %s454]]
    %s456 = smul.addr %s455, 16
    %s457 = scalar_lea.hbm %s1, %s456
    // Predicated region
    $region102: #{tpu_custom_call.1} parent=1 // pred_check
      _
    $region103: #{tpu_custom_call.1} parent=1 // pred_check_branch
      %459 = sbr.rel target = $region105
    $region104: #{tpu_custom_call.1} parent=1 // pred_region
      %460 = sst [smem:[#allocation10]] [#allocation61]
      %461 = sst [smem:[#allocation11]] [#allocation60]
    $region105: #{tpu_custom_call.1} parent=1 // pred_fallthru
      _
    %463 = shalt.err (0)
    %s465 = sshll.u32 %s167, 4
    %s466 = int_to_ptr.vmem [resolvable:$true] %s465
    %468 = dma.hbm_to_vmem [thread:$0]  %s457, 16, %s466, %s168
    %s469 = sadd.s32 %s12, 26
    %s470 = sld [smem:[#allocation5 + %s469]]
    %s471 = smul.addr %s470, 16
    %s472 = scalar_lea.hbm %s1, %s471
    // Predicated region
    $region106: #{tpu_custom_call.1} parent=1 // pred_check
      _
    $region107: #{tpu_custom_call.1} parent=1 // pred_check_branch
      %474 = sbr.rel target = $region109
    $region108: #{tpu_custom_call.1} parent=1 // pred_region
      %475 = sst [smem:[#allocation10]] [#allocation63]
      %476 = sst [smem:[#allocation11]] [#allocation62]
    $region109: #{tpu_custom_call.1} parent=1 // pred_fallthru
      _
    %478 = shalt.err (0)
    %s480 = sshll.u32 %s184, 4
    %s481 = int_to_ptr.vmem [resolvable:$true] %s480
    %483 = dma.hbm_to_vmem [thread:$0]  %s472, 16, %s481, %s185
    %s484 = sadd.s32 %s12, 27
    %s485 = sld [smem:[#allocation5 + %s484]]
    %s486 = smul.addr %s485, 16
    %s487 = scalar_lea.hbm %s1, %s486
    // Predicated region
    $region110: #{tpu_custom_call.1} parent=1 // pred_check
      _
    $region111: #{tpu_custom_call.1} parent=1 // pred_check_branch
      %489 = sbr.rel target = $region113
    $region112: #{tpu_custom_call.1} parent=1 // pred_region
      %490 = sst [smem:[#allocation10]] [#allocation65]
      %491 = sst [smem:[#allocation11]] [#allocation64]
    $region113: #{tpu_custom_call.1} parent=1 // pred_fallthru
      _
    %493 = shalt.err (0)
    %s495 = sshll.u32 %s201, 4
    %s496 = int_to_ptr.vmem [resolvable:$true] %s495
    %498 = dma.hbm_to_vmem [thread:$0]  %s487, 16, %s496, %s202
    %s499 = sadd.s32 %s12, 28
    %s500 = sld [smem:[#allocation5 + %s499]]
    %s501 = smul.addr %s500, 16
    %s502 = scalar_lea.hbm %s1, %s501
    // Predicated region
    $region114: #{tpu_custom_call.1} parent=1 // pred_check
      _
    $region115: #{tpu_custom_call.1} parent=1 // pred_check_branch
      %504 = sbr.rel target = $region117
    $region116: #{tpu_custom_call.1} parent=1 // pred_region
      %505 = sst [smem:[#allocation10]] [#allocation67]
      %506 = sst [smem:[#allocation11]] [#allocation66]
    $region117: #{tpu_custom_call.1} parent=1 // pred_fallthru
      _
    %508 = shalt.err (0)
    %s510 = sshll.u32 %s218, 4
    %s511 = int_to_ptr.vmem [resolvable:$true] %s510
    %513 = dma.hbm_to_vmem [thread:$0]  %s502, 16, %s511, %s219
    %s514 = sadd.s32 %s12, 29
    %s515 = sld [smem:[#allocation5 + %s514]]
    %s516 = smul.addr %s515, 16
    %s517 = scalar_lea.hbm %s1, %s516
    // Predicated region
    $region118: #{tpu_custom_call.1} parent=1 // pred_check
      _
    $region119: #{tpu_custom_call.1} parent=1 // pred_check_branch
      %519 = sbr.rel target = $region121
    $region120: #{tpu_custom_call.1} parent=1 // pred_region
      %520 = sst [smem:[#allocation10]] [#allocation69]
      %521 = sst [smem:[#allocation11]] [#allocation68]
    $region121: #{tpu_custom_call.1} parent=1 // pred_fallthru
      _
    %523 = shalt.err (0)
    %s525 = sshll.u32 %s235, 4
    %s526 = int_to_ptr.vmem [resolvable:$true] %s525
    %528 = dma.hbm_to_vmem [thread:$0]  %s517, 16, %s526, %s236
    %s529 = sadd.s32 %s12, 30
    %s530 = sld [smem:[#allocation5 + %s529]]
    %s531 = smul.addr %s530, 16
    %s532 = scalar_lea.hbm %s1, %s531
    // Predicated region
    $region122: #{tpu_custom_call.1} parent=1 // pred_check
      _
    $region123: #{tpu_custom_call.1} parent=1 // pred_check_branch
      %534 = sbr.rel target = $region125
    $region124: #{tpu_custom_call.1} parent=1 // pred_region
      %535 = sst [smem:[#allocation10]] [#allocation71]
      %536 = sst [smem:[#allocation11]] [#allocation70]
    $region125: #{tpu_custom_call.1} parent=1 // pred_fallthru
      _
    %538 = shalt.err (0)
    %s540 = sshll.u32 %s252, 4
    %s541 = int_to_ptr.vmem [resolvable:$true] %s540
    %543 = dma.hbm_to_vmem [thread:$0]  %s532, 16, %s541, %s253
    %s544 = sadd.s32 %s12, 31
    %s545 = sld [smem:[#allocation5 + %s544]]
    %s546 = smul.addr %s545, 16
    %s547 = scalar_lea.hbm %s1, %s546
    // Predicated region
    $region126: #{tpu_custom_call.1} parent=1 // pred_check
      _
    $region127: #{tpu_custom_call.1} parent=1 // pred_check_branch
      %549 = sbr.rel target = $region129
    $region128: #{tpu_custom_call.1} parent=1 // pred_region
      %550 = sst [smem:[#allocation10]] [#allocation73]
      %551 = sst [smem:[#allocation11]] [#allocation72]
    $region129: #{tpu_custom_call.1} parent=1 // pred_fallthru
      _
    %553 = shalt.err (0)
    %s555 = sshll.u32 %s269, 4
    %s556 = int_to_ptr.vmem [resolvable:$true] %s555
    %558 = dma.hbm_to_vmem [thread:$0]  %s547, 16, %s556, %s270
    %s559 = sshll.u32 %s282, 4
    %560 = dma.done [#allocation3], %s559
    %s561 = sshll.u32 %s282, 4
    %562 = dma.done %s32, %s561
    %s563 = sshll.u32 %s282, 4
    %564 = dma.done %s49, %s563
    %s565 = sshll.u32 %s282, 4
    %566 = dma.done %s66, %s565
    %s567 = sshll.u32 %s282, 4
    %568 = dma.done %s83, %s567
    %s569 = sshll.u32 %s282, 4
    %570 = dma.done %s100, %s569
    %s571 = sshll.u32 %s282, 4
    %572 = dma.done %s117, %s571
    %s573 = sshll.u32 %s282, 4
    %574 = dma.done %s134, %s573
    %v575 = vld [vmem:[#allocation2] sm:$0xff]
    %576 = vst [vmem:[#allocation6 + $0x10] sm:$0xff] %v575
    %s577 = sadd.s32 %s12, 32
    %s578 = sld [smem:[#allocation5 + %s577]]
    %s579 = smul.addr %s578, 16
    %s580 = scalar_lea.hbm %s1, %s579
    // Predicated region
    $region130: #{tpu_custom_call.1} parent=1 // pred_check
      _
    $region131: #{tpu_custom_call.1} parent=1 // pred_check_branch
      %582 = sbr.rel target = $region133
    $region132: #{tpu_custom_call.1} parent=1 // pred_region
      %583 = sst [smem:[#allocation10]] [#allocation75]
      %584 = sst [smem:[#allocation11]] [#allocation74]
    $region133: #{tpu_custom_call.1} parent=1 // pred_fallthru
      _
    %586 = shalt.err (0)
    %s588 = sshll.u32 [#allocation2], 4
    %s589 = int_to_ptr.vmem [resolvable:$true] %s588
    %591 = dma.hbm_to_vmem [thread:$0]  %s580, 16, %s589, [#allocation3]
    %s592 = sadd.s32 %s12, 33
    %s593 = sld [smem:[#allocation5 + %s592]]
    %s594 = smul.addr %s593, 16
    %s595 = scalar_lea.hbm %s1, %s594
    // Predicated region
    $region134: #{tpu_custom_call.1} parent=1 // pred_check
      _
    $region135: #{tpu_custom_call.1} parent=1 // pred_check_branch
      %597 = sbr.rel target = $region137
    $region136: #{tpu_custom_call.1} parent=1 // pred_region
      %598 = sst [smem:[#allocation10]] [#allocation77]
      %599 = sst [smem:[#allocation11]] [#allocation76]
    $region137: #{tpu_custom_call.1} parent=1 // pred_fallthru
      _
    %601 = shalt.err (0)
    %s603 = sshll.u32 %s31, 4
    %s604 = int_to_ptr.vmem [resolvable:$true] %s603
    %606 = dma.hbm_to_vmem [thread:$0]  %s595, 16, %s604, %s32
    %s607 = sadd.s32 %s12, 34
    %s608 = sld [smem:[#allocation5 + %s607]]
    %s609 = smul.addr %s608, 16
    %s610 = scalar_lea.hbm %s1, %s609
    // Predicated region
    $region138: #{tpu_custom_call.1} parent=1 // pred_check
      _
    $region139: #{tpu_custom_call.1} parent=1 // pred_check_branch
      %612 = sbr.rel target = $region141
    $region140: #{tpu_custom_call.1} parent=1 // pred_region
      %613 = sst [smem:[#allocation10]] [#allocation79]
      %614 = sst [smem:[#allocation11]] [#allocation78]
    $region141: #{tpu_custom_call.1} parent=1 // pred_fallthru
      _
    %616 = shalt.err (0)
    %s618 = sshll.u32 %s48, 4
    %s619 = int_to_ptr.vmem [resolvable:$true] %s618
    %621 = dma.hbm_to_vmem [thread:$0]  %s610, 16, %s619, %s49
    %s622 = sadd.s32 %s12, 35
    %s623 = sld [smem:[#allocation5 + %s622]]
    %s624 = smul.addr %s623, 16
    %s625 = scalar_lea.hbm %s1, %s624
    // Predicated region
    $region142: #{tpu_custom_call.1} parent=1 // pred_check
      _
    $region143: #{tpu_custom_call.1} parent=1 // pred_check_branch
      %627 = sbr.rel target = $region145
    $region144: #{tpu_custom_call.1} parent=1 // pred_region
      %628 = sst [smem:[#allocation10]] [#allocation81]
      %629 = sst [smem:[#allocation11]] [#allocation80]
    $region145: #{tpu_custom_call.1} parent=1 // pred_fallthru
      _
    %631 = shalt.err (0)
    %s633 = sshll.u32 %s65, 4
    %s634 = int_to_ptr.vmem [resolvable:$true] %s633
    %636 = dma.hbm_to_vmem [thread:$0]  %s625, 16, %s634, %s66
    %s637 = sadd.s32 %s12, 36
    %s638 = sld [smem:[#allocation5 + %s637]]
    %s639 = smul.addr %s638, 16
    %s640 = scalar_lea.hbm %s1, %s639
    // Predicated region
    $region146: #{tpu_custom_call.1} parent=1 // pred_check
      _
    $region147: #{tpu_custom_call.1} parent=1 // pred_check_branch
      %642 = sbr.rel target = $region149
    $region148: #{tpu_custom_call.1} parent=1 // pred_region
      %643 = sst [smem:[#allocation10]] [#allocation83]
      %644 = sst [smem:[#allocation11]] [#allocation82]
    $region149: #{tpu_custom_call.1} parent=1 // pred_fallthru
      _
    %646 = shalt.err (0)
    %s648 = sshll.u32 %s82, 4
    %s649 = int_to_ptr.vmem [resolvable:$true] %s648
    %651 = dma.hbm_to_vmem [thread:$0]  %s640, 16, %s649, %s83
    %s652 = sadd.s32 %s12, 37
    %s653 = sld [smem:[#allocation5 + %s652]]
    %s654 = smul.addr %s653, 16
    %s655 = scalar_lea.hbm %s1, %s654
    // Predicated region
    $region150: #{tpu_custom_call.1} parent=1 // pred_check
      _
    $region151: #{tpu_custom_call.1} parent=1 // pred_check_branch
      %657 = sbr.rel target = $region153
    $region152: #{tpu_custom_call.1} parent=1 // pred_region
      %658 = sst [smem:[#allocation10]] [#allocation85]
      %659 = sst [smem:[#allocation11]] [#allocation84]
    $region153: #{tpu_custom_call.1} parent=1 // pred_fallthru
      _
    %661 = shalt.err (0)
    %s663 = sshll.u32 %s99, 4
    %s664 = int_to_ptr.vmem [resolvable:$true] %s663
    %666 = dma.hbm_to_vmem [thread:$0]  %s655, 16, %s664, %s100
    %s667 = sadd.s32 %s12, 38
    %s668 = sld [smem:[#allocation5 + %s667]]
    %s669 = smul.addr %s668, 16
    %s670 = scalar_lea.hbm %s1, %s669
    // Predicated region
    $region154: #{tpu_custom_call.1} parent=1 // pred_check
      _
    $region155: #{tpu_custom_call.1} parent=1 // pred_check_branch
      %672 = sbr.rel target = $region157
    $region156: #{tpu_custom_call.1} parent=1 // pred_region
      %673 = sst [smem:[#allocation10]] [#allocation87]
      %674 = sst [smem:[#allocation11]] [#allocation86]
    $region157: #{tpu_custom_call.1} parent=1 // pred_fallthru
      _
    %676 = shalt.err (0)
    %s678 = sshll.u32 %s116, 4
    %s679 = int_to_ptr.vmem [resolvable:$true] %s678
    %681 = dma.hbm_to_vmem [thread:$0]  %s670, 16, %s679, %s117
    %s682 = sadd.s32 %s12, 39
    %s683 = sld [smem:[#allocation5 + %s682]]
    %s684 = smul.addr %s683, 16
    %s685 = scalar_lea.hbm %s1, %s684
    // Predicated region
    $region158: #{tpu_custom_call.1} parent=1 // pred_check
      _
    $region159: #{tpu_custom_call.1} parent=1 // pred_check_branch
      %687 = sbr.rel target = $region161
    $region160: #{tpu_custom_call.1} parent=1 // pred_region
      %688 = sst [smem:[#allocation10]] [#allocation89]
      %689 = sst [smem:[#allocation11]] [#allocation88]
    $region161: #{tpu_custom_call.1} parent=1 // pred_fallthru
      _
    %691 = shalt.err (0)
    %s693 = sshll.u32 %s133, 4
    %s694 = int_to_ptr.vmem [resolvable:$true] %s693
    %696 = dma.hbm_to_vmem [thread:$0]  %s685, 16, %s694, %s134
    %s697 = sshll.u32 %s282, 4
    %698 = dma.done %s151, %s697
    %s699 = sshll.u32 %s282, 4
    %700 = dma.done %s168, %s699
    %s701 = sshll.u32 %s282, 4
    %702 = dma.done %s185, %s701
    %s703 = sshll.u32 %s282, 4
    %704 = dma.done %s202, %s703
    %s705 = sshll.u32 %s282, 4
    %706 = dma.done %s219, %s705
    %s707 = sshll.u32 %s282, 4
    %708 = dma.done %s236, %s707
    %s709 = sshll.u32 %s282, 4
    %710 = dma.done %s253, %s709
    %s711 = sshll.u32 %s282, 4
    %712 = dma.done %s270, %s711
    %v713 = vld [vmem:[%s150] sm:$0xff]
    %714 = vst [vmem:[#allocation6 + $0x18] sm:$0xff] %v713
    %s715 = sadd.s32 %s12, 40
    %s716 = sld [smem:[#allocation5 + %s715]]
    %s717 = smul.addr %s716, 16
    %s718 = scalar_lea.hbm %s1, %s717
    // Predicated region
    $region162: #{tpu_custom_call.1} parent=1 // pred_check
      _
    $region163: #{tpu_custom_call.1} parent=1 // pred_check_branch
      %720 = sbr.rel target = $region165
    $region164: #{tpu_custom_call.1} parent=1 // pred_region
      %721 = sst [smem:[#allocation10]] [#allocation91]
      %722 = sst [smem:[#allocation11]] [#allocation90]
    $region165: #{tpu_custom_call.1} parent=1 // pred_fallthru
      _
    %724 = shalt.err (0)
    %s726 = sshll.u32 %s150, 4
    %s727 = int_to_ptr.vmem [resolvable:$true] %s726
    %729 = dma.hbm_to_vmem [thread:$0]  %s718, 16, %s727, %s151
    %s730 = sadd.s32 %s12, 41
    %s731 = sld [smem:[#allocation5 + %s730]]
    %s732 = smul.addr %s731, 16
    %s733 = scalar_lea.hbm %s1, %s732
    // Predicated region
    $region166: #{tpu_custom_call.1} parent=1 // pred_check
      _
    $region167: #{tpu_custom_call.1} parent=1 // pred_check_branch
      %735 = sbr.rel target = $region169
    $region168: #{tpu_custom_call.1} parent=1 // pred_region
      %736 = sst [smem:[#allocation10]] [#allocation93]
      %737 = sst [smem:[#allocation11]] [#allocation92]
    $region169: #{tpu_custom_call.1} parent=1 // pred_fallthru
      _
    %739 = shalt.err (0)
    %s741 = sshll.u32 %s167, 4
    %s742 = int_to_ptr.vmem [resolvable:$true] %s741
    %744 = dma.hbm_to_vmem [thread:$0]  %s733, 16, %s742, %s168
    %s745 = sadd.s32 %s12, 42
    %s746 = sld [smem:[#allocation5 + %s745]]
    %s747 = smul.addr %s746, 16
    %s748 = scalar_lea.hbm %s1, %s747
    // Predicated region
    $region170: #{tpu_custom_call.1} parent=1 // pred_check
      _
    $region171: #{tpu_custom_call.1} parent=1 // pred_check_branch
      %750 = sbr.rel target = $region173
    $region172: #{tpu_custom_call.1} parent=1 // pred_region
      %751 = sst [smem:[#allocation10]] [#allocation95]
      %752 = sst [smem:[#allocation11]] [#allocation94]
    $region173: #{tpu_custom_call.1} parent=1 // pred_fallthru
      _
    %754 = shalt.err (0)
    %s756 = sshll.u32 %s184, 4
    %s757 = int_to_ptr.vmem [resolvable:$true] %s756
    %759 = dma.hbm_to_vmem [thread:$0]  %s748, 16, %s757, %s185
    %s760 = sadd.s32 %s12, 43
    %s761 = sld [smem:[#allocation5 + %s760]]
    %s762 = smul.addr %s761, 16
    %s763 = scalar_lea.hbm %s1, %s762
    // Predicated region
    $region174: #{tpu_custom_call.1} parent=1 // pred_check
      _
    $region175: #{tpu_custom_call.1} parent=1 // pred_check_branch
      %765 = sbr.rel target = $region177
    $region176: #{tpu_custom_call.1} parent=1 // pred_region
      %766 = sst [smem:[#allocation10]] [#allocation97]
      %767 = sst [smem:[#allocation11]] [#allocation96]
    $region177: #{tpu_custom_call.1} parent=1 // pred_fallthru
      _
    %769 = shalt.err (0)
    %s771 = sshll.u32 %s201, 4
    %s772 = int_to_ptr.vmem [resolvable:$true] %s771
    %774 = dma.hbm_to_vmem [thread:$0]  %s763, 16, %s772, %s202
    %s775 = sadd.s32 %s12, 44
    %s776 = sld [smem:[#allocation5 + %s775]]
    %s777 = smul.addr %s776, 16
    %s778 = scalar_lea.hbm %s1, %s777
    // Predicated region
    $region178: #{tpu_custom_call.1} parent=1 // pred_check
      _
    $region179: #{tpu_custom_call.1} parent=1 // pred_check_branch
      %780 = sbr.rel target = $region181
    $region180: #{tpu_custom_call.1} parent=1 // pred_region
      %781 = sst [smem:[#allocation10]] [#allocation99]
      %782 = sst [smem:[#allocation11]] [#allocation98]
    $region181: #{tpu_custom_call.1} parent=1 // pred_fallthru
      _
    %784 = shalt.err (0)
    %s786 = sshll.u32 %s218, 4
    %s787 = int_to_ptr.vmem [resolvable:$true] %s786
    %789 = dma.hbm_to_vmem [thread:$0]  %s778, 16, %s787, %s219
    %s790 = sadd.s32 %s12, 45
    %s791 = sld [smem:[#allocation5 + %s790]]
    %s792 = smul.addr %s791, 16
    %s793 = scalar_lea.hbm %s1, %s792
    // Predicated region
    $region182: #{tpu_custom_call.1} parent=1 // pred_check
      _
    $region183: #{tpu_custom_call.1} parent=1 // pred_check_branch
      %795 = sbr.rel target = $region185
    $region184: #{tpu_custom_call.1} parent=1 // pred_region
      %796 = sst [smem:[#allocation10]] [#allocation101]
      %797 = sst [smem:[#allocation11]] [#allocation100]
    $region185: #{tpu_custom_call.1} parent=1 // pred_fallthru
      _
    %799 = shalt.err (0)
    %s801 = sshll.u32 %s235, 4
    %s802 = int_to_ptr.vmem [resolvable:$true] %s801
    %804 = dma.hbm_to_vmem [thread:$0]  %s793, 16, %s802, %s236
    %s805 = sadd.s32 %s12, 46
    %s806 = sld [smem:[#allocation5 + %s805]]
    %s807 = smul.addr %s806, 16
    %s808 = scalar_lea.hbm %s1, %s807
    // Predicated region
    $region186: #{tpu_custom_call.1} parent=1 // pred_check
      _
    $region187: #{tpu_custom_call.1} parent=1 // pred_check_branch
      %810 = sbr.rel target = $region189
    $region188: #{tpu_custom_call.1} parent=1 // pred_region
      %811 = sst [smem:[#allocation10]] [#allocation103]
      %812 = sst [smem:[#allocation11]] [#allocation102]
    $region189: #{tpu_custom_call.1} parent=1 // pred_fallthru
      _
    %814 = shalt.err (0)
    %s816 = sshll.u32 %s252, 4
    %s817 = int_to_ptr.vmem [resolvable:$true] %s816
    %819 = dma.hbm_to_vmem [thread:$0]  %s808, 16, %s817, %s253
    %s820 = sadd.s32 %s12, 47
    %s821 = sld [smem:[#allocation5 + %s820]]
    %s822 = smul.addr %s821, 16
    %s823 = scalar_lea.hbm %s1, %s822
    // Predicated region
    $region190: #{tpu_custom_call.1} parent=1 // pred_check
      _
    $region191: #{tpu_custom_call.1} parent=1 // pred_check_branch
      %825 = sbr.rel target = $region193
    $region192: #{tpu_custom_call.1} parent=1 // pred_region
      %826 = sst [smem:[#allocation10]] [#allocation105]
      %827 = sst [smem:[#allocation11]] [#allocation104]
    $region193: #{tpu_custom_call.1} parent=1 // pred_fallthru
      _
    %829 = shalt.err (0)
    %s831 = sshll.u32 %s269, 4
    %s832 = int_to_ptr.vmem [resolvable:$true] %s831
    %834 = dma.hbm_to_vmem [thread:$0]  %s823, 16, %s832, %s270
    %s835 = sshll.u32 %s282, 4
    %836 = dma.done [#allocation3], %s835
    %s837 = sshll.u32 %s282, 4
    %838 = dma.done %s32, %s837
    %s839 = sshll.u32 %s282, 4
    %840 = dma.done %s49, %s839
    %s841 = sshll.u32 %s282, 4
    %842 = dma.done %s66, %s841
    %s843 = sshll.u32 %s282, 4
    %844 = dma.done %s83, %s843
    %s845 = sshll.u32 %s282, 4
    %846 = dma.done %s100, %s845
    %s847 = sshll.u32 %s282, 4
    %848 = dma.done %s117, %s847
    %s849 = sshll.u32 %s282, 4
    %850 = dma.done %s134, %s849
    %v851 = vld [vmem:[#allocation2] sm:$0xff]
    %852 = vst [vmem:[#allocation6 + $0x20] sm:$0xff] %v851
    %s853 = sadd.s32 %s12, 48
    %s854 = sld [smem:[#allocation5 + %s853]]
    %s855 = smul.addr %s854, 16
    %s856 = scalar_lea.hbm %s1, %s855
    // Predicated region
    $region194: #{tpu_custom_call.1} parent=1 // pred_check
      _
    $region195: #{tpu_custom_call.1} parent=1 // pred_check_branch
      %858 = sbr.rel target = $region197
    $region196: #{tpu_custom_call.1} parent=1 // pred_region
      %859 = sst [smem:[#allocation10]] [#allocation107]
      %860 = sst [smem:[#allocation11]] [#allocation106]
    $region197: #{tpu_custom_call.1} parent=1 // pred_fallthru
      _
    %862 = shalt.err (0)
    %s864 = sshll.u32 [#allocation2], 4
    %s865 = int_to_ptr.vmem [resolvable:$true] %s864
    %867 = dma.hbm_to_vmem [thread:$0]  %s856, 16, %s865, [#allocation3]
    %s868 = sadd.s32 %s12, 49
    %s869 = sld [smem:[#allocation5 + %s868]]
    %s870 = smul.addr %s869, 16
    %s871 = scalar_lea.hbm %s1, %s870
    // Predicated region
    $region198: #{tpu_custom_call.1} parent=1 // pred_check
      _
    $region199: #{tpu_custom_call.1} parent=1 // pred_check_branch
      %873 = sbr.rel target = $region201
    $region200: #{tpu_custom_call.1} parent=1 // pred_region
      %874 = sst [smem:[#allocation10]] [#allocation109]
      %875 = sst [smem:[#allocation11]] [#allocation108]
    $region201: #{tpu_custom_call.1} parent=1 // pred_fallthru
      _
    %877 = shalt.err (0)
    %s879 = sshll.u32 %s31, 4
    %s880 = int_to_ptr.vmem [resolvable:$true] %s879
    %882 = dma.hbm_to_vmem [thread:$0]  %s871, 16, %s880, %s32
    %s883 = sadd.s32 %s12, 50
    %s884 = sld [smem:[#allocation5 + %s883]]
    %s885 = smul.addr %s884, 16
    %s886 = scalar_lea.hbm %s1, %s885
    // Predicated region
    $region202: #{tpu_custom_call.1} parent=1 // pred_check
      _
    $region203: #{tpu_custom_call.1} parent=1 // pred_check_branch
      %888 = sbr.rel target = $region205
    $region204: #{tpu_custom_call.1} parent=1 // pred_region
      %889 = sst [smem:[#allocation10]] [#allocation111]
      %890 = sst [smem:[#allocation11]] [#allocation110]
    $region205: #{tpu_custom_call.1} parent=1 // pred_fallthru
      _
    %892 = shalt.err (0)
    %s894 = sshll.u32 %s48, 4
    %s895 = int_to_ptr.vmem [resolvable:$true] %s894
    %897 = dma.hbm_to_vmem [thread:$0]  %s886, 16, %s895, %s49
    %s898 = sadd.s32 %s12, 51
    %s899 = sld [smem:[#allocation5 + %s898]]
    %s900 = smul.addr %s899, 16
    %s901 = scalar_lea.hbm %s1, %s900
    // Predicated region
    $region206: #{tpu_custom_call.1} parent=1 // pred_check
      _
    $region207: #{tpu_custom_call.1} parent=1 // pred_check_branch
      %903 = sbr.rel target = $region209
    $region208: #{tpu_custom_call.1} parent=1 // pred_region
      %904 = sst [smem:[#allocation10]] [#allocation113]
      %905 = sst [smem:[#allocation11]] [#allocation112]
    $region209: #{tpu_custom_call.1} parent=1 // pred_fallthru
      _
    %907 = shalt.err (0)
    %s909 = sshll.u32 %s65, 4
    %s910 = int_to_ptr.vmem [resolvable:$true] %s909
    %912 = dma.hbm_to_vmem [thread:$0]  %s901, 16, %s910, %s66
    %s913 = sadd.s32 %s12, 52
    %s914 = sld [smem:[#allocation5 + %s913]]
    %s915 = smul.addr %s914, 16
    %s916 = scalar_lea.hbm %s1, %s915
    // Predicated region
    $region210: #{tpu_custom_call.1} parent=1 // pred_check
      _
    $region211: #{tpu_custom_call.1} parent=1 // pred_check_branch
      %918 = sbr.rel target = $region213
    $region212: #{tpu_custom_call.1} parent=1 // pred_region
      %919 = sst [smem:[#allocation10]] [#allocation115]
      %920 = sst [smem:[#allocation11]] [#allocation114]
    $region213: #{tpu_custom_call.1} parent=1 // pred_fallthru
      _
    %922 = shalt.err (0)
    %s924 = sshll.u32 %s82, 4
    %s925 = int_to_ptr.vmem [resolvable:$true] %s924
    %927 = dma.hbm_to_vmem [thread:$0]  %s916, 16, %s925, %s83
    %s928 = sadd.s32 %s12, 53
    %s929 = sld [smem:[#allocation5 + %s928]]
    %s930 = smul.addr %s929, 16
    %s931 = scalar_lea.hbm %s1, %s930
    // Predicated region
    $region214: #{tpu_custom_call.1} parent=1 // pred_check
      _
    $region215: #{tpu_custom_call.1} parent=1 // pred_check_branch
      %933 = sbr.rel target = $region217
    $region216: #{tpu_custom_call.1} parent=1 // pred_region
      %934 = sst [smem:[#allocation10]] [#allocation117]
      %935 = sst [smem:[#allocation11]] [#allocation116]
    $region217: #{tpu_custom_call.1} parent=1 // pred_fallthru
      _
    %937 = shalt.err (0)
    %s939 = sshll.u32 %s99, 4
    %s940 = int_to_ptr.vmem [resolvable:$true] %s939
    %942 = dma.hbm_to_vmem [thread:$0]  %s931, 16, %s940, %s100
    %s943 = sadd.s32 %s12, 54
    %s944 = sld [smem:[#allocation5 + %s943]]
    %s945 = smul.addr %s944, 16
    %s946 = scalar_lea.hbm %s1, %s945
    // Predicated region
    $region218: #{tpu_custom_call.1} parent=1 // pred_check
      _
    $region219: #{tpu_custom_call.1} parent=1 // pred_check_branch
      %948 = sbr.rel target = $region221
    $region220: #{tpu_custom_call.1} parent=1 // pred_region
      %949 = sst [smem:[#allocation10]] [#allocation119]
      %950 = sst [smem:[#allocation11]] [#allocation118]
    $region221: #{tpu_custom_call.1} parent=1 // pred_fallthru
      _
    %952 = shalt.err (0)
    %s954 = sshll.u32 %s116, 4
    %s955 = int_to_ptr.vmem [resolvable:$true] %s954
    %957 = dma.hbm_to_vmem [thread:$0]  %s946, 16, %s955, %s117
    %s958 = sadd.s32 %s12, 55
    %s959 = sld [smem:[#allocation5 + %s958]]
    %s960 = smul.addr %s959, 16
    %s961 = scalar_lea.hbm %s1, %s960
    // Predicated region
    $region222: #{tpu_custom_call.1} parent=1 // pred_check
      _
    $region223: #{tpu_custom_call.1} parent=1 // pred_check_branch
      %963 = sbr.rel target = $region225
    $region224: #{tpu_custom_call.1} parent=1 // pred_region
      %964 = sst [smem:[#allocation10]] [#allocation121]
      %965 = sst [smem:[#allocation11]] [#allocation120]
    $region225: #{tpu_custom_call.1} parent=1 // pred_fallthru
      _
    %967 = shalt.err (0)
    %s969 = sshll.u32 %s133, 4
    %s970 = int_to_ptr.vmem [resolvable:$true] %s969
    %972 = dma.hbm_to_vmem [thread:$0]  %s961, 16, %s970, %s134
    %s973 = sshll.u32 %s282, 4
    %974 = dma.done %s151, %s973
    %s975 = sshll.u32 %s282, 4
    %976 = dma.done %s168, %s975
    %s977 = sshll.u32 %s282, 4
    %978 = dma.done %s185, %s977
    %s979 = sshll.u32 %s282, 4
    %980 = dma.done %s202, %s979
    %s981 = sshll.u32 %s282, 4
    %982 = dma.done %s219, %s981
    %s983 = sshll.u32 %s282, 4
    %984 = dma.done %s236, %s983
    %s985 = sshll.u32 %s282, 4
    %986 = dma.done %s253, %s985
    %s987 = sshll.u32 %s282, 4
    %988 = dma.done %s270, %s987
    %v989 = vld [vmem:[%s150] sm:$0xff]
    %990 = vst [vmem:[#allocation6 + $0x28] sm:$0xff] %v989
    %s991 = sadd.s32 %s12, 56
    %s992 = sld [smem:[#allocation5 + %s991]]
    %s993 = smul.addr %s992, 16
    %s994 = scalar_lea.hbm %s1, %s993
    // Predicated region
    $region226: #{tpu_custom_call.1} parent=1 // pred_check
      _
    $region227: #{tpu_custom_call.1} parent=1 // pred_check_branch
      %996 = sbr.rel target = $region229
    $region228: #{tpu_custom_call.1} parent=1 // pred_region
      %997 = sst [smem:[#allocation10]] [#allocation123]
      %998 = sst [smem:[#allocation11]] [#allocation122]
    $region229: #{tpu_custom_call.1} parent=1 // pred_fallthru
      _
    %1000 = shalt.err (0)
    %s1002 = sshll.u32 %s150, 4
    %s1003 = int_to_ptr.vmem [resolvable:$true] %s1002
    %1005 = dma.hbm_to_vmem [thread:$0]  %s994, 16, %s1003, %s151
    %s1006 = sadd.s32 %s12, 57
    %s1007 = sld [smem:[#allocation5 + %s1006]]
    %s1008 = smul.addr %s1007, 16
    %s1009 = scalar_lea.hbm %s1, %s1008
    // Predicated region
    $region230: #{tpu_custom_call.1} parent=1 // pred_check
      _
    $region231: #{tpu_custom_call.1} parent=1 // pred_check_branch
      %1011 = sbr.rel target = $region233
    $region232: #{tpu_custom_call.1} parent=1 // pred_region
      %1012 = sst [smem:[#allocation10]] [#allocation125]
      %1013 = sst [smem:[#allocation11]] [#allocation124]
    $region233: #{tpu_custom_call.1} parent=1 // pred_fallthru
      _
    %1015 = shalt.err (0)
    %s1017 = sshll.u32 %s167, 4
    %s1018 = int_to_ptr.vmem [resolvable:$true] %s1017
    %1020 = dma.hbm_to_vmem [thread:$0]  %s1009, 16, %s1018, %s168
    %s1021 = sadd.s32 %s12, 58
    %s1022 = sld [smem:[#allocation5 + %s1021]]
    %s1023 = smul.addr %s1022, 16
    %s1024 = scalar_lea.hbm %s1, %s1023
    // Predicated region
    $region234: #{tpu_custom_call.1} parent=1 // pred_check
      _
    $region235: #{tpu_custom_call.1} parent=1 // pred_check_branch
      %1026 = sbr.rel target = $region237
    $region236: #{tpu_custom_call.1} parent=1 // pred_region
      %1027 = sst [smem:[#allocation10]] [#allocation127]
      %1028 = sst [smem:[#allocation11]] [#allocation126]
    $region237: #{tpu_custom_call.1} parent=1 // pred_fallthru
      _
    %1030 = shalt.err (0)
    %s1032 = sshll.u32 %s184, 4
    %s1033 = int_to_ptr.vmem [resolvable:$true] %s1032
    %1035 = dma.hbm_to_vmem [thread:$0]  %s1024, 16, %s1033, %s185
    %s1036 = sadd.s32 %s12, 59
    %s1037 = sld [smem:[#allocation5 + %s1036]]
    %s1038 = smul.addr %s1037, 16
    %s1039 = scalar_lea.hbm %s1, %s1038
    // Predicated region
    $region238: #{tpu_custom_call.1} parent=1 // pred_check
      _
    $region239: #{tpu_custom_call.1} parent=1 // pred_check_branch
      %1041 = sbr.rel target = $region241
    $region240: #{tpu_custom_call.1} parent=1 // pred_region
      %1042 = sst [smem:[#allocation10]] [#allocation129]
      %1043 = sst [smem:[#allocation11]] [#allocation128]
    $region241: #{tpu_custom_call.1} parent=1 // pred_fallthru
      _
    %1045 = shalt.err (0)
    %s1047 = sshll.u32 %s201, 4
    %s1048 = int_to_ptr.vmem [resolvable:$true] %s1047
    %1050 = dma.hbm_to_vmem [thread:$0]  %s1039, 16, %s1048, %s202
    %s1051 = sadd.s32 %s12, 60
    %s1052 = sld [smem:[#allocation5 + %s1051]]
    %s1053 = smul.addr %s1052, 16
    %s1054 = scalar_lea.hbm %s1, %s1053
    // Predicated region
    $region242: #{tpu_custom_call.1} parent=1 // pred_check
      _
    $region243: #{tpu_custom_call.1} parent=1 // pred_check_branch
      %1056 = sbr.rel target = $region245
    $region244: #{tpu_custom_call.1} parent=1 // pred_region
      %1057 = sst [smem:[#allocation10]] [#allocation131]
      %1058 = sst [smem:[#allocation11]] [#allocation130]
    $region245: #{tpu_custom_call.1} parent=1 // pred_fallthru
      _
    %1060 = shalt.err (0)
    %s1062 = sshll.u32 %s218, 4
    %s1063 = int_to_ptr.vmem [resolvable:$true] %s1062
    %1065 = dma.hbm_to_vmem [thread:$0]  %s1054, 16, %s1063, %s219
    %s1066 = sadd.s32 %s12, 61
    %s1067 = sld [smem:[#allocation5 + %s1066]]
    %s1068 = smul.addr %s1067, 16
    %s1069 = scalar_lea.hbm %s1, %s1068
    // Predicated region
    $region246: #{tpu_custom_call.1} parent=1 // pred_check
      _
    $region247: #{tpu_custom_call.1} parent=1 // pred_check_branch
      %1071 = sbr.rel target = $region249
    $region248: #{tpu_custom_call.1} parent=1 // pred_region
      %1072 = sst [smem:[#allocation10]] [#allocation133]
      %1073 = sst [smem:[#allocation11]] [#allocation132]
    $region249: #{tpu_custom_call.1} parent=1 // pred_fallthru
      _
    %1075 = shalt.err (0)
    %s1077 = sshll.u32 %s235, 4
    %s1078 = int_to_ptr.vmem [resolvable:$true] %s1077
    %1080 = dma.hbm_to_vmem [thread:$0]  %s1069, 16, %s1078, %s236
    %s1081 = sadd.s32 %s12, 62
    %s1082 = sld [smem:[#allocation5 + %s1081]]
    %s1083 = smul.addr %s1082, 16
    %s1084 = scalar_lea.hbm %s1, %s1083
    // Predicated region
    $region250: #{tpu_custom_call.1} parent=1 // pred_check
      _
    $region251: #{tpu_custom_call.1} parent=1 // pred_check_branch
      %1086 = sbr.rel target = $region253
    $region252: #{tpu_custom_call.1} parent=1 // pred_region
      %1087 = sst [smem:[#allocation10]] [#allocation135]
      %1088 = sst [smem:[#allocation11]] [#allocation134]
    $region253: #{tpu_custom_call.1} parent=1 // pred_fallthru
      _
    %1090 = shalt.err (0)
    %s1092 = sshll.u32 %s252, 4
    %s1093 = int_to_ptr.vmem [resolvable:$true] %s1092
    %1095 = dma.hbm_to_vmem [thread:$0]  %s1084, 16, %s1093, %s253
    %s1096 = sadd.s32 %s12, 63
    %s1097 = sld [smem:[#allocation5 + %s1096]]
    %s1098 = smul.addr %s1097, 16
    %s1099 = scalar_lea.hbm %s1, %s1098
    // Predicated region
    $region254: #{tpu_custom_call.1} parent=1 // pred_check
      _
    $region255: #{tpu_custom_call.1} parent=1 // pred_check_branch
      %1101 = sbr.rel target = $region257
    $region256: #{tpu_custom_call.1} parent=1 // pred_region
      %1102 = sst [smem:[#allocation10]] [#allocation137]
      %1103 = sst [smem:[#allocation11]] [#allocation136]
    $region257: #{tpu_custom_call.1} parent=1 // pred_fallthru
      _
    %1105 = shalt.err (0)
    %s1107 = sshll.u32 %s269, 4
    %s1108 = int_to_ptr.vmem [resolvable:$true] %s1107
    %1110 = dma.hbm_to_vmem [thread:$0]  %s1099, 16, %s1108, %s270
    %s1111 = sshll.u32 %s282, 4
    %1112 = dma.done [#allocation3], %s1111
    %s1113 = sshll.u32 %s282, 4
    %1114 = dma.done %s32, %s1113
    %s1115 = sshll.u32 %s282, 4
    %1116 = dma.done %s49, %s1115
    %s1117 = sshll.u32 %s282, 4
    %1118 = dma.done %s66, %s1117
    %s1119 = sshll.u32 %s282, 4
    %1120 = dma.done %s83, %s1119
    %s1121 = sshll.u32 %s282, 4
    %1122 = dma.done %s100, %s1121
    %s1123 = sshll.u32 %s282, 4
    %1124 = dma.done %s117, %s1123
    %s1125 = sshll.u32 %s282, 4
    %1126 = dma.done %s134, %s1125
    %v1127 = vld [vmem:[#allocation2] sm:$0xff]
    %1128 = vst [vmem:[#allocation6 + $0x30] sm:$0xff] %v1127
    %s1129 = sshll.u32 %s282, 4
    %1130 = dma.done %s151, %s1129
    %s1131 = sshll.u32 %s282, 4
    %1132 = dma.done %s168, %s1131
    %s1133 = sshll.u32 %s282, 4
    %1134 = dma.done %s185, %s1133
    %s1135 = sshll.u32 %s282, 4
    %1136 = dma.done %s202, %s1135
    %s1137 = sshll.u32 %s282, 4
    %1138 = dma.done %s219, %s1137
    %s1139 = sshll.u32 %s282, 4
    %1140 = dma.done %s236, %s1139
    %s1141 = sshll.u32 %s282, 4
    %1142 = dma.done %s253, %s1141
    %s1143 = sshll.u32 %s282, 4
    %1144 = dma.done %s270, %s1143
    %v1145 = vld [vmem:[%s150] sm:$0xff]
    %1146 = vst [vmem:[#allocation6 + $0x38] sm:$0xff] %v1145
    // Predicated region
    $region258: #{tpu_custom_call.1} parent=1 // pred_check
      _
    $region259: #{tpu_custom_call.1} parent=1 // pred_check_branch
      %1148 = sbr.rel (0) target = $region261
    $region260: #{tpu_custom_call.1} parent=1 // pred_region
      %s1150 = ssub.s32 1024, 1024
      %1151 = vsyncadd [#allocation7], %s1150
      %s1152 = sshll.u32 [#allocation6], 4
      %s1153 = int_to_ptr.vmem [resolvable:$true] %s1152
      %1158 = dma.vmem_to_hbm [thread:$0]  %s1153, 1024, %s2, [#allocation7], 128, 128, 8
    $region261: #{tpu_custom_call.1} parent=1 // pred_fallthru
      _
    // Predicated region
    $region262: #{tpu_custom_call.1} parent=1 // pred_check
      _
    $region263: #{tpu_custom_call.1} parent=1 // pred_check_branch
      %1160 = sbr.rel (0) target = $region265
    $region264: #{tpu_custom_call.1} parent=1 // pred_region
      %1161 = dma.done [#allocation7], 1024
    $region265: #{tpu_custom_call.1} parent=1 // pred_fallthru
      _
    %1162 = vsyncpa [#allocation7], 1
  %1163 = vsyncmov [#allocation3]
  %s1164 = vpop.sfrf %1163
  %p1165 = scmp.eq.s32.totalorder %s1164, 0
  %p1166 = pneg %p1165
  %1168 = shalt.err (%p1166)
  %s1169 = scalar_lea.sflag [#allocation3], 1
  %1170 = vsyncmov %s1169
  %s1171 = vpop.sfrf %1170
  %p1172 = scmp.eq.s32.totalorder %s1171, 0
  %p1173 = pneg %p1172
  %1175 = shalt.err (%p1173)
  %s1176 = scalar_lea.sflag [#allocation3], 2
  %1177 = vsyncmov %s1176
  %s1178 = vpop.sfrf %1177
  %p1179 = scmp.eq.s32.totalorder %s1178, 0
  %p1180 = pneg %p1179
  %1182 = shalt.err (%p1180)
  %s1183 = scalar_lea.sflag [#allocation3], 3
  %1184 = vsyncmov %s1183
  %s1185 = vpop.sfrf %1184
  %p1186 = scmp.eq.s32.totalorder %s1185, 0
  %p1187 = pneg %p1186
  %1189 = shalt.err (%p1187)
  %s1190 = scalar_lea.sflag [#allocation3], 4
  %1191 = vsyncmov %s1190
  %s1192 = vpop.sfrf %1191
  %p1193 = scmp.eq.s32.totalorder %s1192, 0
  %p1194 = pneg %p1193
  %1196 = shalt.err (%p1194)
  %s1197 = scalar_lea.sflag [#allocation3], 5
  %1198 = vsyncmov %s1197
  %s1199 = vpop.sfrf %1198
  %p1200 = scmp.eq.s32.totalorder %s1199, 0
  %p1201 = pneg %p1200
  %1203 = shalt.err (%p1201)
  %s1204 = scalar_lea.sflag [#allocation3], 6
  %1205 = vsyncmov %s1204
  %s1206 = vpop.sfrf %1205
  %p1207 = scmp.eq.s32.totalorder %s1206, 0
  %p1208 = pneg %p1207
  %1210 = shalt.err (%p1208)
  %s1211 = scalar_lea.sflag [#allocation3], 7
  %1212 = vsyncmov %s1211
  %s1213 = vpop.sfrf %1212
  %p1214 = scmp.eq.s32.totalorder %s1213, 0
  %p1215 = pneg %p1214
  %1217 = shalt.err (%p1215)
  %s1218 = scalar_lea.sflag [#allocation3], 8
  %1219 = vsyncmov %s1218
  %s1220 = vpop.sfrf %1219
  %p1221 = scmp.eq.s32.totalorder %s1220, 0
  %p1222 = pneg %p1221
  %1224 = shalt.err (%p1222)
  %s1225 = scalar_lea.sflag [#allocation3], 9
  %1226 = vsyncmov %s1225
  %s1227 = vpop.sfrf %1226
  %p1228 = scmp.eq.s32.totalorder %s1227, 0
  %p1229 = pneg %p1228
  %1231 = shalt.err (%p1229)
  %s1232 = scalar_lea.sflag [#allocation3], 10
  %1233 = vsyncmov %s1232
  %s1234 = vpop.sfrf %1233
  %p1235 = scmp.eq.s32.totalorder %s1234, 0
  %p1236 = pneg %p1235
  %1238 = shalt.err (%p1236)
  %s1239 = scalar_lea.sflag [#allocation3], 11
  %1240 = vsyncmov %s1239
  %s1241 = vpop.sfrf %1240
  %p1242 = scmp.eq.s32.totalorder %s1241, 0
  %p1243 = pneg %p1242
  %1245 = shalt.err (%p1243)
  %s1246 = scalar_lea.sflag [#allocation3], 12
  %1247 = vsyncmov %s1246
  %s1248 = vpop.sfrf %1247
  %p1249 = scmp.eq.s32.totalorder %s1248, 0
  %p1250 = pneg %p1249
  %1252 = shalt.err (%p1250)
  %s1253 = scalar_lea.sflag [#allocation3], 13
  %1254 = vsyncmov %s1253
  %s1255 = vpop.sfrf %1254
  %p1256 = scmp.eq.s32.totalorder %s1255, 0
  %p1257 = pneg %p1256
  %1259 = shalt.err (%p1257)
  %s1260 = scalar_lea.sflag [#allocation3], 14
  %1261 = vsyncmov %s1260
  %s1262 = vpop.sfrf %1261
  %p1263 = scmp.eq.s32.totalorder %s1262, 0
  %p1264 = pneg %p1263
  %1266 = shalt.err (%p1264)
  %s1267 = scalar_lea.sflag [#allocation3], 15
  %1268 = vsyncmov %s1267
  %s1269 = vpop.sfrf %1268
  %p1270 = scmp.eq.s32.totalorder %s1269, 0
  %p1271 = pneg %p1270
  %1273 = shalt.err (%p1271)

</llo_original>
